<compile_context>
chip_gen: v7x
topology: tpu7x:2x2x1
jax: 0.10.0
libtpu: 0.0.40
codegen_flags: <defaults>
</compile_context>

<pallas_src>
import functools

import jax
import jax.numpy as jnp
from jax import lax
from jax.experimental import pallas as pl
from jax.experimental.pallas import tpu as pltpu


def _ds(start, size, stride):
    if stride == 1:
        return pl.ds(start, size)
    return pl.ds(start, size, stride)


# ----------------------------- Pallas kernel --------------------------------
def _conv_bn_act_kernel(x_ref, w_ref, b_ref, o_ref, lhs_ref, *,
                        kh, kw, stride, dilation, cin, toh, ow, group,
                        has_act):
    """One (batch, cout-tile, oh-tile) grid step.

    x_ref  : (1, Hp, Wp, Cin)        zero-padded NHWC image, bf16
    w_ref  : (KH*KW*Cin, TN)         BN-scale-folded weights, bf16
                                     (K ordered tap-major, Cin-minor)
    b_ref  : (1, TN)                 folded BN / conv bias, f32
    o_ref  : (1, TOH, OW, TN)        output tile, bf16
    lhs_ref: (TOH*OW, group*Cin)     bf16 VMEM scratch (im2col tile)
    """
    t = pl.program_id(2)
    rows = toh * ow
    taps = [(i, j) for i in range(kh) for j in range(kw)]

    def tap_piece(i, j):
        # Shifted window of the padded image for tap (i, j).
        r0 = t * (toh * stride) + i * dilation
        c0 = j * dilation
        p = x_ref[0, _ds(r0, toh, stride), _ds(c0, ow, stride), :]
        # (toh, OW, Cin) -> (rows, Cin).  NOTE: this is the im2col packing
        # cost; it is layout-preserving only when OW is a multiple of the
        # bf16 sublane tile (16), otherwise Mosaic inserts a relayout copy.
        return p.reshape(rows, cin)

    y = None
    # Static tap grouping: each group is ONE MXU contraction of K = klen.
    for g0 in range(0, len(taps), group):
        chunk = taps[g0:g0 + group]
        klen = len(chunk) * cin
        if len(chunk) == 1:
            # Single tap (e.g. 1x1 conv, or Cin >= 256): feed the MXU directly,
            # skip the scratch round trip.
            lhs = tap_piece(*chunk[0])
        else:
            # Scatter the taps of this group into the im2col scratch.
            for u, (i, j) in enumerate(chunk):
                lhs_ref[:, pl.ds(u * cin, cin)] = tap_piece(i, j)
            lhs = (lhs_ref[...] if klen == lhs_ref.shape[1]
                   else lhs_ref[:, pl.ds(0, klen)])
        rhs = (w_ref[...] if klen == w_ref.shape[0]
               else w_ref[pl.ds(g0 * cin, klen), :])
        part = jnp.dot(lhs, rhs, preferred_element_type=jnp.float32)
        y = part if y is None else y + part

    y = y + b_ref[...]
    if has_act:
        y = jnp.maximum(y, 0.0)
    o_ref[...] = y.astype(o_ref.dtype).reshape(1, toh, ow, o_ref.shape[3])


# ------------------------------ JAX wrapper ----------------------------------
def conv_bn_act_block(x, params, *, stride, padding, dilation=1, groups=1,
                      has_bn=True, has_act=True, eps=1e-5):
    """Forward of ConvBnActBlock.  x: (N, Cin, H, W) -> (N, Cout, OH, OW)."""
    assert groups == 1, "groups != 1 not supported"  # TODO(synk): grouped conv

    w = params["conv_weight"]                        # (Cout, Cin, KH, KW)
    cout, cin, kh, kw = w.shape
    n, _, h, win = x.shape
    s, d, p = stride, dilation, padding

    oh = (h + 2 * p - d * (kh - 1) - 1) // s + 1
    ow = (win + 2 * p - d * (kw - 1) - 1) // s + 1

    # ---- Fold BN (eval mode) into per-channel scale / bias. ----------------
    conv_bias = params.get("conv_bias")
    if has_bn:
        scale = params["bn_weight"] * lax.rsqrt(params["bn_running_var"] + eps)
        cb = conv_bias if conv_bias is not None else 0.0
        # Correct folding even if a conv bias exists (PyTorch disables it).
        bias = params["bn_bias"] + scale * (cb - params["bn_running_mean"])
    else:
        scale = jnp.ones((cout,), jnp.float32)
        bias = (conv_bias if conv_bias is not None
                else jnp.zeros((cout,), jnp.float32))

    # (Cout, Cin, KH, KW) -> (KH*KW*Cin, Cout), BN scale folded into weights.
    w_k = jnp.transpose(w.astype(jnp.float32) * scale[:, None, None, None],
                        (2, 3, 1, 0)).reshape(kh * kw * cin, cout)

    # ---- Cout tiling --------------------------------------------------------
    # Large Cout: lane-dense 128 / 256 tiles (256 fills the v6e/v7x MXU width).
    # Small Cout: keep native width -> no padded channels written to HBM.
    if cout >= 256 and cout % 256 == 0:
        tn = 256
    elif cout >= 128:
        tn = 128
    else:
        tn = cout
    cout_t = -(-cout // tn) * tn
    n_co = cout_t // tn
    if cout_t != cout:
        w_k = jnp.pad(w_k, ((0, 0), (0, cout_t - cout)))
        bias = jnp.pad(jnp.asarray(bias, jnp.float32), (0, cout_t - cout))
    w_bf = w_k.astype(jnp.bfloat16)
    bias2 = jnp.asarray(bias, jnp.float32).reshape(1, cout_t)

    # ---- OH tiling: ~256 output rows per grid step, prefer a divisor of OH. -
    toh0 = max(1, min(oh, max(1, 256 // max(ow, 1))))
    toh = toh0
    for cand in range(toh0, 0, -1):
        if oh % cand == 0:
            toh = cand
            break
    if toh * 2 < toh0:                 # divisor too small: pad + crop instead
        toh = toh0
    n_t = -(-oh // toh)
    oh_pad = n_t * toh
    rows = toh * ow

    # ---- zero-padded bf16 NHWC input ---------------------------------------
    hneed = (oh_pad - 1) * s + (kh - 1) * d + 1
    pad_bot = max(p, hneed - h - p)
    x_nhwc = jnp.transpose(x, (0, 2, 3, 1)).astype(jnp.bfloat16)
    xp = jnp.pad(x_nhwc, ((0, 0), (p, pad_bot), (p, p), (0, 0)))
    hp, wp = xp.shape[1], xp.shape[2]

    # ---- tap grouping: fold as many taps as fit in one MXU pass (K <= 256). -
    group = max(1, min(kh * kw, 256 // max(cin, 1)))

    grid = (n, n_co, n_t)
    kernel = functools.partial(
        _conv_bn_act_kernel, kh=kh, kw=kw, stride=s, dilation=d, cin=cin,
        toh=toh, ow=ow, group=group, has_act=has_act)

    # ---- explicit VMEM budget (tile-padded sizes, x2 pipeline buffers). -----
    def _tiled_bytes(rdim, cdim, itemsize):
        return (-(-rdim // 8) * 8) * (-(-cdim // 128) * 128) * itemsize
    x_blk = hp * _tiled_bytes(wp, cin, 2)
    w_blk = _tiled_bytes(kh * kw * cin, tn, 2)
    b_blk = _tiled_bytes(1, tn, 4)
    o_blk = toh * _tiled_bytes(ow, tn, 2)
    lhs_blk = _tiled_bytes(rows, group * cin, 2)
    vmem = 2 * (x_blk + w_blk + b_blk + o_blk) + lhs_blk + (2 << 20)
    vmem = int(min(max(vmem, 4 << 20), 64 << 20))

    out = pl.pallas_call(
        kernel,
        out_shape=jax.ShapeDtypeStruct((n, oh_pad, ow, cout_t), jnp.bfloat16),
        grid_spec=pltpu.PrefetchScalarGridSpec(
            num_scalar_prefetch=0,
            grid=grid,
            in_specs=[
                # Whole padded image per batch element; block index depends
                # only on b (outermost grid axis) -> DMA'd once per image.
                pl.BlockSpec((1, hp, wp, cin), lambda b, c, t: (b, 0, 0, 0)),
                pl.BlockSpec((kh * kw * cin, tn), lambda b, c, t: (0, c)),
                pl.BlockSpec((1, tn), lambda b, c, t: (0, c)),
            ],
            out_specs=pl.BlockSpec((1, toh, ow, tn),
                                   lambda b, c, t: (b, t, 0, c)),
            scratch_shapes=[pltpu.VMEM((rows, group * cin), jnp.bfloat16)],
        ),
        compiler_params=pltpu.CompilerParams(
            dimension_semantics=("parallel", "parallel", "parallel"),
            vmem_limit_bytes=vmem),
    )(xp, w_bf, bias2)

    out = out[:, :oh, :, :cout]                  # crop OH padding (if any)
    # NCHW float output to match the PyTorch module (transpose + cast fuse).
    return jnp.transpose(out, (0, 3, 1, 2)).astype(x.dtype)


# ------------------------------ reference ------------------------------------
def _reference(x, params, *, stride, padding, dilation, has_act, eps=1e-5):
    w = params["conv_weight"]
    y = lax.conv_general_dilated(
        x, w, window_strides=(stride, stride),
        padding=[(padding, padding), (padding, padding)],
        rhs_dilation=(dilation, dilation),
        dimension_numbers=("NCHW", "OIHW", "NCHW"))
    scale = params["bn_weight"] / jnp.sqrt(params["bn_running_var"] + eps)
    bias = params["bn_bias"] - params["bn_running_mean"] * scale
    y = y * scale[None, :, None, None] + bias[None, :, None, None]
    if has_act:
        y = jnp.maximum(y, 0.0)
    return y


# -------------------------------- main ---------------------------------------
if __name__ == "__main__":
    # ConvBnActBlock(inplanes=4, planes=8, kernel_size=3, stride=1, padding=1,
    #                groups=1, dilation=1, has_bn=True, has_act=True)
    inplanes, planes, ksize, stride, padding, dilation = 4, 8, 3, 1, 1, 1
    N, H, W = 2, 16, 16

    key = jax.random.PRNGKey(0)
    kx, kw_, kg, kb, km, kv = jax.random.split(key, 6)

    x = jax.random.normal(kx, (N, inplanes, H, W), jnp.float32)
    params = {
        "conv_weight": 0.1 * jax.random.normal(
            kw_, (planes, inplanes, ksize, ksize), jnp.float32),
        "bn_weight": 1.0 + 0.1 * jax.random.normal(kg, (planes,), jnp.float32),
        "bn_bias": 0.1 * jax.random.normal(kb, (planes,), jnp.float32),
        "bn_running_mean": 0.1 * jax.random.normal(km, (planes,), jnp.float32),
        "bn_running_var": jnp.abs(
            1.0 + 0.1 * jax.random.normal(kv, (planes,), jnp.float32)),
    }

    out = conv_bn_act_block(x, params, stride=stride, padding=padding,
                            dilation=dilation, has_bn=True, has_act=True)
    out = jax.block_until_ready(out)

    ref = _reference(x, params, stride=stride, padding=padding,
                     dilation=dilation, has_act=True)
    assert out.shape == (N, planes, H, W), out.shape
    # bf16 matmul operands + bf16 output storage (f32 accumulation).
    assert jnp.allclose(out, ref, atol=3e-2, rtol=3e-2), "mismatch vs reference"

    print("KERNEL_OK")
</pallas_src>

<mosaic_0001>
module attributes {stable_mosaic.version = 11 : i64} {
  func.func @_conv_bn_act_kernel(%arg0: i32, %arg1: i32, %arg2: i32, %arg3: memref<1x18x18x4xbf16, #tpu.memory_space<vmem>>, %arg4: memref<36x8xbf16, #tpu.memory_space<vmem>>, %arg5: memref<1x8xf32, #tpu.memory_space<vmem>>, %arg6: memref<1x16x16x8xbf16, #tpu.memory_space<vmem>>, %arg7: memref<256x36xbf16, #tpu.memory_space<vmem>>) attributes {dimension_semantics = [#tpu.dimension_semantics<parallel>, #tpu.dimension_semantics<parallel>, #tpu.dimension_semantics<parallel>], iteration_bounds = array<i64: 2, 1, 1>, scalar_prefetch = 0 : i64, scratch_operands = 1 : i64, tpu.core_type = #tpu.core_type<tc>, window_params = [{transform_indices = @transform_0, window_bounds = array<i64: 1, 18, 18, 4>}, {transform_indices = @transform_1, window_bounds = array<i64: 36, 8>}, {transform_indices = @transform_2, window_bounds = array<i64: 1, 8>}, {transform_indices = @transform_3, window_bounds = array<i64: 1, 16, 16, 8>}]} {
    %c16_i32 = arith.constant 16 : i32
    %0 = arith.muli %arg2, %c16_i32 : i32
    %c0_i32 = arith.constant 0 : i32
    %1 = arith.addi %0, %c0_i32 : i32
    %c0 = arith.constant 0 : index
    %2 = arith.index_cast %1 : i32 to index
    %c0_0 = arith.constant 0 : index
    %c0_1 = arith.constant 0 : index
    %3 = vector.load %arg3[%c0, %2, %c0_0, %c0_1] : memref<1x18x18x4xbf16, #tpu.memory_space<vmem>>, vector<1x16x16x4xbf16>
    %4 = vector.shape_cast %3 : vector<1x16x16x4xbf16> to vector<16x16x4xbf16>
    %5 = vector.shape_cast %4 : vector<16x16x4xbf16> to vector<256x4xbf16>
    %c0_2 = arith.constant 0 : index
    %c0_3 = arith.constant 0 : index
    %6 = vector.load %arg7[%c0_2, %c0_3] : memref<256x36xbf16, #tpu.memory_space<vmem>>, vector<256x4xbf16>
    tpu.vector_store %arg7[%c0_2, %c0_3], %5 {strides = array<i32>} : memref<256x36xbf16, #tpu.memory_space<vmem>>, vector<256x4xbf16>,
    %c16_i32_4 = arith.constant 16 : i32
    %7 = arith.muli %arg2, %c16_i32_4 : i32
    %c0_i32_5 = arith.constant 0 : i32
    %8 = arith.addi %7, %c0_i32_5 : i32
    %c0_6 = arith.constant 0 : index
    %9 = arith.index_cast %8 : i32 to index
    %c1 = arith.constant 1 : index
    %c0_7 = arith.constant 0 : index
    %10 = vector.load %arg3[%c0_6, %9, %c1, %c0_7] : memref<1x18x18x4xbf16, #tpu.memory_space<vmem>>, vector<1x16x16x4xbf16>
    %11 = vector.shape_cast %10 : vector<1x16x16x4xbf16> to vector<16x16x4xbf16>
    %12 = vector.shape_cast %11 : vector<16x16x4xbf16> to vector<256x4xbf16>
    %c0_8 = arith.constant 0 : index
    %c4 = arith.constant 4 : index
    %13 = vector.load %arg7[%c0_8, %c4] : memref<256x36xbf16, #tpu.memory_space<vmem>>, vector<256x4xbf16>
    tpu.vector_store %arg7[%c0_8, %c4], %12 {strides = array<i32>} : memref<256x36xbf16, #tpu.memory_space<vmem>>, vector<256x4xbf16>,
    %c16_i32_9 = arith.constant 16 : i32
    %14 = arith.muli %arg2, %c16_i32_9 : i32
    %c0_i32_10 = arith.constant 0 : i32
    %15 = arith.addi %14, %c0_i32_10 : i32
    %c0_11 = arith.constant 0 : index
    %16 = arith.index_cast %15 : i32 to index
    %c2 = arith.constant 2 : index
    %c0_12 = arith.constant 0 : index
    %17 = vector.load %arg3[%c0_11, %16, %c2, %c0_12] : memref<1x18x18x4xbf16, #tpu.memory_space<vmem>>, vector<1x16x16x4xbf16>
    %18 = vector.shape_cast %17 : vector<1x16x16x4xbf16> to vector<16x16x4xbf16>
    %19 = vector.shape_cast %18 : vector<16x16x4xbf16> to vector<256x4xbf16>
    %c0_13 = arith.constant 0 : index
    %c8 = arith.constant 8 : index
    %20 = vector.load %arg7[%c0_13, %c8] : memref<256x36xbf16, #tpu.memory_space<vmem>>, vector<256x4xbf16>
    tpu.vector_store %arg7[%c0_13, %c8], %19 {strides = array<i32>} : memref<256x36xbf16, #tpu.memory_space<vmem>>, vector<256x4xbf16>,
    %c16_i32_14 = arith.constant 16 : i32
    %21 = arith.muli %arg2, %c16_i32_14 : i32
    %c1_i32 = arith.constant 1 : i32
    %22 = arith.addi %21, %c1_i32 : i32
    %c0_15 = arith.constant 0 : index
    %23 = arith.index_cast %22 : i32 to index
    %c0_16 = arith.constant 0 : index
    %c0_17 = arith.constant 0 : index
    %24 = vector.load %arg3[%c0_15, %23, %c0_16, %c0_17] : memref<1x18x18x4xbf16, #tpu.memory_space<vmem>>, vector<1x16x16x4xbf16>
    %25 = vector.shape_cast %24 : vector<1x16x16x4xbf16> to vector<16x16x4xbf16>
    %26 = vector.shape_cast %25 : vector<16x16x4xbf16> to vector<256x4xbf16>
    %c0_18 = arith.constant 0 : index
    %c12 = arith.constant 12 : index
    %27 = vector.load %arg7[%c0_18, %c12] : memref<256x36xbf16, #tpu.memory_space<vmem>>, vector<256x4xbf16>
    tpu.vector_store %arg7[%c0_18, %c12], %26 {strides = array<i32>} : memref<256x36xbf16, #tpu.memory_space<vmem>>, vector<256x4xbf16>,
    %c16_i32_19 = arith.constant 16 : i32
    %28 = arith.muli %arg2, %c16_i32_19 : i32
    %c1_i32_20 = arith.constant 1 : i32
    %29 = arith.addi %28, %c1_i32_20 : i32
    %c0_21 = arith.constant 0 : index
    %30 = arith.index_cast %29 : i32 to index
    %c1_22 = arith.constant 1 : index
    %c0_23 = arith.constant 0 : index
    %31 = vector.load %arg3[%c0_21, %30, %c1_22, %c0_23] : memref<1x18x18x4xbf16, #tpu.memory_space<vmem>>, vector<1x16x16x4xbf16>
    %32 = vector.shape_cast %31 : vector<1x16x16x4xbf16> to vector<16x16x4xbf16>
    %33 = vector.shape_cast %32 : vector<16x16x4xbf16> to vector<256x4xbf16>
    %c0_24 = arith.constant 0 : index
    %c16 = arith.constant 16 : index
    %34 = vector.load %arg7[%c0_24, %c16] : memref<256x36xbf16, #tpu.memory_space<vmem>>, vector<256x4xbf16>
    tpu.vector_store %arg7[%c0_24, %c16], %33 {strides = array<i32>} : memref<256x36xbf16, #tpu.memory_space<vmem>>, vector<256x4xbf16>,
    %c16_i32_25 = arith.constant 16 : i32
    %35 = arith.muli %arg2, %c16_i32_25 : i32
    %c1_i32_26 = arith.constant 1 : i32
    %36 = arith.addi %35, %c1_i32_26 : i32
    %c0_27 = arith.constant 0 : index
    %37 = arith.index_cast %36 : i32 to index
    %c2_28 = arith.constant 2 : index
    %c0_29 = arith.constant 0 : index
    %38 = vector.load %arg3[%c0_27, %37, %c2_28, %c0_29] : memref<1x18x18x4xbf16, #tpu.memory_space<vmem>>, vector<1x16x16x4xbf16>
    %39 = vector.shape_cast %38 : vector<1x16x16x4xbf16> to vector<16x16x4xbf16>
    %40 = vector.shape_cast %39 : vector<16x16x4xbf16> to vector<256x4xbf16>
    %c0_30 = arith.constant 0 : index
    %c20 = arith.constant 20 : index
    %41 = vector.load %arg7[%c0_30, %c20] : memref<256x36xbf16, #tpu.memory_space<vmem>>, vector<256x4xbf16>
    tpu.vector_store %arg7[%c0_30, %c20], %40 {strides = array<i32>} : memref<256x36xbf16, #tpu.memory_space<vmem>>, vector<256x4xbf16>,
    %c16_i32_31 = arith.constant 16 : i32
    %42 = arith.muli %arg2, %c16_i32_31 : i32
    %c2_i32 = arith.constant 2 : i32
    %43 = arith.addi %42, %c2_i32 : i32
    %c0_32 = arith.constant 0 : index
    %44 = arith.index_cast %43 : i32 to index
    %c0_33 = arith.constant 0 : index
    %c0_34 = arith.constant 0 : index
    %45 = vector.load %arg3[%c0_32, %44, %c0_33, %c0_34] : memref<1x18x18x4xbf16, #tpu.memory_space<vmem>>, vector<1x16x16x4xbf16>
    %46 = vector.shape_cast %45 : vector<1x16x16x4xbf16> to vector<16x16x4xbf16>
    %47 = vector.shape_cast %46 : vector<16x16x4xbf16> to vector<256x4xbf16>
    %c0_35 = arith.constant 0 : index
    %c24 = arith.constant 24 : index
    %48 = vector.load %arg7[%c0_35, %c24] : memref<256x36xbf16, #tpu.memory_space<vmem>>, vector<256x4xbf16>
    tpu.vector_store %arg7[%c0_35, %c24], %47 {strides = array<i32>} : memref<256x36xbf16, #tpu.memory_space<vmem>>, vector<256x4xbf16>,
    %c16_i32_36 = arith.constant 16 : i32
    %49 = arith.muli %arg2, %c16_i32_36 : i32
    %c2_i32_37 = arith.constant 2 : i32
    %50 = arith.addi %49, %c2_i32_37 : i32
    %c0_38 = arith.constant 0 : index
    %51 = arith.index_cast %50 : i32 to index
    %c1_39 = arith.constant 1 : index
    %c0_40 = arith.constant 0 : index
    %52 = vector.load %arg3[%c0_38, %51, %c1_39, %c0_40] : memref<1x18x18x4xbf16, #tpu.memory_space<vmem>>, vector<1x16x16x4xbf16>
    %53 = vector.shape_cast %52 : vector<1x16x16x4xbf16> to vector<16x16x4xbf16>
    %54 = vector.shape_cast %53 : vector<16x16x4xbf16> to vector<256x4xbf16>
    %c0_41 = arith.constant 0 : index
    %c28 = arith.constant 28 : index
    %55 = vector.load %arg7[%c0_41, %c28] : memref<256x36xbf16, #tpu.memory_space<vmem>>, vector<256x4xbf16>
    tpu.vector_store %arg7[%c0_41, %c28], %54 {strides = array<i32>} : memref<256x36xbf16, #tpu.memory_space<vmem>>, vector<256x4xbf16>,
    %c16_i32_42 = arith.constant 16 : i32
    %56 = arith.muli %arg2, %c16_i32_42 : i32
    %c2_i32_43 = arith.constant 2 : i32
    %57 = arith.addi %56, %c2_i32_43 : i32
    %c0_44 = arith.constant 0 : index
    %58 = arith.index_cast %57 : i32 to index
    %c2_45 = arith.constant 2 : index
    %c0_46 = arith.constant 0 : index
    %59 = vector.load %arg3[%c0_44, %58, %c2_45, %c0_46] : memref<1x18x18x4xbf16, #tpu.memory_space<vmem>>, vector<1x16x16x4xbf16>
    %60 = vector.shape_cast %59 : vector<1x16x16x4xbf16> to vector<16x16x4xbf16>
    %61 = vector.shape_cast %60 : vector<16x16x4xbf16> to vector<256x4xbf16>
    %c0_47 = arith.constant 0 : index
    %c32 = arith.constant 32 : index
    %62 = vector.load %arg7[%c0_47, %c32] : memref<256x36xbf16, #tpu.memory_space<vmem>>, vector<256x4xbf16>
    tpu.vector_store %arg7[%c0_47, %c32], %61 {strides = array<i32>} : memref<256x36xbf16, #tpu.memory_space<vmem>>, vector<256x4xbf16>,
    %c0_48 = arith.constant 0 : index
    %c0_49 = arith.constant 0 : index
    %63 = vector.load %arg7[%c0_48, %c0_49] : memref<256x36xbf16, #tpu.memory_space<vmem>>, vector<256x36xbf16>
    %c0_50 = arith.constant 0 : index
    %c0_51 = arith.constant 0 : index
    %64 = vector.load %arg4[%c0_50, %c0_51] : memref<36x8xbf16, #tpu.memory_space<vmem>>, vector<36x8xbf16>
    %cst = arith.constant dense<0.000000e+00> : vector<256x8xf32>
    %65 = tpu.matmul %63, %64, %cst {dimension_numbers = #tpu.dot_dimension_numbers<[1], [0], [0], [1], [0, 0, 1, 1], [], []>} : vector<256x36xbf16>, vector<36x8xbf16>, vector<256x8xf32> -> vector<256x8xf32>
    %c0_52 = arith.constant 0 : index
    %c0_53 = arith.constant 0 : index
    %66 = vector.load %arg5[%c0_52, %c0_53] : memref<1x8xf32, #tpu.memory_space<vmem>>, vector<1x8xf32>
    %67 = vector.broadcast %66 : vector<1x8xf32> to vector<256x8xf32>
    %68 = arith.addf %65, %67 : vector<256x8xf32>
    %cst_54 = arith.constant 0.000000e+00 : f32
    %69 = vector.broadcast %cst_54 : f32 to vector<256x8xf32>
    %70 = arith.maximumf %68, %69 : vector<256x8xf32>
    %71 = arith.truncf %70 : vector<256x8xf32> to vector<256x8xbf16>
    %72 = vector.shape_cast %71 : vector<256x8xbf16> to vector<1x16x16x8xbf16>
    %c0_55 = arith.constant 0 : index
    %c0_56 = arith.constant 0 : index
    %c0_57 = arith.constant 0 : index
    %c0_58 = arith.constant 0 : index
    %73 = vector.load %arg6[%c0_55, %c0_56, %c0_57, %c0_58] : memref<1x16x16x8xbf16, #tpu.memory_space<vmem>>, vector<1x16x16x8xbf16>
    tpu.vector_store %arg6[%c0_55, %c0_56, %c0_57, %c0_58], %72 {strides = array<i32>} : memref<1x16x16x8xbf16, #tpu.memory_space<vmem>>, vector<1x16x16x8xbf16>,
    return
  }
  func.func @transform_0(%arg0: i32, %arg1: i32, %arg2: i32) -> (i32, i32, i32, i32) {
    %c0_i32 = arith.constant 0 : i32
    %c0_i32_0 = arith.constant 0 : i32
    %c0_i32_1 = arith.constant 0 : i32
    %c0_i32_2 = arith.constant 0 : i32
    return %arg0, %c0_i32, %c0_i32_0, %c0_i32_1 : i32, i32, i32, i32
  }
  func.func @transform_1(%arg0: i32, %arg1: i32, %arg2: i32) -> (i32, i32) {
    %c0_i32 = arith.constant 0 : i32
    %c0_i32_0 = arith.constant 0 : i32
    return %c0_i32, %arg1 : i32, i32
  }
  func.func @transform_2(%arg0: i32, %arg1: i32, %arg2: i32) -> (i32, i32) {
    %c0_i32 = arith.constant 0 : i32
    %c0_i32_0 = arith.constant 0 : i32
    return %c0_i32, %arg1 : i32, i32
  }
  func.func @transform_3(%arg0: i32, %arg1: i32, %arg2: i32) -> (i32, i32, i32, i32) {
    %c0_i32 = arith.constant 0 : i32
    %c0_i32_0 = arith.constant 0 : i32
    return %arg0, %arg2, %c0_i32, %arg1 : i32, i32, i32, i32
  }
}

</mosaic_0001>

<llo_original>
// kernel: tpu_custom_call.1
$region0: #{tpu_custom_call.1}
  #allocation0 [shape = 'u32[]', space=smem, size = 0x4, offset = 0x4, fixed_abs, tag = 'smem constant byte address 0x4 - core index']
  #allocation1 [shape = 'u32[144,128]{1,0:T(1,128)}', space=vmem, size = 0x12000, scoped, tag = 'internal scratch']
  #allocation2 [shape = 'bf16[256,36]{1,0:T(16,128)(2,1)}', space=vmem, size = 0x10000, scoped, tag = 'scratch operand']
  %s0 = inlined_call_operand.vmem [shape: bf16[2,18,18,4], index: 0, kind: input, shape index: {}]
  %s1 = inlined_call_operand.vmem [shape: bf16[36,8], index: 1, kind: input, shape index: {}]
  %s2 = inlined_call_operand.vmem [shape: f32[1,8], index: 2, kind: input, shape index: {}]
  %s3 = inlined_call_operand.vmem [shape: bf16[2,16,16,8], index: 3, kind: output, shape index: {}]
  %s4 = sld [smem:[#allocation0]]
  $region45: #{tpu_custom_call.1} parent=0
    _
  %s6 = ssub.s32 1, %s4
  %s7 = scalar_select 0, %s6, %s4
  loop: start=0, step=1, limit=4
  $region2: #{tpu_custom_call.1} parent=0 // loop_pre_header
    _
  $region3: #{tpu_custom_call.1} parent=0 // loop_header
    %s9 = sphi 0, %s13
    %p10 = scmp.ge.s32.totalorder %s9, 4
    %s16 = sphi 0, %s35
    %s17 = sphi 0, %s31
    %s18 = sphi 0, %s27
    %s19 = sphi 0, %s16
    %s20 = sphi 0, %s17
    %s21 = sphi 0, %s18
    %s22 = sphi 0, %s19
    %s23 = sphi 0, %s20
    %s24 = sphi 0, %s21
    %s38 = sphi 0, %s40
    %s41 = sphi 0, %s38
    %s42 = sphi 0, %s41
    %s58 = sphi 0, %s42
    %s64 = sphi 0, %s66
    %s67 = sphi 0, %s64
    %s68 = sphi 0, %s67
    %s84 = sphi 0, %s68
    %s90 = sphi 0, %s92
    %s93 = sphi 0, %s90
    %s94 = sphi 0, %s93
    %s110 = sphi 0, %s94
    %s120 = sphi 0, %s122
    %s123 = sphi 0, %s120
    %s124 = sphi 0, %s123
    %s140 = sphi 0, %s124
  $region4: #{tpu_custom_call.1} parent=0 // loop_header_branch
    %12 = sbr.rel (%p10) target = $region8
  $region5: #{tpu_custom_call.1} parent=0 // loop_body
    %s14 = ssub.s32 %s9, 1
    %s15 = ssub.s32 %s9, 2
    %s25 = sadd.s32 1, %s18
    %p26 = scmp.ge.s32.totalorder %s25, 1
    %s27 = scalar_select %p26, 0, %s25
    %s28 = sadd.s32 1, %s17
    %s29 = scalar_select %p26, %s28, %s17
    %p30 = scmp.ge.s32.totalorder %s29, 1
    %s31 = scalar_select %p30, 0, %s29
    %s32 = sadd.s32 1, %s16
    %s33 = scalar_select %p30, %s32, %s16
    %p34 = scmp.ge.s32.totalorder %s33, 2
    %s35 = scalar_select %p34, 0, %s33
    %s36 = ssub.s32 %s16, %s35
    %p37 = scmp.eq.s32.totalorder %s36, 0
    %s39 = sadd.s32 %s38, 1
    %s40 = scalar_select %p37, %s38, %s39
    %p43 = pneg %p37
    %p44 = scmp.eq.s32.totalorder %s9, 1
    %p45 = por %p43, %p44
    %p46 = scmp.ne.s32.totalorder %s38, %s41
    %p47 = scmp.eq.s32.totalorder %s9, 0
    %p48 = por %p46, %p47
    %p49 = scmp.ne.s32.totalorder %s38, %s41
    %p50 = scmp.eq.s32.totalorder %s14, 1
    %p51 = por %p49, %p50
    %p52 = scmp.ne.s32.totalorder %s41, %s42
    %p53 = scmp.eq.s32.totalorder %s14, 0
    %p54 = por %p52, %p53
    %p55 = scmp.ne.s32.totalorder %s41, %s42
    %p56 = scmp.eq.s32.totalorder %s15, 1
    %p57 = por %p55, %p56
    %p59 = scmp.ne.s32.totalorder %s42, %s58
    %p60 = scmp.eq.s32.totalorder %s15, 0
    %p61 = por %p59, %p60
    %s62 = ssub.s32 %s17, %s31
    %p63 = scmp.eq.s32.totalorder %s62, 0
    %s65 = sadd.s32 %s64, 1
    %s66 = scalar_select %p63, %s64, %s65
    %p69 = pneg %p63
    %p70 = scmp.eq.s32.totalorder %s9, 1
    %p71 = por %p69, %p70
    %p72 = scmp.ne.s32.totalorder %s64, %s67
    %p73 = scmp.eq.s32.totalorder %s9, 0
    %p74 = por %p72, %p73
    %p75 = scmp.ne.s32.totalorder %s64, %s67
    %p76 = scmp.eq.s32.totalorder %s14, 1
    %p77 = por %p75, %p76
    %p78 = scmp.ne.s32.totalorder %s67, %s68
    %p79 = scmp.eq.s32.totalorder %s14, 0
    %p80 = por %p78, %p79
    %p81 = scmp.ne.s32.totalorder %s67, %s68
    %p82 = scmp.eq.s32.totalorder %s15, 1
    %p83 = por %p81, %p82
    %p85 = scmp.ne.s32.totalorder %s68, %s84
    %p86 = scmp.eq.s32.totalorder %s15, 0
    %p87 = por %p85, %p86
    %s88 = ssub.s32 %s17, %s31
    %p89 = scmp.eq.s32.totalorder %s88, 0
    %s91 = sadd.s32 %s90, 1
    %s92 = scalar_select %p89, %s90, %s91
    %p95 = pneg %p89
    %p96 = scmp.eq.s32.totalorder %s9, 1
    %p97 = por %p95, %p96
    %p98 = scmp.ne.s32.totalorder %s90, %s93
    %p99 = scmp.eq.s32.totalorder %s9, 0
    %p100 = por %p98, %p99
    %p101 = scmp.ne.s32.totalorder %s90, %s93
    %p102 = scmp.eq.s32.totalorder %s14, 1
    %p103 = por %p101, %p102
    %p104 = scmp.ne.s32.totalorder %s93, %s94
    %p105 = scmp.eq.s32.totalorder %s14, 0
    %p106 = por %p104, %p105
    %p107 = scmp.ne.s32.totalorder %s93, %s94
    %p108 = scmp.eq.s32.totalorder %s15, 1
    %p109 = por %p107, %p108
    %p111 = scmp.ne.s32.totalorder %s94, %s110
    %p112 = scmp.eq.s32.totalorder %s15, 0
    %p113 = por %p111, %p112
    %s114 = ssub.s32 %s16, %s35
    %s115 = ssub.s32 %s18, %s27
    %s116 = sor.u32 %s114, %s115
    %s117 = ssub.s32 %s17, %s31
    %s118 = sor.u32 %s116, %s117
    %p119 = scmp.eq.s32.totalorder %s118, 0
    %s121 = sadd.s32 %s120, 1
    %s122 = scalar_select %p119, %s120, %s121
    %p125 = pneg %p119
    %p126 = scmp.eq.s32.totalorder %s9, 1
    %p127 = por %p125, %p126
    %p128 = scmp.ne.s32.totalorder %s120, %s123
    %p129 = scmp.eq.s32.totalorder %s9, 0
    %p130 = por %p128, %p129
    %p131 = scmp.ne.s32.totalorder %s120, %s123
    %p132 = scmp.eq.s32.totalorder %s14, 1
    %p133 = por %p131, %p132
    %p134 = scmp.ne.s32.totalorder %s123, %s124
    %p135 = scmp.eq.s32.totalorder %s14, 0
    %p136 = por %p134, %p135
    %p137 = scmp.ne.s32.totalorder %s123, %s124
    %p138 = scmp.eq.s32.totalorder %s15, 1
    %p139 = por %p137, %p138
    %p141 = scmp.ne.s32.totalorder %s124, %s140
    %p142 = scmp.eq.s32.totalorder %s15, 0
    %p143 = por %p141, %p142
    %p144 = scmp.le.s32.totalorder 1, %s9
    %p145 = scmp.lt.s32.totalorder %s9, 3
    %p146 = pnand %p144, %p145
    %p147 = pneg %p146
    // Predicated region
    $region9: #{tpu_custom_call.1} parent=5 // pred_check
      _
    $region10: #{tpu_custom_call.1} parent=5 // pred_check_branch
      %149 = sbr.rel (%p146) target = $region12
    $region11: #{tpu_custom_call.1} parent=5 // pred_region
      %s150 = ssub.s32 %s9, 1
      // Predicated region
      $region13: #{tpu_custom_call.1} parent=11 // pred_check
        %p151 = pneg %p80
      $region14: #{tpu_custom_call.1} parent=11 // pred_check_branch
        %153 = sbr.rel (%p151) target = $region16
      $region15: #{tpu_custom_call.1} parent=11 // pred_region
        %p154 = scmp.lt.s32.totalorder %s20, 0
        %s155 = scalar_select %p154, %s20, 0
        %s156 = smul.addr %s155, 4
        %s157 = scalar_lea.vmem %s1, %s156
      $region16: #{tpu_custom_call.1} parent=11 // pred_fallthru
        _
      // Predicated region
      $region17: #{tpu_custom_call.1} parent=11 // pred_check
        %p158 = pneg %p106
      $region18: #{tpu_custom_call.1} parent=11 // pred_check_branch
        %160 = sbr.rel (%p158) target = $region20
      $region19: #{tpu_custom_call.1} parent=11 // pred_region
        %p161 = scmp.lt.s32.totalorder %s20, 0
        %s162 = scalar_select %p161, %s20, 0
        %s163 = scalar_lea.vmem %s2, %s162
      $region20: #{tpu_custom_call.1} parent=11 // pred_fallthru
        _
    $region12: #{tpu_custom_call.1} parent=5 // pred_fallthru
      _
    %p164 = scmp.lt.s32.totalorder %s9, 2
    // Predicated region
    $region21: #{tpu_custom_call.1} parent=5 // pred_check
      %p165 = pneg %p164
    $region22: #{tpu_custom_call.1} parent=5 // pred_check_branch
      %167 = sbr.rel (%p165) target = $region24
    $region23: #{tpu_custom_call.1} parent=5 // pred_region
      // Predicated region
      $region25: #{tpu_custom_call.1} parent=23 // pred_check
        %p168 = pneg %p48
      $region26: #{tpu_custom_call.1} parent=23 // pred_check_branch
        %170 = sbr.rel (%p168) target = $region28
      $region27: #{tpu_custom_call.1} parent=23 // pred_region
        %p171 = scmp.lt.s32.totalorder %s16, 1
        %s172 = scalar_select %p171, %s16, 1
        %s173 = smul.addr %s172, 54
        %s174 = smul.addr %s173, 4
        %s175 = scalar_lea.vmem %s0, %s174
      $region28: #{tpu_custom_call.1} parent=23 // pred_fallthru
        _
    $region24: #{tpu_custom_call.1} parent=5 // pred_fallthru
      _
    %p176 = scmp.le.s32.totalorder 1, %s9
    %p177 = scmp.lt.s32.totalorder %s9, 3
    %p178 = pnand %p176, %p177
    %p179 = pneg %p178
    // Predicated region
    $region29: #{tpu_custom_call.1} parent=5 // pred_check
      _
    $region30: #{tpu_custom_call.1} parent=5 // pred_check_branch
      %181 = sbr.rel (%p178) target = $region32
    $region31: #{tpu_custom_call.1} parent=5 // pred_region
      %s182 = ssub.s32 %s9, 1
      %p183 = scmp.lt.s32.totalorder %s19, 1
      %s184 = scalar_select %p183, %s19, 1
      %s185 = smul.addr %s184, 54
      %s186 = smul.addr %s185, 4
      %s187 = scalar_lea.vmem %s0, %s186
      %p188 = pneg %p54
      %p189 = pneg %p51
      %p190 = scmp.lt.s32.totalorder %s20, 0
      %s191 = scalar_select %p190, %s20, 0
      %s192 = smul.addr %s191, 4
      %s193 = scalar_lea.vmem %s1, %s192
      %p194 = pneg %p80
      %p195 = pneg %p77
      %p196 = scmp.lt.s32.totalorder %s20, 0
      %s197 = scalar_select %p196, %s20, 0
      %s198 = scalar_lea.vmem %s2, %s197
      %p199 = pneg %p106
      %p200 = pneg %p103
      %p201 = pneg %p136
      %p202 = pneg %p133
      %s203 = smul.u32 16, %s21
      %p204 = scmp.lt.s32.totalorder %s19, 1
      %s205 = scalar_select %p204, %s19, 1
      %p206 = scmp.lt.s32.totalorder %s203, 15
      %s207 = scalar_select %p206, %s203, 15
      %p208 = scmp.lt.s32.totalorder %s20, 0
      %s209 = scalar_select %p208, %s20, 0
      %s210 = smul.addr %s207, 2
      %s211 = sadd.s32 %s209, %s210
      %s212 = smul.addr %s205, 32
      %s213 = sadd.s32 %s211, %s212
      %s214 = smul.addr %s213, 4
      %s215 = scalar_lea.vmem %s3, %s214
      %p216 = scmp.lt.s32.totalorder %s19, 1
      %s217 = scalar_select %p216, %s19, 1
      %s218 = smul.addr %s217, 54
      %s219 = smul.addr %s218, 4
      %s220 = scalar_lea.vmem %s0, %s219
      %p221 = scmp.lt.s32.totalorder %s20, 0
      %s222 = scalar_select %p221, %s20, 0
      %s223 = smul.addr %s222, 4
      %s224 = scalar_lea.vmem %s1, %s223
      %p225 = scmp.lt.s32.totalorder %s20, 0
      %s226 = scalar_select %p225, %s20, 0
      %s227 = scalar_lea.vmem %s2, %s226
      %s228 = smul.u32 16, %s21
      %p229 = scmp.lt.s32.totalorder %s19, 1
      %s230 = scalar_select %p229, %s19, 1
      %p231 = scmp.lt.s32.totalorder %s228, 15
      %s232 = scalar_select %p231, %s228, 15
      %p233 = scmp.lt.s32.totalorder %s20, 0
      %s234 = scalar_select %p233, %s20, 0
      %s235 = smul.addr %s232, 2
      %s236 = sadd.s32 %s234, %s235
      %s237 = smul.addr %s230, 32
      %s238 = sadd.s32 %s236, %s237
      %s239 = smul.addr %s238, 4
      %s240 = scalar_lea.vmem %s3, %s239
      %s241 = smul.u32 16, %s21
      %s243 = smul.u32 %s21, 16
      %s244 = smul.u32 %s243, 3
      %s245 = smul.addr %s244, 4
      %s246 = scalar_lea.vmem %s220, %s245
      %v247 = vld [vmem:[%s246] sm:$0xf]
      %v248 = vld [vmem:[%s246 + $0x4] sm:$0xf]
      %v249 = vld [vmem:[%s246 + $0xc] sm:$0xf]
      %v250 = vld [vmem:[%s246 + $0x10] sm:$0xf]
      %v251 = vld [vmem:[%s246 + $0x18] sm:$0xf]
      %v252 = vld [vmem:[%s246 + $0x1c] sm:$0xf]
      %v253 = vld [vmem:[%s246 + $0x24] sm:$0xf]
      %v254 = vld [vmem:[%s246 + $0x28] sm:$0xf]
      %v255 = vld [vmem:[%s246 + $0x30] sm:$0xf]
      %v256 = vld [vmem:[%s246 + $0x34] sm:$0xf]
      %v257 = vld [vmem:[%s246 + $0x3c] sm:$0xf]
      %v258 = vld [vmem:[%s246 + $0x40] sm:$0xf]
      %v259 = vld [vmem:[%s246 + $0x48] sm:$0xf]
      %v260 = vld [vmem:[%s246 + $0x4c] sm:$0xf]
      %v261 = vld [vmem:[%s246 + $0x54] sm:$0xf]
      %v262 = vld [vmem:[%s246 + $0x58] sm:$0xf]
      %v263 = vld [vmem:[%s246 + $0x60] sm:$0xf]
      %v264 = vld [vmem:[%s246 + $0x64] sm:$0xf]
      %v265 = vld [vmem:[%s246 + $0x6c] sm:$0xf]
      %v266 = vld [vmem:[%s246 + $0x70] sm:$0xf]
      %v267 = vld [vmem:[%s246 + $0x78] sm:$0xf]
      %v268 = vld [vmem:[%s246 + $0x7c] sm:$0xf]
      %v269 = vld [vmem:[%s246 + $0x84] sm:$0xf]
      %v270 = vld [vmem:[%s246 + $0x88] sm:$0xf]
      %v271 = vld [vmem:[%s246 + $0x90] sm:$0xf]
      %v272 = vld [vmem:[%s246 + $0x94] sm:$0xf]
      %v273 = vld [vmem:[%s246 + $0x9c] sm:$0xf]
      %v274 = vld [vmem:[%s246 + $0xa0] sm:$0xf]
      %v275 = vld [vmem:[%s246 + $0xa8] sm:$0xf]
      %v276 = vld [vmem:[%s246 + $0xac] sm:$0xf]
      %v277 = vld [vmem:[%s246 + $0xb4] sm:$0xf]
      %v278 = vld [vmem:[%s246 + $0xb8] sm:$0xf]
      %v311 = vunpack.c.l.b16 %v247
      %v312 = vunpack.c.l.b16 %v248
      %v313 = vunpack.c.l.b16 %v249
      %v314 = vunpack.c.l.b16 %v250
      %v315 = vunpack.c.l.b16 %v251
      %v316 = vunpack.c.l.b16 %v252
      %v317 = vunpack.c.l.b16 %v253
      %v318 = vunpack.c.l.b16 %v254
      %v319 = vunpack.c.l.b16 %v255
      %v320 = vunpack.c.l.b16 %v256
      %v321 = vunpack.c.l.b16 %v257
      %v322 = vunpack.c.l.b16 %v258
      %v323 = vunpack.c.l.b16 %v259
      %v324 = vunpack.c.l.b16 %v260
      %v325 = vunpack.c.l.b16 %v261
      %v326 = vunpack.c.l.b16 %v262
      %v327 = vunpack.c.l.b16 %v263
      %v328 = vunpack.c.l.b16 %v264
      %v329 = vunpack.c.l.b16 %v265
      %v330 = vunpack.c.l.b16 %v266
      %v331 = vunpack.c.l.b16 %v267
      %v332 = vunpack.c.l.b16 %v268
      %v333 = vunpack.c.l.b16 %v269
      %v334 = vunpack.c.l.b16 %v270
      %v335 = vunpack.c.l.b16 %v271
      %v336 = vunpack.c.l.b16 %v272
      %v337 = vunpack.c.l.b16 %v273
      %v338 = vunpack.c.l.b16 %v274
      %v339 = vunpack.c.l.b16 %v275
      %v340 = vunpack.c.l.b16 %v276
      %v341 = vunpack.c.l.b16 %v277
      %v342 = vunpack.c.l.b16 %v278
      %v343 = vpack.c.b16 %v312, %v311
      %v344 = vpack.c.b16 %v314, %v313
      %v345 = vpack.c.b16 %v316, %v315
      %v346 = vpack.c.b16 %v318, %v317
      %v347 = vpack.c.b16 %v320, %v319
      %v348 = vpack.c.b16 %v322, %v321
      %v349 = vpack.c.b16 %v324, %v323
      %v350 = vpack.c.b16 %v326, %v325
      %v351 = vpack.c.b16 %v328, %v327
      %v352 = vpack.c.b16 %v330, %v329
      %v353 = vpack.c.b16 %v332, %v331
      %v354 = vpack.c.b16 %v334, %v333
      %v355 = vpack.c.b16 %v336, %v335
      %v356 = vpack.c.b16 %v338, %v337
      %v357 = vpack.c.b16 %v340, %v339
      %v358 = vpack.c.b16 %v342, %v341
      %vm375 = vcmask 31744
      %376 = vst.msk [vmem:[#allocation2] sm:$0xff] %vm375, %v343
      %377 = vst.msk [vmem:[#allocation2 + $0x8] sm:$0xff] %vm375, %v344
      %378 = vst.msk [vmem:[#allocation2 + $0x10] sm:$0xff] %vm375, %v345
      %379 = vst.msk [vmem:[#allocation2 + $0x18] sm:$0xff] %vm375, %v346
      %380 = vst.msk [vmem:[#allocation2 + $0x20] sm:$0xff] %vm375, %v347
      %381 = vst.msk [vmem:[#allocation2 + $0x28] sm:$0xff] %vm375, %v348
      %382 = vst.msk [vmem:[#allocation2 + $0x30] sm:$0xff] %vm375, %v349
      %383 = vst.msk [vmem:[#allocation2 + $0x38] sm:$0xff] %vm375, %v350
      %384 = vst.msk [vmem:[#allocation2 + $0x40] sm:$0xff] %vm375, %v351
      %385 = vst.msk [vmem:[#allocation2 + $0x48] sm:$0xff] %vm375, %v352
      %386 = vst.msk [vmem:[#allocation2 + $0x50] sm:$0xff] %vm375, %v353
      %387 = vst.msk [vmem:[#allocation2 + $0x58] sm:$0xff] %vm375, %v354
      %388 = vst.msk [vmem:[#allocation2 + $0x60] sm:$0xff] %vm375, %v355
      %389 = vst.msk [vmem:[#allocation2 + $0x68] sm:$0xff] %vm375, %v356
      %390 = vst.msk [vmem:[#allocation2 + $0x70] sm:$0xff] %vm375, %v357
      %391 = vst.msk [vmem:[#allocation2 + $0x78] sm:$0xff] %vm375, %v358
      %v392 = vld [vmem:[%s246] sm:$0xf]
      %v393 = vld [vmem:[%s246 + $0x4] sm:$0xf]
      %v394 = vld [vmem:[%s246 + $0x8] sm:$0x1]
      %v395 = vld [vmem:[%s246 + $0xc] sm:$0xf]
      %v396 = vld [vmem:[%s246 + $0x10] sm:$0xf]
      %v397 = vld [vmem:[%s246 + $0x14] sm:$0x1]
      %v398 = vld [vmem:[%s246 + $0x18] sm:$0xf]
      %v399 = vld [vmem:[%s246 + $0x1c] sm:$0xf]
      %v400 = vld [vmem:[%s246 + $0x20] sm:$0x1]
      %v401 = vld [vmem:[%s246 + $0x24] sm:$0xf]
      %v402 = vld [vmem:[%s246 + $0x28] sm:$0xf]
      %v403 = vld [vmem:[%s246 + $0x2c] sm:$0x1]
      %v404 = vld [vmem:[%s246 + $0x30] sm:$0xf]
      %v405 = vld [vmem:[%s246 + $0x34] sm:$0xf]
      %v406 = vld [vmem:[%s246 + $0x38] sm:$0x1]
      %v407 = vld [vmem:[%s246 + $0x3c] sm:$0xf]
      %v408 = vld [vmem:[%s246 + $0x40] sm:$0xf]
      %v409 = vld [vmem:[%s246 + $0x44] sm:$0x1]
      %v410 = vld [vmem:[%s246 + $0x48] sm:$0xf]
      %v411 = vld [vmem:[%s246 + $0x4c] sm:$0xf]
      %v412 = vld [vmem:[%s246 + $0x50] sm:$0x1]
      %v413 = vld [vmem:[%s246 + $0x54] sm:$0xf]
      %v414 = vld [vmem:[%s246 + $0x58] sm:$0xf]
      %v415 = vld [vmem:[%s246 + $0x5c] sm:$0x1]
      %v416 = vld [vmem:[%s246 + $0x60] sm:$0xf]
      %v417 = vld [vmem:[%s246 + $0x64] sm:$0xf]
      %v418 = vld [vmem:[%s246 + $0x68] sm:$0x1]
      %v419 = vld [vmem:[%s246 + $0x6c] sm:$0xf]
      %v420 = vld [vmem:[%s246 + $0x70] sm:$0xf]
      %v421 = vld [vmem:[%s246 + $0x74] sm:$0x1]
      %v422 = vld [vmem:[%s246 + $0x78] sm:$0xf]
      %v423 = vld [vmem:[%s246 + $0x7c] sm:$0xf]
      %v424 = vld [vmem:[%s246 + $0x80] sm:$0x1]
      %v425 = vld [vmem:[%s246 + $0x84] sm:$0xf]
      %v426 = vld [vmem:[%s246 + $0x88] sm:$0xf]
      %v427 = vld [vmem:[%s246 + $0x8c] sm:$0x1]
      %v428 = vld [vmem:[%s246 + $0x90] sm:$0xf]
      %v429 = vld [vmem:[%s246 + $0x94] sm:$0xf]
      %v430 = vld [vmem:[%s246 + $0x98] sm:$0x1]
      %v431 = vld [vmem:[%s246 + $0x9c] sm:$0xf]
      %v432 = vld [vmem:[%s246 + $0xa0] sm:$0xf]
      %v433 = vld [vmem:[%s246 + $0xa4] sm:$0x1]
      %v434 = vld [vmem:[%s246 + $0xa8] sm:$0xf]
      %v435 = vld [vmem:[%s246 + $0xac] sm:$0xf]
      %v436 = vld [vmem:[%s246 + $0xb0] sm:$0x1]
      %v437 = vld [vmem:[%s246 + $0xb4] sm:$0xf]
      %v438 = vld [vmem:[%s246 + $0xb8] sm:$0xf]
      %v439 = vld [vmem:[%s246 + $0xbc] sm:$0x1]
      %vm440 = vsmask.f32 3328
      %vm441 = vsmask.f32 7440
      %vm442 = vmor %vm440, %vm441
      %v444 = vshrl.u32 %v392, 16
      %v446 = vrot.slane %v444, 4
      %v447 = vshll.u32 %v392, 16
      %v449 = vrot.slane %v447, 5
      %v450 = vor.u32 %v446, %v449
      %v451 = vrot.slane %v450, 4
      %v453 = vshll.u32 %v393, 16
      %v455 = vrot.slane %v453, 5
      %v456 = vsel %vm442, %v451, %v455
      %v457 = vshrl.u32 %v393, 16
      %v459 = vrot.slane %v457, 4
      %v460 = vor.u32 %v459, %v455
      %v461 = vrot.slane %v460, 4
      %v463 = vshll.u32 %v394, 16
      %v465 = vrot.slane %v463, 5
      %v466 = vsel %vm442, %v461, %v465
      %v468 = vshrl.u32 %v395, 16
      %v470 = vrot.slane %v468, 4
      %v471 = vshll.u32 %v395, 16
      %v473 = vrot.slane %v471, 5
      %v474 = vor.u32 %v470, %v473
      %v475 = vrot.slane %v474, 4
      %v477 = vshll.u32 %v396, 16
      %v479 = vrot.slane %v477, 5
      %v480 = vsel %vm442, %v475, %v479
      %v481 = vshrl.u32 %v396, 16
      %v483 = vrot.slane %v481, 4
      %v484 = vor.u32 %v483, %v479
      %v485 = vrot.slane %v484, 4
      %v487 = vshll.u32 %v397, 16
      %v489 = vrot.slane %v487, 5
      %v490 = vsel %vm442, %v485, %v489
      %v492 = vshrl.u32 %v398, 16
      %v494 = vrot.slane %v492, 4
      %v495 = vshll.u32 %v398, 16
      %v497 = vrot.slane %v495, 5
      %v498 = vor.u32 %v494, %v497
      %v499 = vrot.slane %v498, 4
      %v501 = vshll.u32 %v399, 16
      %v503 = vrot.slane %v501, 5
      %v504 = vsel %vm442, %v499, %v503
      %v505 = vshrl.u32 %v399, 16
      %v507 = vrot.slane %v505, 4
      %v508 = vor.u32 %v507, %v503
      %v509 = vrot.slane %v508, 4
      %v511 = vshll.u32 %v400, 16
      %v513 = vrot.slane %v511, 5
      %v514 = vsel %vm442, %v509, %v513
      %v516 = vshrl.u32 %v401, 16
      %v518 = vrot.slane %v516, 4
      %v519 = vshll.u32 %v401, 16
      %v521 = vrot.slane %v519, 5
      %v522 = vor.u32 %v518, %v521
      %v523 = vrot.slane %v522, 4
      %v525 = vshll.u32 %v402, 16
      %v527 = vrot.slane %v525, 5
      %v528 = vsel %vm442, %v523, %v527
      %v529 = vshrl.u32 %v402, 16
      %v531 = vrot.slane %v529, 4
      %v532 = vor.u32 %v531, %v527
      %v533 = vrot.slane %v532, 4
      %v535 = vshll.u32 %v403, 16
      %v537 = vrot.slane %v535, 5
      %v538 = vsel %vm442, %v533, %v537
      %v540 = vshrl.u32 %v404, 16
      %v542 = vrot.slane %v540, 4
      %v543 = vshll.u32 %v404, 16
      %v545 = vrot.slane %v543, 5
      %v546 = vor.u32 %v542, %v545
      %v547 = vrot.slane %v546, 4
      %v549 = vshll.u32 %v405, 16
      %v551 = vrot.slane %v549, 5
      %v552 = vsel %vm442, %v547, %v551
      %v553 = vshrl.u32 %v405, 16
      %v555 = vrot.slane %v553, 4
      %v556 = vor.u32 %v555, %v551
      %v557 = vrot.slane %v556, 4
      %v559 = vshll.u32 %v406, 16
      %v561 = vrot.slane %v559, 5
      %v562 = vsel %vm442, %v557, %v561
      %v564 = vshrl.u32 %v407, 16
      %v566 = vrot.slane %v564, 4
      %v567 = vshll.u32 %v407, 16
      %v569 = vrot.slane %v567, 5
      %v570 = vor.u32 %v566, %v569
      %v571 = vrot.slane %v570, 4
      %v573 = vshll.u32 %v408, 16
      %v575 = vrot.slane %v573, 5
      %v576 = vsel %vm442, %v571, %v575
      %v577 = vshrl.u32 %v408, 16
      %v579 = vrot.slane %v577, 4
      %v580 = vor.u32 %v579, %v575
      %v581 = vrot.slane %v580, 4
      %v583 = vshll.u32 %v409, 16
      %v585 = vrot.slane %v583, 5
      %v586 = vsel %vm442, %v581, %v585
      %v588 = vshrl.u32 %v410, 16
      %v590 = vrot.slane %v588, 4
      %v591 = vshll.u32 %v410, 16
      %v593 = vrot.slane %v591, 5
      %v594 = vor.u32 %v590, %v593
      %v595 = vrot.slane %v594, 4
      %v597 = vshll.u32 %v411, 16
      %v599 = vrot.slane %v597, 5
      %v600 = vsel %vm442, %v595, %v599
      %v601 = vshrl.u32 %v411, 16
      %v603 = vrot.slane %v601, 4
      %v604 = vor.u32 %v603, %v599
      %v605 = vrot.slane %v604, 4
      %v607 = vshll.u32 %v412, 16
      %v609 = vrot.slane %v607, 5
      %v610 = vsel %vm442, %v605, %v609
      %v612 = vshrl.u32 %v413, 16
      %v614 = vrot.slane %v612, 4
      %v615 = vshll.u32 %v413, 16
      %v617 = vrot.slane %v615, 5
      %v618 = vor.u32 %v614, %v617
      %v619 = vrot.slane %v618, 4
      %v621 = vshll.u32 %v414, 16
      %v623 = vrot.slane %v621, 5
      %v624 = vsel %vm442, %v619, %v623
      %v625 = vshrl.u32 %v414, 16
      %v627 = vrot.slane %v625, 4
      %v628 = vor.u32 %v627, %v623
      %v629 = vrot.slane %v628, 4
      %v631 = vshll.u32 %v415, 16
      %v633 = vrot.slane %v631, 5
      %v634 = vsel %vm442, %v629, %v633
      %v636 = vshrl.u32 %v416, 16
      %v638 = vrot.slane %v636, 4
      %v639 = vshll.u32 %v416, 16
      %v641 = vrot.slane %v639, 5
      %v642 = vor.u32 %v638, %v641
      %v643 = vrot.slane %v642, 4
      %v645 = vshll.u32 %v417, 16
      %v647 = vrot.slane %v645, 5
      %v648 = vsel %vm442, %v643, %v647
      %v649 = vshrl.u32 %v417, 16
      %v651 = vrot.slane %v649, 4
      %v652 = vor.u32 %v651, %v647
      %v653 = vrot.slane %v652, 4
      %v655 = vshll.u32 %v418, 16
      %v657 = vrot.slane %v655, 5
      %v658 = vsel %vm442, %v653, %v657
      %v660 = vshrl.u32 %v419, 16
      %v662 = vrot.slane %v660, 4
      %v663 = vshll.u32 %v419, 16
      %v665 = vrot.slane %v663, 5
      %v666 = vor.u32 %v662, %v665
      %v667 = vrot.slane %v666, 4
      %v669 = vshll.u32 %v420, 16
      %v671 = vrot.slane %v669, 5
      %v672 = vsel %vm442, %v667, %v671
      %v673 = vshrl.u32 %v420, 16
      %v675 = vrot.slane %v673, 4
      %v676 = vor.u32 %v675, %v671
      %v677 = vrot.slane %v676, 4
      %v679 = vshll.u32 %v421, 16
      %v681 = vrot.slane %v679, 5
      %v682 = vsel %vm442, %v677, %v681
      %v684 = vshrl.u32 %v422, 16
      %v686 = vrot.slane %v684, 4
      %v687 = vshll.u32 %v422, 16
      %v689 = vrot.slane %v687, 5
      %v690 = vor.u32 %v686, %v689
      %v691 = vrot.slane %v690, 4
      %v693 = vshll.u32 %v423, 16
      %v695 = vrot.slane %v693, 5
      %v696 = vsel %vm442, %v691, %v695
      %v697 = vshrl.u32 %v423, 16
      %v699 = vrot.slane %v697, 4
      %v700 = vor.u32 %v699, %v695
      %v701 = vrot.slane %v700, 4
      %v703 = vshll.u32 %v424, 16
      %v705 = vrot.slane %v703, 5
      %v706 = vsel %vm442, %v701, %v705
      %v708 = vshrl.u32 %v425, 16
      %v710 = vrot.slane %v708, 4
      %v711 = vshll.u32 %v425, 16
      %v713 = vrot.slane %v711, 5
      %v714 = vor.u32 %v710, %v713
      %v715 = vrot.slane %v714, 4
      %v717 = vshll.u32 %v426, 16
      %v719 = vrot.slane %v717, 5
      %v720 = vsel %vm442, %v715, %v719
      %v721 = vshrl.u32 %v426, 16
      %v723 = vrot.slane %v721, 4
      %v724 = vor.u32 %v723, %v719
      %v725 = vrot.slane %v724, 4
      %v727 = vshll.u32 %v427, 16
      %v729 = vrot.slane %v727, 5
      %v730 = vsel %vm442, %v725, %v729
      %v732 = vshrl.u32 %v428, 16
      %v734 = vrot.slane %v732, 4
      %v735 = vshll.u32 %v428, 16
      %v737 = vrot.slane %v735, 5
      %v738 = vor.u32 %v734, %v737
      %v739 = vrot.slane %v738, 4
      %v741 = vshll.u32 %v429, 16
      %v743 = vrot.slane %v741, 5
      %v744 = vsel %vm442, %v739, %v743
      %v745 = vshrl.u32 %v429, 16
      %v747 = vrot.slane %v745, 4
      %v748 = vor.u32 %v747, %v743
      %v749 = vrot.slane %v748, 4
      %v751 = vshll.u32 %v430, 16
      %v753 = vrot.slane %v751, 5
      %v754 = vsel %vm442, %v749, %v753
      %v756 = vshrl.u32 %v431, 16
      %v758 = vrot.slane %v756, 4
      %v759 = vshll.u32 %v431, 16
      %v761 = vrot.slane %v759, 5
      %v762 = vor.u32 %v758, %v761
      %v763 = vrot.slane %v762, 4
      %v765 = vshll.u32 %v432, 16
      %v767 = vrot.slane %v765, 5
      %v768 = vsel %vm442, %v763, %v767
      %v769 = vshrl.u32 %v432, 16
      %v771 = vrot.slane %v769, 4
      %v772 = vor.u32 %v771, %v767
      %v773 = vrot.slane %v772, 4
      %v775 = vshll.u32 %v433, 16
      %v777 = vrot.slane %v775, 5
      %v778 = vsel %vm442, %v773, %v777
      %v780 = vshrl.u32 %v434, 16
      %v782 = vrot.slane %v780, 4
      %v783 = vshll.u32 %v434, 16
      %v785 = vrot.slane %v783, 5
      %v786 = vor.u32 %v782, %v785
      %v787 = vrot.slane %v786, 4
      %v789 = vshll.u32 %v435, 16
      %v791 = vrot.slane %v789, 5
      %v792 = vsel %vm442, %v787, %v791
      %v793 = vshrl.u32 %v435, 16
      %v795 = vrot.slane %v793, 4
      %v796 = vor.u32 %v795, %v791
      %v797 = vrot.slane %v796, 4
      %v799 = vshll.u32 %v436, 16
      %v801 = vrot.slane %v799, 5
      %v802 = vsel %vm442, %v797, %v801
      %v804 = vshrl.u32 %v437, 16
      %v806 = vrot.slane %v804, 4
      %v807 = vshll.u32 %v437, 16
      %v809 = vrot.slane %v807, 5
      %v810 = vor.u32 %v806, %v809
      %v811 = vrot.slane %v810, 4
      %v813 = vshll.u32 %v438, 16
      %v815 = vrot.slane %v813, 5
      %v816 = vsel %vm442, %v811, %v815
      %v817 = vshrl.u32 %v438, 16
      %v819 = vrot.slane %v817, 4
      %v820 = vor.u32 %v819, %v815
      %v821 = vrot.slane %v820, 4
      %v823 = vshll.u32 %v439, 16
      %v825 = vrot.slane %v823, 5
      %v826 = vsel %vm442, %v821, %v825
      %v827 = vunpack.c.l.b16 %v456
      %v828 = vunpack.c.l.b16 %v466
      %v829 = vunpack.c.l.b16 %v480
      %v830 = vunpack.c.l.b16 %v490
      %v831 = vunpack.c.l.b16 %v504
      %v832 = vunpack.c.l.b16 %v514
      %v833 = vunpack.c.l.b16 %v528
      %v834 = vunpack.c.l.b16 %v538
      %v835 = vunpack.c.l.b16 %v552
      %v836 = vunpack.c.l.b16 %v562
      %v837 = vunpack.c.l.b16 %v576
      %v838 = vunpack.c.l.b16 %v586
      %v839 = vunpack.c.l.b16 %v600
      %v840 = vunpack.c.l.b16 %v610
      %v841 = vunpack.c.l.b16 %v624
      %v842 = vunpack.c.l.b16 %v634
      %v843 = vunpack.c.l.b16 %v648
      %v844 = vunpack.c.l.b16 %v658
      %v845 = vunpack.c.l.b16 %v672
      %v846 = vunpack.c.l.b16 %v682
      %v847 = vunpack.c.l.b16 %v696
      %v848 = vunpack.c.l.b16 %v706
      %v849 = vunpack.c.l.b16 %v720
      %v850 = vunpack.c.l.b16 %v730
      %v851 = vunpack.c.l.b16 %v744
      %v852 = vunpack.c.l.b16 %v754
      %v853 = vunpack.c.l.b16 %v768
      %v854 = vunpack.c.l.b16 %v778
      %v855 = vunpack.c.l.b16 %v792
      %v856 = vunpack.c.l.b16 %v802
      %v857 = vunpack.c.l.b16 %v816
      %v858 = vunpack.c.l.b16 %v826
      %v859 = vpack.c.b16 %v828, %v827
      %v860 = vpack.c.b16 %v830, %v829
      %v861 = vpack.c.b16 %v832, %v831
      %v862 = vpack.c.b16 %v834, %v833
      %v863 = vpack.c.b16 %v836, %v835
      %v864 = vpack.c.b16 %v838, %v837
      %v865 = vpack.c.b16 %v840, %v839
      %v866 = vpack.c.b16 %v842, %v841
      %v867 = vpack.c.b16 %v844, %v843
      %v868 = vpack.c.b16 %v846, %v845
      %v869 = vpack.c.b16 %v848, %v847
      %v870 = vpack.c.b16 %v850, %v849
      %v871 = vpack.c.b16 %v852, %v851
      %v872 = vpack.c.b16 %v854, %v853
      %v873 = vpack.c.b16 %v856, %v855
      %v874 = vpack.c.b16 %v858, %v857
      %875 = vrot.lane.b32.xlu0 %v859, 4
      %v876 = vpop.permute.xlu0 %875
      %877 = vrot.lane.b32.xlu0 %v860, 4
      %v878 = vpop.permute.xlu0 %877
      %879 = vrot.lane.b32.xlu0 %v861, 4
      %v880 = vpop.permute.xlu0 %879
      %881 = vrot.lane.b32.xlu0 %v862, 4
      %v882 = vpop.permute.xlu0 %881
      %883 = vrot.lane.b32.xlu0 %v863, 4
      %v884 = vpop.permute.xlu0 %883
      %885 = vrot.lane.b32.xlu0 %v864, 4
      %v886 = vpop.permute.xlu0 %885
      %887 = vrot.lane.b32.xlu0 %v865, 4
      %v888 = vpop.permute.xlu0 %887
      %889 = vrot.lane.b32.xlu0 %v866, 4
      %v890 = vpop.permute.xlu0 %889
      %891 = vrot.lane.b32.xlu0 %v867, 4
      %v892 = vpop.permute.xlu0 %891
      %893 = vrot.lane.b32.xlu0 %v868, 4
      %v894 = vpop.permute.xlu0 %893
      %895 = vrot.lane.b32.xlu0 %v869, 4
      %v896 = vpop.permute.xlu0 %895
      %897 = vrot.lane.b32.xlu0 %v870, 4
      %v898 = vpop.permute.xlu0 %897
      %899 = vrot.lane.b32.xlu0 %v871, 4
      %v900 = vpop.permute.xlu0 %899
      %901 = vrot.lane.b32.xlu0 %v872, 4
      %v902 = vpop.permute.xlu0 %901
      %903 = vrot.lane.b32.xlu0 %v873, 4
      %v904 = vpop.permute.xlu0 %903
      %905 = vrot.lane.b32.xlu0 %v874, 4
      %v906 = vpop.permute.xlu0 %905
      %vm923 = vcmask 64544
      %924 = vst.msk [vmem:[#allocation2] sm:$0xff] %vm923, %v876
      %925 = vst.msk [vmem:[#allocation2 + $0x8] sm:$0xff] %vm923, %v878
      %926 = vst.msk [vmem:[#allocation2 + $0x10] sm:$0xff] %vm923, %v880
      %927 = vst.msk [vmem:[#allocation2 + $0x18] sm:$0xff] %vm923, %v882
      %928 = vst.msk [vmem:[#allocation2 + $0x20] sm:$0xff] %vm923, %v884
      %929 = vst.msk [vmem:[#allocation2 + $0x28] sm:$0xff] %vm923, %v886
      %930 = vst.msk [vmem:[#allocation2 + $0x30] sm:$0xff] %vm923, %v888
      %931 = vst.msk [vmem:[#allocation2 + $0x38] sm:$0xff] %vm923, %v890
      %932 = vst.msk [vmem:[#allocation2 + $0x40] sm:$0xff] %vm923, %v892
      %933 = vst.msk [vmem:[#allocation2 + $0x48] sm:$0xff] %vm923, %v894
      %934 = vst.msk [vmem:[#allocation2 + $0x50] sm:$0xff] %vm923, %v896
      %935 = vst.msk [vmem:[#allocation2 + $0x58] sm:$0xff] %vm923, %v898
      %936 = vst.msk [vmem:[#allocation2 + $0x60] sm:$0xff] %vm923, %v900
      %937 = vst.msk [vmem:[#allocation2 + $0x68] sm:$0xff] %vm923, %v902
      %938 = vst.msk [vmem:[#allocation2 + $0x70] sm:$0xff] %vm923, %v904
      %939 = vst.msk [vmem:[#allocation2 + $0x78] sm:$0xff] %vm923, %v906
      %v940 = vld [vmem:[%s246] sm:$0xe]
      %v941 = vld [vmem:[%s246 + $0x4] sm:$0xf]
      %v942 = vld [vmem:[%s246 + $0x8] sm:$0x1]
      %v943 = vld [vmem:[%s246 + $0xc] sm:$0xe]
      %v944 = vld [vmem:[%s246 + $0x10] sm:$0xf]
      %v945 = vld [vmem:[%s246 + $0x14] sm:$0x1]
      %v946 = vld [vmem:[%s246 + $0x18] sm:$0xe]
      %v947 = vld [vmem:[%s246 + $0x1c] sm:$0xf]
      %v948 = vld [vmem:[%s246 + $0x20] sm:$0x1]
      %v949 = vld [vmem:[%s246 + $0x24] sm:$0xe]
      %v950 = vld [vmem:[%s246 + $0x28] sm:$0xf]
      %v951 = vld [vmem:[%s246 + $0x2c] sm:$0x1]
      %v952 = vld [vmem:[%s246 + $0x30] sm:$0xe]
      %v953 = vld [vmem:[%s246 + $0x34] sm:$0xf]
      %v954 = vld [vmem:[%s246 + $0x38] sm:$0x1]
      %v955 = vld [vmem:[%s246 + $0x3c] sm:$0xe]
      %v956 = vld [vmem:[%s246 + $0x40] sm:$0xf]
      %v957 = vld [vmem:[%s246 + $0x44] sm:$0x1]
      %v958 = vld [vmem:[%s246 + $0x48] sm:$0xe]
      %v959 = vld [vmem:[%s246 + $0x4c] sm:$0xf]
      %v960 = vld [vmem:[%s246 + $0x50] sm:$0x1]
      %v961 = vld [vmem:[%s246 + $0x54] sm:$0xe]
      %v962 = vld [vmem:[%s246 + $0x58] sm:$0xf]
      %v963 = vld [vmem:[%s246 + $0x5c] sm:$0x1]
      %v964 = vld [vmem:[%s246 + $0x60] sm:$0xe]
      %v965 = vld [vmem:[%s246 + $0x64] sm:$0xf]
      %v966 = vld [vmem:[%s246 + $0x68] sm:$0x1]
      %v967 = vld [vmem:[%s246 + $0x6c] sm:$0xe]
      %v968 = vld [vmem:[%s246 + $0x70] sm:$0xf]
      %v969 = vld [vmem:[%s246 + $0x74] sm:$0x1]
      %v970 = vld [vmem:[%s246 + $0x78] sm:$0xe]
      %v971 = vld [vmem:[%s246 + $0x7c] sm:$0xf]
      %v972 = vld [vmem:[%s246 + $0x80] sm:$0x1]
      %v973 = vld [vmem:[%s246 + $0x84] sm:$0xe]
      %v974 = vld [vmem:[%s246 + $0x88] sm:$0xf]
      %v975 = vld [vmem:[%s246 + $0x8c] sm:$0x1]
      %v976 = vld [vmem:[%s246 + $0x90] sm:$0xe]
      %v977 = vld [vmem:[%s246 + $0x94] sm:$0xf]
      %v978 = vld [vmem:[%s246 + $0x98] sm:$0x1]
      %v979 = vld [vmem:[%s246 + $0x9c] sm:$0xe]
      %v980 = vld [vmem:[%s246 + $0xa0] sm:$0xf]
      %v981 = vld [vmem:[%s246 + $0xa4] sm:$0x1]
      %v982 = vld [vmem:[%s246 + $0xa8] sm:$0xe]
      %v983 = vld [vmem:[%s246 + $0xac] sm:$0xf]
      %v984 = vld [vmem:[%s246 + $0xb0] sm:$0x1]
      %v985 = vld [vmem:[%s246 + $0xb4] sm:$0xe]
      %v986 = vld [vmem:[%s246 + $0xb8] sm:$0xf]
      %v987 = vld [vmem:[%s246 + $0xbc] sm:$0x1]
      %vm1036 = vcmask 1042432
      %vm1037 = vcmask 1046532
      %vm1038 = vmor %vm1036, %vm1037
      %v1039 = vrot.slane %v940, 5
      %v1040 = vrot.slane %v1039, 4
      %v1041 = vrot.slane %v941, 5
      %v1042 = vsel %vm1038, %v1040, %v1041
      %v1043 = vrot.slane %v1041, 4
      %v1044 = vrot.slane %v942, 5
      %v1045 = vsel %vm1038, %v1043, %v1044
      %v1046 = vrot.slane %v943, 5
      %v1047 = vrot.slane %v1046, 4
      %v1048 = vrot.slane %v944, 5
      %v1049 = vsel %vm1038, %v1047, %v1048
      %v1050 = vrot.slane %v1048, 4
      %v1051 = vrot.slane %v945, 5
      %v1052 = vsel %vm1038, %v1050, %v1051
      %v1053 = vrot.slane %v946, 5
      %v1054 = vrot.slane %v1053, 4
      %v1055 = vrot.slane %v947, 5
      %v1056 = vsel %vm1038, %v1054, %v1055
      %v1057 = vrot.slane %v1055, 4
      %v1058 = vrot.slane %v948, 5
      %v1059 = vsel %vm1038, %v1057, %v1058
      %v1060 = vrot.slane %v949, 5
      %v1061 = vrot.slane %v1060, 4
      %v1062 = vrot.slane %v950, 5
      %v1063 = vsel %vm1038, %v1061, %v1062
      %v1064 = vrot.slane %v1062, 4
      %v1065 = vrot.slane %v951, 5
      %v1066 = vsel %vm1038, %v1064, %v1065
      %v1067 = vrot.slane %v952, 5
      %v1068 = vrot.slane %v1067, 4
      %v1069 = vrot.slane %v953, 5
      %v1070 = vsel %vm1038, %v1068, %v1069
      %v1071 = vrot.slane %v1069, 4
      %v1072 = vrot.slane %v954, 5
      %v1073 = vsel %vm1038, %v1071, %v1072
      %v1074 = vrot.slane %v955, 5
      %v1075 = vrot.slane %v1074, 4
      %v1076 = vrot.slane %v956, 5
      %v1077 = vsel %vm1038, %v1075, %v1076
      %v1078 = vrot.slane %v1076, 4
      %v1079 = vrot.slane %v957, 5
      %v1080 = vsel %vm1038, %v1078, %v1079
      %v1081 = vrot.slane %v958, 5
      %v1082 = vrot.slane %v1081, 4
      %v1083 = vrot.slane %v959, 5
      %v1084 = vsel %vm1038, %v1082, %v1083
      %v1085 = vrot.slane %v1083, 4
      %v1086 = vrot.slane %v960, 5
      %v1087 = vsel %vm1038, %v1085, %v1086
      %v1088 = vrot.slane %v961, 5
      %v1089 = vrot.slane %v1088, 4
      %v1090 = vrot.slane %v962, 5
      %v1091 = vsel %vm1038, %v1089, %v1090
      %v1092 = vrot.slane %v1090, 4
      %v1093 = vrot.slane %v963, 5
      %v1094 = vsel %vm1038, %v1092, %v1093
      %v1095 = vrot.slane %v964, 5
      %v1096 = vrot.slane %v1095, 4
      %v1097 = vrot.slane %v965, 5
      %v1098 = vsel %vm1038, %v1096, %v1097
      %v1099 = vrot.slane %v1097, 4
      %v1100 = vrot.slane %v966, 5
      %v1101 = vsel %vm1038, %v1099, %v1100
      %v1102 = vrot.slane %v967, 5
      %v1103 = vrot.slane %v1102, 4
      %v1104 = vrot.slane %v968, 5
      %v1105 = vsel %vm1038, %v1103, %v1104
      %v1106 = vrot.slane %v1104, 4
      %v1107 = vrot.slane %v969, 5
      %v1108 = vsel %vm1038, %v1106, %v1107
      %v1109 = vrot.slane %v970, 5
      %v1110 = vrot.slane %v1109, 4
      %v1111 = vrot.slane %v971, 5
      %v1112 = vsel %vm1038, %v1110, %v1111
      %v1113 = vrot.slane %v1111, 4
      %v1114 = vrot.slane %v972, 5
      %v1115 = vsel %vm1038, %v1113, %v1114
      %v1116 = vrot.slane %v973, 5
      %v1117 = vrot.slane %v1116, 4
      %v1118 = vrot.slane %v974, 5
      %v1119 = vsel %vm1038, %v1117, %v1118
      %v1120 = vrot.slane %v1118, 4
      %v1121 = vrot.slane %v975, 5
      %v1122 = vsel %vm1038, %v1120, %v1121
      %v1123 = vrot.slane %v976, 5
      %v1124 = vrot.slane %v1123, 4
      %v1125 = vrot.slane %v977, 5
      %v1126 = vsel %vm1038, %v1124, %v1125
      %v1127 = vrot.slane %v1125, 4
      %v1128 = vrot.slane %v978, 5
      %v1129 = vsel %vm1038, %v1127, %v1128
      %v1130 = vrot.slane %v979, 5
      %v1131 = vrot.slane %v1130, 4
      %v1132 = vrot.slane %v980, 5
      %v1133 = vsel %vm1038, %v1131, %v1132
      %v1134 = vrot.slane %v1132, 4
      %v1135 = vrot.slane %v981, 5
      %v1136 = vsel %vm1038, %v1134, %v1135
      %v1137 = vrot.slane %v982, 5
      %v1138 = vrot.slane %v1137, 4
      %v1139 = vrot.slane %v983, 5
      %v1140 = vsel %vm1038, %v1138, %v1139
      %v1141 = vrot.slane %v1139, 4
      %v1142 = vrot.slane %v984, 5
      %v1143 = vsel %vm1038, %v1141, %v1142
      %v1144 = vrot.slane %v985, 5
      %v1145 = vrot.slane %v1144, 4
      %v1146 = vrot.slane %v986, 5
      %v1147 = vsel %vm1038, %v1145, %v1146
      %v1148 = vrot.slane %v1146, 4
      %v1149 = vrot.slane %v987, 5
      %v1150 = vsel %vm1038, %v1148, %v1149
      %v1151 = vunpack.c.l.b16 %v1042
      %v1152 = vunpack.c.l.b16 %v1045
      %v1153 = vunpack.c.l.b16 %v1049
      %v1154 = vunpack.c.l.b16 %v1052
      %v1155 = vunpack.c.l.b16 %v1056
      %v1156 = vunpack.c.l.b16 %v1059
      %v1157 = vunpack.c.l.b16 %v1063
      %v1158 = vunpack.c.l.b16 %v1066
      %v1159 = vunpack.c.l.b16 %v1070
      %v1160 = vunpack.c.l.b16 %v1073
      %v1161 = vunpack.c.l.b16 %v1077
      %v1162 = vunpack.c.l.b16 %v1080
      %v1163 = vunpack.c.l.b16 %v1084
      %v1164 = vunpack.c.l.b16 %v1087
      %v1165 = vunpack.c.l.b16 %v1091
      %v1166 = vunpack.c.l.b16 %v1094
      %v1167 = vunpack.c.l.b16 %v1098
      %v1168 = vunpack.c.l.b16 %v1101
      %v1169 = vunpack.c.l.b16 %v1105
      %v1170 = vunpack.c.l.b16 %v1108
      %v1171 = vunpack.c.l.b16 %v1112
      %v1172 = vunpack.c.l.b16 %v1115
      %v1173 = vunpack.c.l.b16 %v1119
      %v1174 = vunpack.c.l.b16 %v1122
      %v1175 = vunpack.c.l.b16 %v1126
      %v1176 = vunpack.c.l.b16 %v1129
      %v1177 = vunpack.c.l.b16 %v1133
      %v1178 = vunpack.c.l.b16 %v1136
      %v1179 = vunpack.c.l.b16 %v1140
      %v1180 = vunpack.c.l.b16 %v1143
      %v1181 = vunpack.c.l.b16 %v1147
      %v1182 = vunpack.c.l.b16 %v1150
      %v1183 = vpack.c.b16 %v1152, %v1151
      %v1184 = vpack.c.b16 %v1154, %v1153
      %v1185 = vpack.c.b16 %v1156, %v1155
      %v1186 = vpack.c.b16 %v1158, %v1157
      %v1187 = vpack.c.b16 %v1160, %v1159
      %v1188 = vpack.c.b16 %v1162, %v1161
      %v1189 = vpack.c.b16 %v1164, %v1163
      %v1190 = vpack.c.b16 %v1166, %v1165
      %v1191 = vpack.c.b16 %v1168, %v1167
      %v1192 = vpack.c.b16 %v1170, %v1169
      %v1193 = vpack.c.b16 %v1172, %v1171
      %v1194 = vpack.c.b16 %v1174, %v1173
      %v1195 = vpack.c.b16 %v1176, %v1175
      %v1196 = vpack.c.b16 %v1178, %v1177
      %v1197 = vpack.c.b16 %v1180, %v1179
      %v1198 = vpack.c.b16 %v1182, %v1181
      %1199 = vrot.lane.b32.xlu0 %v1183, 8
      %v1200 = vpop.permute.xlu0 %1199
      %1201 = vrot.lane.b32.xlu0 %v1184, 8
      %v1202 = vpop.permute.xlu0 %1201
      %1203 = vrot.lane.b32.xlu0 %v1185, 8
      %v1204 = vpop.permute.xlu0 %1203
      %1205 = vrot.lane.b32.xlu0 %v1186, 8
      %v1206 = vpop.permute.xlu0 %1205
      %1207 = vrot.lane.b32.xlu0 %v1187, 8
      %v1208 = vpop.permute.xlu0 %1207
      %1209 = vrot.lane.b32.xlu0 %v1188, 8
      %v1210 = vpop.permute.xlu0 %1209
      %1211 = vrot.lane.b32.xlu0 %v1189, 8
      %v1212 = vpop.permute.xlu0 %1211
      %1213 = vrot.lane.b32.xlu0 %v1190, 8
      %v1214 = vpop.permute.xlu0 %1213
      %1215 = vrot.lane.b32.xlu0 %v1191, 8
      %v1216 = vpop.permute.xlu0 %1215
      %1217 = vrot.lane.b32.xlu0 %v1192, 8
      %v1218 = vpop.permute.xlu0 %1217
      %1219 = vrot.lane.b32.xlu0 %v1193, 8
      %v1220 = vpop.permute.xlu0 %1219
      %1221 = vrot.lane.b32.xlu0 %v1194, 8
      %v1222 = vpop.permute.xlu0 %1221
      %1223 = vrot.lane.b32.xlu0 %v1195, 8
      %v1224 = vpop.permute.xlu0 %1223
      %1225 = vrot.lane.b32.xlu0 %v1196, 8
      %v1226 = vpop.permute.xlu0 %1225
      %1227 = vrot.lane.b32.xlu0 %v1197, 8
      %v1228 = vpop.permute.xlu0 %1227
      %1229 = vrot.lane.b32.xlu0 %v1198, 8
      %v1230 = vpop.permute.xlu0 %1229
      %vm1247 = vcmask 97344
      %1248 = vst.msk [vmem:[#allocation2] sm:$0xff] %vm1247, %v1200
      %1249 = vst.msk [vmem:[#allocation2 + $0x8] sm:$0xff] %vm1247, %v1202
      %1250 = vst.msk [vmem:[#allocation2 + $0x10] sm:$0xff] %vm1247, %v1204
      %1251 = vst.msk [vmem:[#allocation2 + $0x18] sm:$0xff] %vm1247, %v1206
      %1252 = vst.msk [vmem:[#allocation2 + $0x20] sm:$0xff] %vm1247, %v1208
      %1253 = vst.msk [vmem:[#allocation2 + $0x28] sm:$0xff] %vm1247, %v1210
      %1254 = vst.msk [vmem:[#allocation2 + $0x30] sm:$0xff] %vm1247, %v1212
      %1255 = vst.msk [vmem:[#allocation2 + $0x38] sm:$0xff] %vm1247, %v1214
      %1256 = vst.msk [vmem:[#allocation2 + $0x40] sm:$0xff] %vm1247, %v1216
      %1257 = vst.msk [vmem:[#allocation2 + $0x48] sm:$0xff] %vm1247, %v1218
      %1258 = vst.msk [vmem:[#allocation2 + $0x50] sm:$0xff] %vm1247, %v1220
      %1259 = vst.msk [vmem:[#allocation2 + $0x58] sm:$0xff] %vm1247, %v1222
      %1260 = vst.msk [vmem:[#allocation2 + $0x60] sm:$0xff] %vm1247, %v1224
      %1261 = vst.msk [vmem:[#allocation2 + $0x68] sm:$0xff] %vm1247, %v1226
      %1262 = vst.msk [vmem:[#allocation2 + $0x70] sm:$0xff] %vm1247, %v1228
      %1263 = vst.msk [vmem:[#allocation2 + $0x78] sm:$0xff] %vm1247, %v1230
      %s1264 = sadd.s32 %s243, 1
      %s1265 = smul.u32 %s1264, 3
      %s1266 = smul.addr %s1265, 4
      %s1267 = scalar_lea.vmem %s220, %s1266
      %v1268 = vld [vmem:[%s1267] sm:$0xf]
      %v1269 = vld [vmem:[%s1267 + $0x4] sm:$0xf]
      %v1270 = vld [vmem:[%s1267 + $0xc] sm:$0xf]
      %v1271 = vld [vmem:[%s1267 + $0x10] sm:$0xf]
      %v1272 = vld [vmem:[%s1267 + $0x18] sm:$0xf]
      %v1273 = vld [vmem:[%s1267 + $0x1c] sm:$0xf]
      %v1274 = vld [vmem:[%s1267 + $0x24] sm:$0xf]
      %v1275 = vld [vmem:[%s1267 + $0x28] sm:$0xf]
      %v1276 = vld [vmem:[%s1267 + $0x30] sm:$0xf]
      %v1277 = vld [vmem:[%s1267 + $0x34] sm:$0xf]
      %v1278 = vld [vmem:[%s1267 + $0x3c] sm:$0xf]
      %v1279 = vld [vmem:[%s1267 + $0x40] sm:$0xf]
      %v1280 = vld [vmem:[%s1267 + $0x48] sm:$0xf]
      %v1281 = vld [vmem:[%s1267 + $0x4c] sm:$0xf]
      %v1282 = vld [vmem:[%s1267 + $0x54] sm:$0xf]
      %v1283 = vld [vmem:[%s1267 + $0x58] sm:$0xf]
      %v1284 = vld [vmem:[%s1267 + $0x60] sm:$0xf]
      %v1285 = vld [vmem:[%s1267 + $0x64] sm:$0xf]
      %v1286 = vld [vmem:[%s1267 + $0x6c] sm:$0xf]
      %v1287 = vld [vmem:[%s1267 + $0x70] sm:$0xf]
      %v1288 = vld [vmem:[%s1267 + $0x78] sm:$0xf]
      %v1289 = vld [vmem:[%s1267 + $0x7c] sm:$0xf]
      %v1290 = vld [vmem:[%s1267 + $0x84] sm:$0xf]
      %v1291 = vld [vmem:[%s1267 + $0x88] sm:$0xf]
      %v1292 = vld [vmem:[%s1267 + $0x90] sm:$0xf]
      %v1293 = vld [vmem:[%s1267 + $0x94] sm:$0xf]
      %v1294 = vld [vmem:[%s1267 + $0x9c] sm:$0xf]
      %v1295 = vld [vmem:[%s1267 + $0xa0] sm:$0xf]
      %v1296 = vld [vmem:[%s1267 + $0xa8] sm:$0xf]
      %v1297 = vld [vmem:[%s1267 + $0xac] sm:$0xf]
      %v1298 = vld [vmem:[%s1267 + $0xb4] sm:$0xf]
      %v1299 = vld [vmem:[%s1267 + $0xb8] sm:$0xf]
      %v1332 = vunpack.c.l.b16 %v1268
      %v1333 = vunpack.c.l.b16 %v1269
      %v1334 = vunpack.c.l.b16 %v1270
      %v1335 = vunpack.c.l.b16 %v1271
      %v1336 = vunpack.c.l.b16 %v1272
      %v1337 = vunpack.c.l.b16 %v1273
      %v1338 = vunpack.c.l.b16 %v1274
      %v1339 = vunpack.c.l.b16 %v1275
      %v1340 = vunpack.c.l.b16 %v1276
      %v1341 = vunpack.c.l.b16 %v1277
      %v1342 = vunpack.c.l.b16 %v1278
      %v1343 = vunpack.c.l.b16 %v1279
      %v1344 = vunpack.c.l.b16 %v1280
      %v1345 = vunpack.c.l.b16 %v1281
      %v1346 = vunpack.c.l.b16 %v1282
      %v1347 = vunpack.c.l.b16 %v1283
      %v1348 = vunpack.c.l.b16 %v1284
      %v1349 = vunpack.c.l.b16 %v1285
      %v1350 = vunpack.c.l.b16 %v1286
      %v1351 = vunpack.c.l.b16 %v1287
      %v1352 = vunpack.c.l.b16 %v1288
      %v1353 = vunpack.c.l.b16 %v1289
      %v1354 = vunpack.c.l.b16 %v1290
      %v1355 = vunpack.c.l.b16 %v1291
      %v1356 = vunpack.c.l.b16 %v1292
      %v1357 = vunpack.c.l.b16 %v1293
      %v1358 = vunpack.c.l.b16 %v1294
      %v1359 = vunpack.c.l.b16 %v1295
      %v1360 = vunpack.c.l.b16 %v1296
      %v1361 = vunpack.c.l.b16 %v1297
      %v1362 = vunpack.c.l.b16 %v1298
      %v1363 = vunpack.c.l.b16 %v1299
      %v1364 = vpack.c.b16 %v1333, %v1332
      %v1365 = vpack.c.b16 %v1335, %v1334
      %v1366 = vpack.c.b16 %v1337, %v1336
      %v1367 = vpack.c.b16 %v1339, %v1338
      %v1368 = vpack.c.b16 %v1341, %v1340
      %v1369 = vpack.c.b16 %v1343, %v1342
      %v1370 = vpack.c.b16 %v1345, %v1344
      %v1371 = vpack.c.b16 %v1347, %v1346
      %v1372 = vpack.c.b16 %v1349, %v1348
      %v1373 = vpack.c.b16 %v1351, %v1350
      %v1374 = vpack.c.b16 %v1353, %v1352
      %v1375 = vpack.c.b16 %v1355, %v1354
      %v1376 = vpack.c.b16 %v1357, %v1356
      %v1377 = vpack.c.b16 %v1359, %v1358
      %v1378 = vpack.c.b16 %v1361, %v1360
      %v1379 = vpack.c.b16 %v1363, %v1362
      %1380 = vrot.lane.b32.xlu0 %v1364, 12
      %v1381 = vpop.permute.xlu0 %1380
      %1382 = vrot.lane.b32.xlu0 %v1365, 12
      %v1383 = vpop.permute.xlu0 %1382
      %1384 = vrot.lane.b32.xlu0 %v1366, 12
      %v1385 = vpop.permute.xlu0 %1384
      %1386 = vrot.lane.b32.xlu0 %v1367, 12
      %v1387 = vpop.permute.xlu0 %1386
      %1388 = vrot.lane.b32.xlu0 %v1368, 12
      %v1389 = vpop.permute.xlu0 %1388
      %1390 = vrot.lane.b32.xlu0 %v1369, 12
      %v1391 = vpop.permute.xlu0 %1390
      %1392 = vrot.lane.b32.xlu0 %v1370, 12
      %v1393 = vpop.permute.xlu0 %1392
      %1394 = vrot.lane.b32.xlu0 %v1371, 12
      %v1395 = vpop.permute.xlu0 %1394
      %1396 = vrot.lane.b32.xlu0 %v1372, 12
      %v1397 = vpop.permute.xlu0 %1396
      %1398 = vrot.lane.b32.xlu0 %v1373, 12
      %v1399 = vpop.permute.xlu0 %1398
      %1400 = vrot.lane.b32.xlu0 %v1374, 12
      %v1401 = vpop.permute.xlu0 %1400
      %1402 = vrot.lane.b32.xlu0 %v1375, 12
      %v1403 = vpop.permute.xlu0 %1402
      %1404 = vrot.lane.b32.xlu0 %v1376, 12
      %v1405 = vpop.permute.xlu0 %1404
      %1406 = vrot.lane.b32.xlu0 %v1377, 12
      %v1407 = vpop.permute.xlu0 %1406
      %1408 = vrot.lane.b32.xlu0 %v1378, 12
      %v1409 = vpop.permute.xlu0 %1408
      %1410 = vrot.lane.b32.xlu0 %v1379, 12
      %v1411 = vpop.permute.xlu0 %1410
      %vm1428 = vcmask 130144
      %1429 = vst.msk [vmem:[#allocation2] sm:$0xff] %vm1428, %v1381
      %1430 = vst.msk [vmem:[#allocation2 + $0x8] sm:$0xff] %vm1428, %v1383
      %1431 = vst.msk [vmem:[#allocation2 + $0x10] sm:$0xff] %vm1428, %v1385
      %1432 = vst.msk [vmem:[#allocation2 + $0x18] sm:$0xff] %vm1428, %v1387
      %1433 = vst.msk [vmem:[#allocation2 + $0x20] sm:$0xff] %vm1428, %v1389
      %1434 = vst.msk [vmem:[#allocation2 + $0x28] sm:$0xff] %vm1428, %v1391
      %1435 = vst.msk [vmem:[#allocation2 + $0x30] sm:$0xff] %vm1428, %v1393
      %1436 = vst.msk [vmem:[#allocation2 + $0x38] sm:$0xff] %vm1428, %v1395
      %1437 = vst.msk [vmem:[#allocation2 + $0x40] sm:$0xff] %vm1428, %v1397
      %1438 = vst.msk [vmem:[#allocation2 + $0x48] sm:$0xff] %vm1428, %v1399
      %1439 = vst.msk [vmem:[#allocation2 + $0x50] sm:$0xff] %vm1428, %v1401
      %1440 = vst.msk [vmem:[#allocation2 + $0x58] sm:$0xff] %vm1428, %v1403
      %1441 = vst.msk [vmem:[#allocation2 + $0x60] sm:$0xff] %vm1428, %v1405
      %1442 = vst.msk [vmem:[#allocation2 + $0x68] sm:$0xff] %vm1428, %v1407
      %1443 = vst.msk [vmem:[#allocation2 + $0x70] sm:$0xff] %vm1428, %v1409
      %1444 = vst.msk [vmem:[#allocation2 + $0x78] sm:$0xff] %vm1428, %v1411
      %v1445 = vld [vmem:[%s1267] sm:$0xf]
      %v1446 = vld [vmem:[%s1267 + $0x4] sm:$0xf]
      %v1447 = vld [vmem:[%s1267 + $0x8] sm:$0x1]
      %v1448 = vld [vmem:[%s1267 + $0xc] sm:$0xf]
      %v1449 = vld [vmem:[%s1267 + $0x10] sm:$0xf]
      %v1450 = vld [vmem:[%s1267 + $0x14] sm:$0x1]
      %v1451 = vld [vmem:[%s1267 + $0x18] sm:$0xf]
      %v1452 = vld [vmem:[%s1267 + $0x1c] sm:$0xf]
      %v1453 = vld [vmem:[%s1267 + $0x20] sm:$0x1]
      %v1454 = vld [vmem:[%s1267 + $0x24] sm:$0xf]
      %v1455 = vld [vmem:[%s1267 + $0x28] sm:$0xf]
      %v1456 = vld [vmem:[%s1267 + $0x2c] sm:$0x1]
      %v1457 = vld [vmem:[%s1267 + $0x30] sm:$0xf]
      %v1458 = vld [vmem:[%s1267 + $0x34] sm:$0xf]
      %v1459 = vld [vmem:[%s1267 + $0x38] sm:$0x1]
      %v1460 = vld [vmem:[%s1267 + $0x3c] sm:$0xf]
      %v1461 = vld [vmem:[%s1267 + $0x40] sm:$0xf]
      %v1462 = vld [vmem:[%s1267 + $0x44] sm:$0x1]
      %v1463 = vld [vmem:[%s1267 + $0x48] sm:$0xf]
      %v1464 = vld [vmem:[%s1267 + $0x4c] sm:$0xf]
      %v1465 = vld [vmem:[%s1267 + $0x50] sm:$0x1]
      %v1466 = vld [vmem:[%s1267 + $0x54] sm:$0xf]
      %v1467 = vld [vmem:[%s1267 + $0x58] sm:$0xf]
      %v1468 = vld [vmem:[%s1267 + $0x5c] sm:$0x1]
      %v1469 = vld [vmem:[%s1267 + $0x60] sm:$0xf]
      %v1470 = vld [vmem:[%s1267 + $0x64] sm:$0xf]
      %v1471 = vld [vmem:[%s1267 + $0x68] sm:$0x1]
      %v1472 = vld [vmem:[%s1267 + $0x6c] sm:$0xf]
      %v1473 = vld [vmem:[%s1267 + $0x70] sm:$0xf]
      %v1474 = vld [vmem:[%s1267 + $0x74] sm:$0x1]
      %v1475 = vld [vmem:[%s1267 + $0x78] sm:$0xf]
      %v1476 = vld [vmem:[%s1267 + $0x7c] sm:$0xf]
      %v1477 = vld [vmem:[%s1267 + $0x80] sm:$0x1]
      %v1478 = vld [vmem:[%s1267 + $0x84] sm:$0xf]
      %v1479 = vld [vmem:[%s1267 + $0x88] sm:$0xf]
      %v1480 = vld [vmem:[%s1267 + $0x8c] sm:$0x1]
      %v1481 = vld [vmem:[%s1267 + $0x90] sm:$0xf]
      %v1482 = vld [vmem:[%s1267 + $0x94] sm:$0xf]
      %v1483 = vld [vmem:[%s1267 + $0x98] sm:$0x1]
      %v1484 = vld [vmem:[%s1267 + $0x9c] sm:$0xf]
      %v1485 = vld [vmem:[%s1267 + $0xa0] sm:$0xf]
      %v1486 = vld [vmem:[%s1267 + $0xa4] sm:$0x1]
      %v1487 = vld [vmem:[%s1267 + $0xa8] sm:$0xf]
      %v1488 = vld [vmem:[%s1267 + $0xac] sm:$0xf]
      %v1489 = vld [vmem:[%s1267 + $0xb0] sm:$0x1]
      %v1490 = vld [vmem:[%s1267 + $0xb4] sm:$0xf]
      %v1491 = vld [vmem:[%s1267 + $0xb8] sm:$0xf]
      %v1492 = vld [vmem:[%s1267 + $0xbc] sm:$0x1]
      %v1494 = vshrl.u32 %v1445, 16
      %v1496 = vrot.slane %v1494, 4
      %v1497 = vshll.u32 %v1445, 16
      %v1499 = vrot.slane %v1497, 5
      %v1500 = vor.u32 %v1496, %v1499
      %v1501 = vrot.slane %v1500, 4
      %v1503 = vshll.u32 %v1446, 16
      %v1505 = vrot.slane %v1503, 5
      %v1506 = vsel %vm442, %v1501, %v1505
      %v1507 = vshrl.u32 %v1446, 16
      %v1509 = vrot.slane %v1507, 4
      %v1510 = vor.u32 %v1509, %v1505
      %v1511 = vrot.slane %v1510, 4
      %v1513 = vshll.u32 %v1447, 16
      %v1515 = vrot.slane %v1513, 5
      %v1516 = vsel %vm442, %v1511, %v1515
      %v1518 = vshrl.u32 %v1448, 16
      %v1520 = vrot.slane %v1518, 4
      %v1521 = vshll.u32 %v1448, 16
      %v1523 = vrot.slane %v1521, 5
      %v1524 = vor.u32 %v1520, %v1523
      %v1525 = vrot.slane %v1524, 4
      %v1527 = vshll.u32 %v1449, 16
      %v1529 = vrot.slane %v1527, 5
      %v1530 = vsel %vm442, %v1525, %v1529
      %v1531 = vshrl.u32 %v1449, 16
      %v1533 = vrot.slane %v1531, 4
      %v1534 = vor.u32 %v1533, %v1529
      %v1535 = vrot.slane %v1534, 4
      %v1537 = vshll.u32 %v1450, 16
      %v1539 = vrot.slane %v1537, 5
      %v1540 = vsel %vm442, %v1535, %v1539
      %v1542 = vshrl.u32 %v1451, 16
      %v1544 = vrot.slane %v1542, 4
      %v1545 = vshll.u32 %v1451, 16
      %v1547 = vrot.slane %v1545, 5
      %v1548 = vor.u32 %v1544, %v1547
      %v1549 = vrot.slane %v1548, 4
      %v1551 = vshll.u32 %v1452, 16
      %v1553 = vrot.slane %v1551, 5
      %v1554 = vsel %vm442, %v1549, %v1553
      %v1555 = vshrl.u32 %v1452, 16
      %v1557 = vrot.slane %v1555, 4
      %v1558 = vor.u32 %v1557, %v1553
      %v1559 = vrot.slane %v1558, 4
      %v1561 = vshll.u32 %v1453, 16
      %v1563 = vrot.slane %v1561, 5
      %v1564 = vsel %vm442, %v1559, %v1563
      %v1566 = vshrl.u32 %v1454, 16
      %v1568 = vrot.slane %v1566, 4
      %v1569 = vshll.u32 %v1454, 16
      %v1571 = vrot.slane %v1569, 5
      %v1572 = vor.u32 %v1568, %v1571
      %v1573 = vrot.slane %v1572, 4
      %v1575 = vshll.u32 %v1455, 16
      %v1577 = vrot.slane %v1575, 5
      %v1578 = vsel %vm442, %v1573, %v1577
      %v1579 = vshrl.u32 %v1455, 16
      %v1581 = vrot.slane %v1579, 4
      %v1582 = vor.u32 %v1581, %v1577
      %v1583 = vrot.slane %v1582, 4
      %v1585 = vshll.u32 %v1456, 16
      %v1587 = vrot.slane %v1585, 5
      %v1588 = vsel %vm442, %v1583, %v1587
      %v1590 = vshrl.u32 %v1457, 16
      %v1592 = vrot.slane %v1590, 4
      %v1593 = vshll.u32 %v1457, 16
      %v1595 = vrot.slane %v1593, 5
      %v1596 = vor.u32 %v1592, %v1595
      %v1597 = vrot.slane %v1596, 4
      %v1599 = vshll.u32 %v1458, 16
      %v1601 = vrot.slane %v1599, 5
      %v1602 = vsel %vm442, %v1597, %v1601
      %v1603 = vshrl.u32 %v1458, 16
      %v1605 = vrot.slane %v1603, 4
      %v1606 = vor.u32 %v1605, %v1601
      %v1607 = vrot.slane %v1606, 4
      %v1609 = vshll.u32 %v1459, 16
      %v1611 = vrot.slane %v1609, 5
      %v1612 = vsel %vm442, %v1607, %v1611
      %v1614 = vshrl.u32 %v1460, 16
      %v1616 = vrot.slane %v1614, 4
      %v1617 = vshll.u32 %v1460, 16
      %v1619 = vrot.slane %v1617, 5
      %v1620 = vor.u32 %v1616, %v1619
      %v1621 = vrot.slane %v1620, 4
      %v1623 = vshll.u32 %v1461, 16
      %v1625 = vrot.slane %v1623, 5
      %v1626 = vsel %vm442, %v1621, %v1625
      %v1627 = vshrl.u32 %v1461, 16
      %v1629 = vrot.slane %v1627, 4
      %v1630 = vor.u32 %v1629, %v1625
      %v1631 = vrot.slane %v1630, 4
      %v1633 = vshll.u32 %v1462, 16
      %v1635 = vrot.slane %v1633, 5
      %v1636 = vsel %vm442, %v1631, %v1635
      %v1638 = vshrl.u32 %v1463, 16
      %v1640 = vrot.slane %v1638, 4
      %v1641 = vshll.u32 %v1463, 16
      %v1643 = vrot.slane %v1641, 5
      %v1644 = vor.u32 %v1640, %v1643
      %v1645 = vrot.slane %v1644, 4
      %v1647 = vshll.u32 %v1464, 16
      %v1649 = vrot.slane %v1647, 5
      %v1650 = vsel %vm442, %v1645, %v1649
      %v1651 = vshrl.u32 %v1464, 16
      %v1653 = vrot.slane %v1651, 4
      %v1654 = vor.u32 %v1653, %v1649
      %v1655 = vrot.slane %v1654, 4
      %v1657 = vshll.u32 %v1465, 16
      %v1659 = vrot.slane %v1657, 5
      %v1660 = vsel %vm442, %v1655, %v1659
      %v1662 = vshrl.u32 %v1466, 16
      %v1664 = vrot.slane %v1662, 4
      %v1665 = vshll.u32 %v1466, 16
      %v1667 = vrot.slane %v1665, 5
      %v1668 = vor.u32 %v1664, %v1667
      %v1669 = vrot.slane %v1668, 4
      %v1671 = vshll.u32 %v1467, 16
      %v1673 = vrot.slane %v1671, 5
      %v1674 = vsel %vm442, %v1669, %v1673
      %v1675 = vshrl.u32 %v1467, 16
      %v1677 = vrot.slane %v1675, 4
      %v1678 = vor.u32 %v1677, %v1673
      %v1679 = vrot.slane %v1678, 4
      %v1681 = vshll.u32 %v1468, 16
      %v1683 = vrot.slane %v1681, 5
      %v1684 = vsel %vm442, %v1679, %v1683
      %v1686 = vshrl.u32 %v1469, 16
      %v1688 = vrot.slane %v1686, 4
      %v1689 = vshll.u32 %v1469, 16
      %v1691 = vrot.slane %v1689, 5
      %v1692 = vor.u32 %v1688, %v1691
      %v1693 = vrot.slane %v1692, 4
      %v1695 = vshll.u32 %v1470, 16
      %v1697 = vrot.slane %v1695, 5
      %v1698 = vsel %vm442, %v1693, %v1697
      %v1699 = vshrl.u32 %v1470, 16
      %v1701 = vrot.slane %v1699, 4
      %v1702 = vor.u32 %v1701, %v1697
      %v1703 = vrot.slane %v1702, 4
      %v1705 = vshll.u32 %v1471, 16
      %v1707 = vrot.slane %v1705, 5
      %v1708 = vsel %vm442, %v1703, %v1707
      %v1710 = vshrl.u32 %v1472, 16
      %v1712 = vrot.slane %v1710, 4
      %v1713 = vshll.u32 %v1472, 16
      %v1715 = vrot.slane %v1713, 5
      %v1716 = vor.u32 %v1712, %v1715
      %v1717 = vrot.slane %v1716, 4
      %v1719 = vshll.u32 %v1473, 16
      %v1721 = vrot.slane %v1719, 5
      %v1722 = vsel %vm442, %v1717, %v1721
      %v1723 = vshrl.u32 %v1473, 16
      %v1725 = vrot.slane %v1723, 4
      %v1726 = vor.u32 %v1725, %v1721
      %v1727 = vrot.slane %v1726, 4
      %v1729 = vshll.u32 %v1474, 16
      %v1731 = vrot.slane %v1729, 5
      %v1732 = vsel %vm442, %v1727, %v1731
      %v1734 = vshrl.u32 %v1475, 16
      %v1736 = vrot.slane %v1734, 4
      %v1737 = vshll.u32 %v1475, 16
      %v1739 = vrot.slane %v1737, 5
      %v1740 = vor.u32 %v1736, %v1739
      %v1741 = vrot.slane %v1740, 4
      %v1743 = vshll.u32 %v1476, 16
      %v1745 = vrot.slane %v1743, 5
      %v1746 = vsel %vm442, %v1741, %v1745
      %v1747 = vshrl.u32 %v1476, 16
      %v1749 = vrot.slane %v1747, 4
      %v1750 = vor.u32 %v1749, %v1745
      %v1751 = vrot.slane %v1750, 4
      %v1753 = vshll.u32 %v1477, 16
      %v1755 = vrot.slane %v1753, 5
      %v1756 = vsel %vm442, %v1751, %v1755
      %v1758 = vshrl.u32 %v1478, 16
      %v1760 = vrot.slane %v1758, 4
      %v1761 = vshll.u32 %v1478, 16
      %v1763 = vrot.slane %v1761, 5
      %v1764 = vor.u32 %v1760, %v1763
      %v1765 = vrot.slane %v1764, 4
      %v1767 = vshll.u32 %v1479, 16
      %v1769 = vrot.slane %v1767, 5
      %v1770 = vsel %vm442, %v1765, %v1769
      %v1771 = vshrl.u32 %v1479, 16
      %v1773 = vrot.slane %v1771, 4
      %v1774 = vor.u32 %v1773, %v1769
      %v1775 = vrot.slane %v1774, 4
      %v1777 = vshll.u32 %v1480, 16
      %v1779 = vrot.slane %v1777, 5
      %v1780 = vsel %vm442, %v1775, %v1779
      %v1782 = vshrl.u32 %v1481, 16
      %v1784 = vrot.slane %v1782, 4
      %v1785 = vshll.u32 %v1481, 16
      %v1787 = vrot.slane %v1785, 5
      %v1788 = vor.u32 %v1784, %v1787
      %v1789 = vrot.slane %v1788, 4
      %v1791 = vshll.u32 %v1482, 16
      %v1793 = vrot.slane %v1791, 5
      %v1794 = vsel %vm442, %v1789, %v1793
      %v1795 = vshrl.u32 %v1482, 16
      %v1797 = vrot.slane %v1795, 4
      %v1798 = vor.u32 %v1797, %v1793
      %v1799 = vrot.slane %v1798, 4
      %v1801 = vshll.u32 %v1483, 16
      %v1803 = vrot.slane %v1801, 5
      %v1804 = vsel %vm442, %v1799, %v1803
      %v1806 = vshrl.u32 %v1484, 16
      %v1808 = vrot.slane %v1806, 4
      %v1809 = vshll.u32 %v1484, 16
      %v1811 = vrot.slane %v1809, 5
      %v1812 = vor.u32 %v1808, %v1811
      %v1813 = vrot.slane %v1812, 4
      %v1815 = vshll.u32 %v1485, 16
      %v1817 = vrot.slane %v1815, 5
      %v1818 = vsel %vm442, %v1813, %v1817
      %v1819 = vshrl.u32 %v1485, 16
      %v1821 = vrot.slane %v1819, 4
      %v1822 = vor.u32 %v1821, %v1817
      %v1823 = vrot.slane %v1822, 4
      %v1825 = vshll.u32 %v1486, 16
      %v1827 = vrot.slane %v1825, 5
      %v1828 = vsel %vm442, %v1823, %v1827
      %v1830 = vshrl.u32 %v1487, 16
      %v1832 = vrot.slane %v1830, 4
      %v1833 = vshll.u32 %v1487, 16
      %v1835 = vrot.slane %v1833, 5
      %v1836 = vor.u32 %v1832, %v1835
      %v1837 = vrot.slane %v1836, 4
      %v1839 = vshll.u32 %v1488, 16
      %v1841 = vrot.slane %v1839, 5
      %v1842 = vsel %vm442, %v1837, %v1841
      %v1843 = vshrl.u32 %v1488, 16
      %v1845 = vrot.slane %v1843, 4
      %v1846 = vor.u32 %v1845, %v1841
      %v1847 = vrot.slane %v1846, 4
      %v1849 = vshll.u32 %v1489, 16
      %v1851 = vrot.slane %v1849, 5
      %v1852 = vsel %vm442, %v1847, %v1851
      %v1854 = vshrl.u32 %v1490, 16
      %v1856 = vrot.slane %v1854, 4
      %v1857 = vshll.u32 %v1490, 16
      %v1859 = vrot.slane %v1857, 5
      %v1860 = vor.u32 %v1856, %v1859
      %v1861 = vrot.slane %v1860, 4
      %v1863 = vshll.u32 %v1491, 16
      %v1865 = vrot.slane %v1863, 5
      %v1866 = vsel %vm442, %v1861, %v1865
      %v1867 = vshrl.u32 %v1491, 16
      %v1869 = vrot.slane %v1867, 4
      %v1870 = vor.u32 %v1869, %v1865
      %v1871 = vrot.slane %v1870, 4
      %v1873 = vshll.u32 %v1492, 16
      %v1875 = vrot.slane %v1873, 5
      %v1876 = vsel %vm442, %v1871, %v1875
      %v1877 = vunpack.c.l.b16 %v1506
      %v1878 = vunpack.c.l.b16 %v1516
      %v1879 = vunpack.c.l.b16 %v1530
      %v1880 = vunpack.c.l.b16 %v1540
      %v1881 = vunpack.c.l.b16 %v1554
      %v1882 = vunpack.c.l.b16 %v1564
      %v1883 = vunpack.c.l.b16 %v1578
      %v1884 = vunpack.c.l.b16 %v1588
      %v1885 = vunpack.c.l.b16 %v1602
      %v1886 = vunpack.c.l.b16 %v1612
      %v1887 = vunpack.c.l.b16 %v1626
      %v1888 = vunpack.c.l.b16 %v1636
      %v1889 = vunpack.c.l.b16 %v1650
      %v1890 = vunpack.c.l.b16 %v1660
      %v1891 = vunpack.c.l.b16 %v1674
      %v1892 = vunpack.c.l.b16 %v1684
      %v1893 = vunpack.c.l.b16 %v1698
      %v1894 = vunpack.c.l.b16 %v1708
      %v1895 = vunpack.c.l.b16 %v1722
      %v1896 = vunpack.c.l.b16 %v1732
      %v1897 = vunpack.c.l.b16 %v1746
      %v1898 = vunpack.c.l.b16 %v1756
      %v1899 = vunpack.c.l.b16 %v1770
      %v1900 = vunpack.c.l.b16 %v1780
      %v1901 = vunpack.c.l.b16 %v1794
      %v1902 = vunpack.c.l.b16 %v1804
      %v1903 = vunpack.c.l.b16 %v1818
      %v1904 = vunpack.c.l.b16 %v1828
      %v1905 = vunpack.c.l.b16 %v1842
      %v1906 = vunpack.c.l.b16 %v1852
      %v1907 = vunpack.c.l.b16 %v1866
      %v1908 = vunpack.c.l.b16 %v1876
      %v1909 = vpack.c.b16 %v1878, %v1877
      %v1910 = vpack.c.b16 %v1880, %v1879
      %v1911 = vpack.c.b16 %v1882, %v1881
      %v1912 = vpack.c.b16 %v1884, %v1883
      %v1913 = vpack.c.b16 %v1886, %v1885
      %v1914 = vpack.c.b16 %v1888, %v1887
      %v1915 = vpack.c.b16 %v1890, %v1889
      %v1916 = vpack.c.b16 %v1892, %v1891
      %v1917 = vpack.c.b16 %v1894, %v1893
      %v1918 = vpack.c.b16 %v1896, %v1895
      %v1919 = vpack.c.b16 %v1898, %v1897
      %v1920 = vpack.c.b16 %v1900, %v1899
      %v1921 = vpack.c.b16 %v1902, %v1901
      %v1922 = vpack.c.b16 %v1904, %v1903
      %v1923 = vpack.c.b16 %v1906, %v1905
      %v1924 = vpack.c.b16 %v1908, %v1907
      %1925 = vrot.lane.b32.xlu0 %v1909, 16
      %v1926 = vpop.permute.xlu0 %1925
      %1927 = vrot.lane.b32.xlu0 %v1910, 16
      %v1928 = vpop.permute.xlu0 %1927
      %1929 = vrot.lane.b32.xlu0 %v1911, 16
      %v1930 = vpop.permute.xlu0 %1929
      %1931 = vrot.lane.b32.xlu0 %v1912, 16
      %v1932 = vpop.permute.xlu0 %1931
      %1933 = vrot.lane.b32.xlu0 %v1913, 16
      %v1934 = vpop.permute.xlu0 %1933
      %1935 = vrot.lane.b32.xlu0 %v1914, 16
      %v1936 = vpop.permute.xlu0 %1935
      %1937 = vrot.lane.b32.xlu0 %v1915, 16
      %v1938 = vpop.permute.xlu0 %1937
      %1939 = vrot.lane.b32.xlu0 %v1916, 16
      %v1940 = vpop.permute.xlu0 %1939
      %1941 = vrot.lane.b32.xlu0 %v1917, 16
      %v1942 = vpop.permute.xlu0 %1941
      %1943 = vrot.lane.b32.xlu0 %v1918, 16
      %v1944 = vpop.permute.xlu0 %1943
      %1945 = vrot.lane.b32.xlu0 %v1919, 16
      %v1946 = vpop.permute.xlu0 %1945
      %1947 = vrot.lane.b32.xlu0 %v1920, 16
      %v1948 = vpop.permute.xlu0 %1947
      %1949 = vrot.lane.b32.xlu0 %v1921, 16
      %v1950 = vpop.permute.xlu0 %1949
      %1951 = vrot.lane.b32.xlu0 %v1922, 16
      %v1952 = vpop.permute.xlu0 %1951
      %1953 = vrot.lane.b32.xlu0 %v1923, 16
      %v1954 = vpop.permute.xlu0 %1953
      %1955 = vrot.lane.b32.xlu0 %v1924, 16
      %v1956 = vpop.permute.xlu0 %1955
      %vm1973 = vcmask 162944
      %1974 = vst.msk [vmem:[#allocation2] sm:$0xff] %vm1973, %v1926
      %1975 = vst.msk [vmem:[#allocation2 + $0x8] sm:$0xff] %vm1973, %v1928
      %1976 = vst.msk [vmem:[#allocation2 + $0x10] sm:$0xff] %vm1973, %v1930
      %1977 = vst.msk [vmem:[#allocation2 + $0x18] sm:$0xff] %vm1973, %v1932
      %1978 = vst.msk [vmem:[#allocation2 + $0x20] sm:$0xff] %vm1973, %v1934
      %1979 = vst.msk [vmem:[#allocation2 + $0x28] sm:$0xff] %vm1973, %v1936
      %1980 = vst.msk [vmem:[#allocation2 + $0x30] sm:$0xff] %vm1973, %v1938
      %1981 = vst.msk [vmem:[#allocation2 + $0x38] sm:$0xff] %vm1973, %v1940
      %1982 = vst.msk [vmem:[#allocation2 + $0x40] sm:$0xff] %vm1973, %v1942
      %1983 = vst.msk [vmem:[#allocation2 + $0x48] sm:$0xff] %vm1973, %v1944
      %1984 = vst.msk [vmem:[#allocation2 + $0x50] sm:$0xff] %vm1973, %v1946
      %1985 = vst.msk [vmem:[#allocation2 + $0x58] sm:$0xff] %vm1973, %v1948
      %1986 = vst.msk [vmem:[#allocation2 + $0x60] sm:$0xff] %vm1973, %v1950
      %1987 = vst.msk [vmem:[#allocation2 + $0x68] sm:$0xff] %vm1973, %v1952
      %1988 = vst.msk [vmem:[#allocation2 + $0x70] sm:$0xff] %vm1973, %v1954
      %1989 = vst.msk [vmem:[#allocation2 + $0x78] sm:$0xff] %vm1973, %v1956
      %v1990 = vld [vmem:[%s1267] sm:$0xe]
      %v1991 = vld [vmem:[%s1267 + $0x4] sm:$0xf]
      %v1992 = vld [vmem:[%s1267 + $0x8] sm:$0x1]
      %v1993 = vld [vmem:[%s1267 + $0xc] sm:$0xe]
      %v1994 = vld [vmem:[%s1267 + $0x10] sm:$0xf]
      %v1995 = vld [vmem:[%s1267 + $0x14] sm:$0x1]
      %v1996 = vld [vmem:[%s1267 + $0x18] sm:$0xe]
      %v1997 = vld [vmem:[%s1267 + $0x1c] sm:$0xf]
      %v1998 = vld [vmem:[%s1267 + $0x20] sm:$0x1]
      %v1999 = vld [vmem:[%s1267 + $0x24] sm:$0xe]
      %v2000 = vld [vmem:[%s1267 + $0x28] sm:$0xf]
      %v2001 = vld [vmem:[%s1267 + $0x2c] sm:$0x1]
      %v2002 = vld [vmem:[%s1267 + $0x30] sm:$0xe]
      %v2003 = vld [vmem:[%s1267 + $0x34] sm:$0xf]
      %v2004 = vld [vmem:[%s1267 + $0x38] sm:$0x1]
      %v2005 = vld [vmem:[%s1267 + $0x3c] sm:$0xe]
      %v2006 = vld [vmem:[%s1267 + $0x40] sm:$0xf]
      %v2007 = vld [vmem:[%s1267 + $0x44] sm:$0x1]
      %v2008 = vld [vmem:[%s1267 + $0x48] sm:$0xe]
      %v2009 = vld [vmem:[%s1267 + $0x4c] sm:$0xf]
      %v2010 = vld [vmem:[%s1267 + $0x50] sm:$0x1]
      %v2011 = vld [vmem:[%s1267 + $0x54] sm:$0xe]
      %v2012 = vld [vmem:[%s1267 + $0x58] sm:$0xf]
      %v2013 = vld [vmem:[%s1267 + $0x5c] sm:$0x1]
      %v2014 = vld [vmem:[%s1267 + $0x60] sm:$0xe]
      %v2015 = vld [vmem:[%s1267 + $0x64] sm:$0xf]
      %v2016 = vld [vmem:[%s1267 + $0x68] sm:$0x1]
      %v2017 = vld [vmem:[%s1267 + $0x6c] sm:$0xe]
      %v2018 = vld [vmem:[%s1267 + $0x70] sm:$0xf]
      %v2019 = vld [vmem:[%s1267 + $0x74] sm:$0x1]
      %v2020 = vld [vmem:[%s1267 + $0x78] sm:$0xe]
      %v2021 = vld [vmem:[%s1267 + $0x7c] sm:$0xf]
      %v2022 = vld [vmem:[%s1267 + $0x80] sm:$0x1]
      %v2023 = vld [vmem:[%s1267 + $0x84] sm:$0xe]
      %v2024 = vld [vmem:[%s1267 + $0x88] sm:$0xf]
      %v2025 = vld [vmem:[%s1267 + $0x8c] sm:$0x1]
      %v2026 = vld [vmem:[%s1267 + $0x90] sm:$0xe]
      %v2027 = vld [vmem:[%s1267 + $0x94] sm:$0xf]
      %v2028 = vld [vmem:[%s1267 + $0x98] sm:$0x1]
      %v2029 = vld [vmem:[%s1267 + $0x9c] sm:$0xe]
      %v2030 = vld [vmem:[%s1267 + $0xa0] sm:$0xf]
      %v2031 = vld [vmem:[%s1267 + $0xa4] sm:$0x1]
      %v2032 = vld [vmem:[%s1267 + $0xa8] sm:$0xe]
      %v2033 = vld [vmem:[%s1267 + $0xac] sm:$0xf]
      %v2034 = vld [vmem:[%s1267 + $0xb0] sm:$0x1]
      %v2035 = vld [vmem:[%s1267 + $0xb4] sm:$0xe]
      %v2036 = vld [vmem:[%s1267 + $0xb8] sm:$0xf]
      %v2037 = vld [vmem:[%s1267 + $0xbc] sm:$0x1]
      %v2086 = vrot.slane %v1990, 5
      %v2087 = vrot.slane %v2086, 4
      %v2088 = vrot.slane %v1991, 5
      %v2089 = vsel %vm1038, %v2087, %v2088
      %v2090 = vrot.slane %v2088, 4
      %v2091 = vrot.slane %v1992, 5
      %v2092 = vsel %vm1038, %v2090, %v2091
      %v2093 = vrot.slane %v1993, 5
      %v2094 = vrot.slane %v2093, 4
      %v2095 = vrot.slane %v1994, 5
      %v2096 = vsel %vm1038, %v2094, %v2095
      %v2097 = vrot.slane %v2095, 4
      %v2098 = vrot.slane %v1995, 5
      %v2099 = vsel %vm1038, %v2097, %v2098
      %v2100 = vrot.slane %v1996, 5
      %v2101 = vrot.slane %v2100, 4
      %v2102 = vrot.slane %v1997, 5
      %v2103 = vsel %vm1038, %v2101, %v2102
      %v2104 = vrot.slane %v2102, 4
      %v2105 = vrot.slane %v1998, 5
      %v2106 = vsel %vm1038, %v2104, %v2105
      %v2107 = vrot.slane %v1999, 5
      %v2108 = vrot.slane %v2107, 4
      %v2109 = vrot.slane %v2000, 5
      %v2110 = vsel %vm1038, %v2108, %v2109
      %v2111 = vrot.slane %v2109, 4
      %v2112 = vrot.slane %v2001, 5
      %v2113 = vsel %vm1038, %v2111, %v2112
      %v2114 = vrot.slane %v2002, 5
      %v2115 = vrot.slane %v2114, 4
      %v2116 = vrot.slane %v2003, 5
      %v2117 = vsel %vm1038, %v2115, %v2116
      %v2118 = vrot.slane %v2116, 4
      %v2119 = vrot.slane %v2004, 5
      %v2120 = vsel %vm1038, %v2118, %v2119
      %v2121 = vrot.slane %v2005, 5
      %v2122 = vrot.slane %v2121, 4
      %v2123 = vrot.slane %v2006, 5
      %v2124 = vsel %vm1038, %v2122, %v2123
      %v2125 = vrot.slane %v2123, 4
      %v2126 = vrot.slane %v2007, 5
      %v2127 = vsel %vm1038, %v2125, %v2126
      %v2128 = vrot.slane %v2008, 5
      %v2129 = vrot.slane %v2128, 4
      %v2130 = vrot.slane %v2009, 5
      %v2131 = vsel %vm1038, %v2129, %v2130
      %v2132 = vrot.slane %v2130, 4
      %v2133 = vrot.slane %v2010, 5
      %v2134 = vsel %vm1038, %v2132, %v2133
      %v2135 = vrot.slane %v2011, 5
      %v2136 = vrot.slane %v2135, 4
      %v2137 = vrot.slane %v2012, 5
      %v2138 = vsel %vm1038, %v2136, %v2137
      %v2139 = vrot.slane %v2137, 4
      %v2140 = vrot.slane %v2013, 5
      %v2141 = vsel %vm1038, %v2139, %v2140
      %v2142 = vrot.slane %v2014, 5
      %v2143 = vrot.slane %v2142, 4
      %v2144 = vrot.slane %v2015, 5
      %v2145 = vsel %vm1038, %v2143, %v2144
      %v2146 = vrot.slane %v2144, 4
      %v2147 = vrot.slane %v2016, 5
      %v2148 = vsel %vm1038, %v2146, %v2147
      %v2149 = vrot.slane %v2017, 5
      %v2150 = vrot.slane %v2149, 4
      %v2151 = vrot.slane %v2018, 5
      %v2152 = vsel %vm1038, %v2150, %v2151
      %v2153 = vrot.slane %v2151, 4
      %v2154 = vrot.slane %v2019, 5
      %v2155 = vsel %vm1038, %v2153, %v2154
      %v2156 = vrot.slane %v2020, 5
      %v2157 = vrot.slane %v2156, 4
      %v2158 = vrot.slane %v2021, 5
      %v2159 = vsel %vm1038, %v2157, %v2158
      %v2160 = vrot.slane %v2158, 4
      %v2161 = vrot.slane %v2022, 5
      %v2162 = vsel %vm1038, %v2160, %v2161
      %v2163 = vrot.slane %v2023, 5
      %v2164 = vrot.slane %v2163, 4
      %v2165 = vrot.slane %v2024, 5
      %v2166 = vsel %vm1038, %v2164, %v2165
      %v2167 = vrot.slane %v2165, 4
      %v2168 = vrot.slane %v2025, 5
      %v2169 = vsel %vm1038, %v2167, %v2168
      %v2170 = vrot.slane %v2026, 5
      %v2171 = vrot.slane %v2170, 4
      %v2172 = vrot.slane %v2027, 5
      %v2173 = vsel %vm1038, %v2171, %v2172
      %v2174 = vrot.slane %v2172, 4
      %v2175 = vrot.slane %v2028, 5
      %v2176 = vsel %vm1038, %v2174, %v2175
      %v2177 = vrot.slane %v2029, 5
      %v2178 = vrot.slane %v2177, 4
      %v2179 = vrot.slane %v2030, 5
      %v2180 = vsel %vm1038, %v2178, %v2179
      %v2181 = vrot.slane %v2179, 4
      %v2182 = vrot.slane %v2031, 5
      %v2183 = vsel %vm1038, %v2181, %v2182
      %v2184 = vrot.slane %v2032, 5
      %v2185 = vrot.slane %v2184, 4
      %v2186 = vrot.slane %v2033, 5
      %v2187 = vsel %vm1038, %v2185, %v2186
      %v2188 = vrot.slane %v2186, 4
      %v2189 = vrot.slane %v2034, 5
      %v2190 = vsel %vm1038, %v2188, %v2189
      %v2191 = vrot.slane %v2035, 5
      %v2192 = vrot.slane %v2191, 4
      %v2193 = vrot.slane %v2036, 5
      %v2194 = vsel %vm1038, %v2192, %v2193
      %v2195 = vrot.slane %v2193, 4
      %v2196 = vrot.slane %v2037, 5
      %v2197 = vsel %vm1038, %v2195, %v2196
      %v2198 = vunpack.c.l.b16 %v2089
      %v2199 = vunpack.c.l.b16 %v2092
      %v2200 = vunpack.c.l.b16 %v2096
      %v2201 = vunpack.c.l.b16 %v2099
      %v2202 = vunpack.c.l.b16 %v2103
      %v2203 = vunpack.c.l.b16 %v2106
      %v2204 = vunpack.c.l.b16 %v2110
      %v2205 = vunpack.c.l.b16 %v2113
      %v2206 = vunpack.c.l.b16 %v2117
      %v2207 = vunpack.c.l.b16 %v2120
      %v2208 = vunpack.c.l.b16 %v2124
      %v2209 = vunpack.c.l.b16 %v2127
      %v2210 = vunpack.c.l.b16 %v2131
      %v2211 = vunpack.c.l.b16 %v2134
      %v2212 = vunpack.c.l.b16 %v2138
      %v2213 = vunpack.c.l.b16 %v2141
      %v2214 = vunpack.c.l.b16 %v2145
      %v2215 = vunpack.c.l.b16 %v2148
      %v2216 = vunpack.c.l.b16 %v2152
      %v2217 = vunpack.c.l.b16 %v2155
      %v2218 = vunpack.c.l.b16 %v2159
      %v2219 = vunpack.c.l.b16 %v2162
      %v2220 = vunpack.c.l.b16 %v2166
      %v2221 = vunpack.c.l.b16 %v2169
      %v2222 = vunpack.c.l.b16 %v2173
      %v2223 = vunpack.c.l.b16 %v2176
      %v2224 = vunpack.c.l.b16 %v2180
      %v2225 = vunpack.c.l.b16 %v2183
      %v2226 = vunpack.c.l.b16 %v2187
      %v2227 = vunpack.c.l.b16 %v2190
      %v2228 = vunpack.c.l.b16 %v2194
      %v2229 = vunpack.c.l.b16 %v2197
      %v2230 = vpack.c.b16 %v2199, %v2198
      %v2231 = vpack.c.b16 %v2201, %v2200
      %v2232 = vpack.c.b16 %v2203, %v2202
      %v2233 = vpack.c.b16 %v2205, %v2204
      %v2234 = vpack.c.b16 %v2207, %v2206
      %v2235 = vpack.c.b16 %v2209, %v2208
      %v2236 = vpack.c.b16 %v2211, %v2210
      %v2237 = vpack.c.b16 %v2213, %v2212
      %v2238 = vpack.c.b16 %v2215, %v2214
      %v2239 = vpack.c.b16 %v2217, %v2216
      %v2240 = vpack.c.b16 %v2219, %v2218
      %v2241 = vpack.c.b16 %v2221, %v2220
      %v2242 = vpack.c.b16 %v2223, %v2222
      %v2243 = vpack.c.b16 %v2225, %v2224
      %v2244 = vpack.c.b16 %v2227, %v2226
      %v2245 = vpack.c.b16 %v2229, %v2228
      %2246 = vrot.lane.b32.xlu0 %v2230, 20
      %v2247 = vpop.permute.xlu0 %2246
      %2248 = vrot.lane.b32.xlu0 %v2231, 20
      %v2249 = vpop.permute.xlu0 %2248
      %2250 = vrot.lane.b32.xlu0 %v2232, 20
      %v2251 = vpop.permute.xlu0 %2250
      %2252 = vrot.lane.b32.xlu0 %v2233, 20
      %v2253 = vpop.permute.xlu0 %2252
      %2254 = vrot.lane.b32.xlu0 %v2234, 20
      %v2255 = vpop.permute.xlu0 %2254
      %2256 = vrot.lane.b32.xlu0 %v2235, 20
      %v2257 = vpop.permute.xlu0 %2256
      %2258 = vrot.lane.b32.xlu0 %v2236, 20
      %v2259 = vpop.permute.xlu0 %2258
      %2260 = vrot.lane.b32.xlu0 %v2237, 20
      %v2261 = vpop.permute.xlu0 %2260
      %2262 = vrot.lane.b32.xlu0 %v2238, 20
      %v2263 = vpop.permute.xlu0 %2262
      %2264 = vrot.lane.b32.xlu0 %v2239, 20
      %v2265 = vpop.permute.xlu0 %2264
      %2266 = vrot.lane.b32.xlu0 %v2240, 20
      %v2267 = vpop.permute.xlu0 %2266
      %2268 = vrot.lane.b32.xlu0 %v2241, 20
      %v2269 = vpop.permute.xlu0 %2268
      %2270 = vrot.lane.b32.xlu0 %v2242, 20
      %v2271 = vpop.permute.xlu0 %2270
      %2272 = vrot.lane.b32.xlu0 %v2243, 20
      %v2273 = vpop.permute.xlu0 %2272
      %2274 = vrot.lane.b32.xlu0 %v2244, 20
      %v2275 = vpop.permute.xlu0 %2274
      %2276 = vrot.lane.b32.xlu0 %v2245, 20
      %v2277 = vpop.permute.xlu0 %2276
      %vm2294 = vcmask 195744
      %2295 = vst.msk [vmem:[#allocation2] sm:$0xff] %vm2294, %v2247
      %2296 = vst.msk [vmem:[#allocation2 + $0x8] sm:$0xff] %vm2294, %v2249
      %2297 = vst.msk [vmem:[#allocation2 + $0x10] sm:$0xff] %vm2294, %v2251
      %2298 = vst.msk [vmem:[#allocation2 + $0x18] sm:$0xff] %vm2294, %v2253
      %2299 = vst.msk [vmem:[#allocation2 + $0x20] sm:$0xff] %vm2294, %v2255
      %2300 = vst.msk [vmem:[#allocation2 + $0x28] sm:$0xff] %vm2294, %v2257
      %2301 = vst.msk [vmem:[#allocation2 + $0x30] sm:$0xff] %vm2294, %v2259
      %2302 = vst.msk [vmem:[#allocation2 + $0x38] sm:$0xff] %vm2294, %v2261
      %2303 = vst.msk [vmem:[#allocation2 + $0x40] sm:$0xff] %vm2294, %v2263
      %2304 = vst.msk [vmem:[#allocation2 + $0x48] sm:$0xff] %vm2294, %v2265
      %2305 = vst.msk [vmem:[#allocation2 + $0x50] sm:$0xff] %vm2294, %v2267
      %2306 = vst.msk [vmem:[#allocation2 + $0x58] sm:$0xff] %vm2294, %v2269
      %2307 = vst.msk [vmem:[#allocation2 + $0x60] sm:$0xff] %vm2294, %v2271
      %2308 = vst.msk [vmem:[#allocation2 + $0x68] sm:$0xff] %vm2294, %v2273
      %2309 = vst.msk [vmem:[#allocation2 + $0x70] sm:$0xff] %vm2294, %v2275
      %2310 = vst.msk [vmem:[#allocation2 + $0x78] sm:$0xff] %vm2294, %v2277
      %s2311 = sadd.s32 %s243, 2
      %s2312 = smul.u32 %s2311, 3
      %s2313 = smul.addr %s2312, 4
      %s2314 = scalar_lea.vmem %s220, %s2313
      %v2315 = vld [vmem:[%s2314] sm:$0xf]
      %v2316 = vld [vmem:[%s2314 + $0x4] sm:$0xf]
      %v2317 = vld [vmem:[%s2314 + $0xc] sm:$0xf]
      %v2318 = vld [vmem:[%s2314 + $0x10] sm:$0xf]
      %v2319 = vld [vmem:[%s2314 + $0x18] sm:$0xf]
      %v2320 = vld [vmem:[%s2314 + $0x1c] sm:$0xf]
      %v2321 = vld [vmem:[%s2314 + $0x24] sm:$0xf]
      %v2322 = vld [vmem:[%s2314 + $0x28] sm:$0xf]
      %v2323 = vld [vmem:[%s2314 + $0x30] sm:$0xf]
      %v2324 = vld [vmem:[%s2314 + $0x34] sm:$0xf]
      %v2325 = vld [vmem:[%s2314 + $0x3c] sm:$0xf]
      %v2326 = vld [vmem:[%s2314 + $0x40] sm:$0xf]
      %v2327 = vld [vmem:[%s2314 + $0x48] sm:$0xf]
      %v2328 = vld [vmem:[%s2314 + $0x4c] sm:$0xf]
      %v2329 = vld [vmem:[%s2314 + $0x54] sm:$0xf]
      %v2330 = vld [vmem:[%s2314 + $0x58] sm:$0xf]
      %v2331 = vld [vmem:[%s2314 + $0x60] sm:$0xf]
      %v2332 = vld [vmem:[%s2314 + $0x64] sm:$0xf]
      %v2333 = vld [vmem:[%s2314 + $0x6c] sm:$0xf]
      %v2334 = vld [vmem:[%s2314 + $0x70] sm:$0xf]
      %v2335 = vld [vmem:[%s2314 + $0x78] sm:$0xf]
      %v2336 = vld [vmem:[%s2314 + $0x7c] sm:$0xf]
      %v2337 = vld [vmem:[%s2314 + $0x84] sm:$0xf]
      %v2338 = vld [vmem:[%s2314 + $0x88] sm:$0xf]
      %v2339 = vld [vmem:[%s2314 + $0x90] sm:$0xf]
      %v2340 = vld [vmem:[%s2314 + $0x94] sm:$0xf]
      %v2341 = vld [vmem:[%s2314 + $0x9c] sm:$0xf]
      %v2342 = vld [vmem:[%s2314 + $0xa0] sm:$0xf]
      %v2343 = vld [vmem:[%s2314 + $0xa8] sm:$0xf]
      %v2344 = vld [vmem:[%s2314 + $0xac] sm:$0xf]
      %v2345 = vld [vmem:[%s2314 + $0xb4] sm:$0xf]
      %v2346 = vld [vmem:[%s2314 + $0xb8] sm:$0xf]
      %v2379 = vunpack.c.l.b16 %v2315
      %v2380 = vunpack.c.l.b16 %v2316
      %v2381 = vunpack.c.l.b16 %v2317
      %v2382 = vunpack.c.l.b16 %v2318
      %v2383 = vunpack.c.l.b16 %v2319
      %v2384 = vunpack.c.l.b16 %v2320
      %v2385 = vunpack.c.l.b16 %v2321
      %v2386 = vunpack.c.l.b16 %v2322
      %v2387 = vunpack.c.l.b16 %v2323
      %v2388 = vunpack.c.l.b16 %v2324
      %v2389 = vunpack.c.l.b16 %v2325
      %v2390 = vunpack.c.l.b16 %v2326
      %v2391 = vunpack.c.l.b16 %v2327
      %v2392 = vunpack.c.l.b16 %v2328
      %v2393 = vunpack.c.l.b16 %v2329
      %v2394 = vunpack.c.l.b16 %v2330
      %v2395 = vunpack.c.l.b16 %v2331
      %v2396 = vunpack.c.l.b16 %v2332
      %v2397 = vunpack.c.l.b16 %v2333
      %v2398 = vunpack.c.l.b16 %v2334
      %v2399 = vunpack.c.l.b16 %v2335
      %v2400 = vunpack.c.l.b16 %v2336
      %v2401 = vunpack.c.l.b16 %v2337
      %v2402 = vunpack.c.l.b16 %v2338
      %v2403 = vunpack.c.l.b16 %v2339
      %v2404 = vunpack.c.l.b16 %v2340
      %v2405 = vunpack.c.l.b16 %v2341
      %v2406 = vunpack.c.l.b16 %v2342
      %v2407 = vunpack.c.l.b16 %v2343
      %v2408 = vunpack.c.l.b16 %v2344
      %v2409 = vunpack.c.l.b16 %v2345
      %v2410 = vunpack.c.l.b16 %v2346
      %v2411 = vpack.c.b16 %v2380, %v2379
      %v2412 = vpack.c.b16 %v2382, %v2381
      %v2413 = vpack.c.b16 %v2384, %v2383
      %v2414 = vpack.c.b16 %v2386, %v2385
      %v2415 = vpack.c.b16 %v2388, %v2387
      %v2416 = vpack.c.b16 %v2390, %v2389
      %v2417 = vpack.c.b16 %v2392, %v2391
      %v2418 = vpack.c.b16 %v2394, %v2393
      %v2419 = vpack.c.b16 %v2396, %v2395
      %v2420 = vpack.c.b16 %v2398, %v2397
      %v2421 = vpack.c.b16 %v2400, %v2399
      %v2422 = vpack.c.b16 %v2402, %v2401
      %v2423 = vpack.c.b16 %v2404, %v2403
      %v2424 = vpack.c.b16 %v2406, %v2405
      %v2425 = vpack.c.b16 %v2408, %v2407
      %v2426 = vpack.c.b16 %v2410, %v2409
      %2427 = vrot.lane.b32.xlu0 %v2411, 24
      %v2428 = vpop.permute.xlu0 %2427
      %2429 = vrot.lane.b32.xlu0 %v2412, 24
      %v2430 = vpop.permute.xlu0 %2429
      %2431 = vrot.lane.b32.xlu0 %v2413, 24
      %v2432 = vpop.permute.xlu0 %2431
      %2433 = vrot.lane.b32.xlu0 %v2414, 24
      %v2434 = vpop.permute.xlu0 %2433
      %2435 = vrot.lane.b32.xlu0 %v2415, 24
      %v2436 = vpop.permute.xlu0 %2435
      %2437 = vrot.lane.b32.xlu0 %v2416, 24
      %v2438 = vpop.permute.xlu0 %2437
      %2439 = vrot.lane.b32.xlu0 %v2417, 24
      %v2440 = vpop.permute.xlu0 %2439
      %2441 = vrot.lane.b32.xlu0 %v2418, 24
      %v2442 = vpop.permute.xlu0 %2441
      %2443 = vrot.lane.b32.xlu0 %v2419, 24
      %v2444 = vpop.permute.xlu0 %2443
      %2445 = vrot.lane.b32.xlu0 %v2420, 24
      %v2446 = vpop.permute.xlu0 %2445
      %2447 = vrot.lane.b32.xlu0 %v2421, 24
      %v2448 = vpop.permute.xlu0 %2447
      %2449 = vrot.lane.b32.xlu0 %v2422, 24
      %v2450 = vpop.permute.xlu0 %2449
      %2451 = vrot.lane.b32.xlu0 %v2423, 24
      %v2452 = vpop.permute.xlu0 %2451
      %2453 = vrot.lane.b32.xlu0 %v2424, 24
      %v2454 = vpop.permute.xlu0 %2453
      %2455 = vrot.lane.b32.xlu0 %v2425, 24
      %v2456 = vpop.permute.xlu0 %2455
      %2457 = vrot.lane.b32.xlu0 %v2426, 24
      %v2458 = vpop.permute.xlu0 %2457
      %vm2475 = vcmask 228544
      %2476 = vst.msk [vmem:[#allocation2] sm:$0xff] %vm2475, %v2428
      %2477 = vst.msk [vmem:[#allocation2 + $0x8] sm:$0xff] %vm2475, %v2430
      %2478 = vst.msk [vmem:[#allocation2 + $0x10] sm:$0xff] %vm2475, %v2432
      %2479 = vst.msk [vmem:[#allocation2 + $0x18] sm:$0xff] %vm2475, %v2434
      %2480 = vst.msk [vmem:[#allocation2 + $0x20] sm:$0xff] %vm2475, %v2436
      %2481 = vst.msk [vmem:[#allocation2 + $0x28] sm:$0xff] %vm2475, %v2438
      %2482 = vst.msk [vmem:[#allocation2 + $0x30] sm:$0xff] %vm2475, %v2440
      %2483 = vst.msk [vmem:[#allocation2 + $0x38] sm:$0xff] %vm2475, %v2442
      %2484 = vst.msk [vmem:[#allocation2 + $0x40] sm:$0xff] %vm2475, %v2444
      %2485 = vst.msk [vmem:[#allocation2 + $0x48] sm:$0xff] %vm2475, %v2446
      %2486 = vst.msk [vmem:[#allocation2 + $0x50] sm:$0xff] %vm2475, %v2448
      %2487 = vst.msk [vmem:[#allocation2 + $0x58] sm:$0xff] %vm2475, %v2450
      %2488 = vst.msk [vmem:[#allocation2 + $0x60] sm:$0xff] %vm2475, %v2452
      %2489 = vst.msk [vmem:[#allocation2 + $0x68] sm:$0xff] %vm2475, %v2454
      %2490 = vst.msk [vmem:[#allocation2 + $0x70] sm:$0xff] %vm2475, %v2456
      %2491 = vst.msk [vmem:[#allocation2 + $0x78] sm:$0xff] %vm2475, %v2458
      %v2492 = vld [vmem:[%s2314] sm:$0xf]
      %v2493 = vld [vmem:[%s2314 + $0x4] sm:$0xf]
      %v2494 = vld [vmem:[%s2314 + $0x8] sm:$0x1]
      %v2495 = vld [vmem:[%s2314 + $0xc] sm:$0xf]
      %v2496 = vld [vmem:[%s2314 + $0x10] sm:$0xf]
      %v2497 = vld [vmem:[%s2314 + $0x14] sm:$0x1]
      %v2498 = vld [vmem:[%s2314 + $0x18] sm:$0xf]
      %v2499 = vld [vmem:[%s2314 + $0x1c] sm:$0xf]
      %v2500 = vld [vmem:[%s2314 + $0x20] sm:$0x1]
      %v2501 = vld [vmem:[%s2314 + $0x24] sm:$0xf]
      %v2502 = vld [vmem:[%s2314 + $0x28] sm:$0xf]
      %v2503 = vld [vmem:[%s2314 + $0x2c] sm:$0x1]
      %v2504 = vld [vmem:[%s2314 + $0x30] sm:$0xf]
      %v2505 = vld [vmem:[%s2314 + $0x34] sm:$0xf]
      %v2506 = vld [vmem:[%s2314 + $0x38] sm:$0x1]
      %v2507 = vld [vmem:[%s2314 + $0x3c] sm:$0xf]
      %v2508 = vld [vmem:[%s2314 + $0x40] sm:$0xf]
      %v2509 = vld [vmem:[%s2314 + $0x44] sm:$0x1]
      %v2510 = vld [vmem:[%s2314 + $0x48] sm:$0xf]
      %v2511 = vld [vmem:[%s2314 + $0x4c] sm:$0xf]
      %v2512 = vld [vmem:[%s2314 + $0x50] sm:$0x1]
      %v2513 = vld [vmem:[%s2314 + $0x54] sm:$0xf]
      %v2514 = vld [vmem:[%s2314 + $0x58] sm:$0xf]
      %v2515 = vld [vmem:[%s2314 + $0x5c] sm:$0x1]
      %v2516 = vld [vmem:[%s2314 + $0x60] sm:$0xf]
      %v2517 = vld [vmem:[%s2314 + $0x64] sm:$0xf]
      %v2518 = vld [vmem:[%s2314 + $0x68] sm:$0x1]
      %v2519 = vld [vmem:[%s2314 + $0x6c] sm:$0xf]
      %v2520 = vld [vmem:[%s2314 + $0x70] sm:$0xf]
      %v2521 = vld [vmem:[%s2314 + $0x74] sm:$0x1]
      %v2522 = vld [vmem:[%s2314 + $0x78] sm:$0xf]
      %v2523 = vld [vmem:[%s2314 + $0x7c] sm:$0xf]
      %v2524 = vld [vmem:[%s2314 + $0x80] sm:$0x1]
      %v2525 = vld [vmem:[%s2314 + $0x84] sm:$0xf]
      %v2526 = vld [vmem:[%s2314 + $0x88] sm:$0xf]
      %v2527 = vld [vmem:[%s2314 + $0x8c] sm:$0x1]
      %v2528 = vld [vmem:[%s2314 + $0x90] sm:$0xf]
      %v2529 = vld [vmem:[%s2314 + $0x94] sm:$0xf]
      %v2530 = vld [vmem:[%s2314 + $0x98] sm:$0x1]
      %v2531 = vld [vmem:[%s2314 + $0x9c] sm:$0xf]
      %v2532 = vld [vmem:[%s2314 + $0xa0] sm:$0xf]
      %v2533 = vld [vmem:[%s2314 + $0xa4] sm:$0x1]
      %v2534 = vld [vmem:[%s2314 + $0xa8] sm:$0xf]
      %v2535 = vld [vmem:[%s2314 + $0xac] sm:$0xf]
      %v2536 = vld [vmem:[%s2314 + $0xb0] sm:$0x1]
      %v2537 = vld [vmem:[%s2314 + $0xb4] sm:$0xf]
      %v2538 = vld [vmem:[%s2314 + $0xb8] sm:$0xf]
      %v2539 = vld [vmem:[%s2314 + $0xbc] sm:$0x1]
      %v2541 = vshrl.u32 %v2492, 16
      %v2543 = vrot.slane %v2541, 4
      %v2544 = vshll.u32 %v2492, 16
      %v2546 = vrot.slane %v2544, 5
      %v2547 = vor.u32 %v2543, %v2546
      %v2548 = vrot.slane %v2547, 4
      %v2550 = vshll.u32 %v2493, 16
      %v2552 = vrot.slane %v2550, 5
      %v2553 = vsel %vm442, %v2548, %v2552
      %v2554 = vshrl.u32 %v2493, 16
      %v2556 = vrot.slane %v2554, 4
      %v2557 = vor.u32 %v2556, %v2552
      %v2558 = vrot.slane %v2557, 4
      %v2560 = vshll.u32 %v2494, 16
      %v2562 = vrot.slane %v2560, 5
      %v2563 = vsel %vm442, %v2558, %v2562
      %v2565 = vshrl.u32 %v2495, 16
      %v2567 = vrot.slane %v2565, 4
      %v2568 = vshll.u32 %v2495, 16
      %v2570 = vrot.slane %v2568, 5
      %v2571 = vor.u32 %v2567, %v2570
      %v2572 = vrot.slane %v2571, 4
      %v2574 = vshll.u32 %v2496, 16
      %v2576 = vrot.slane %v2574, 5
      %v2577 = vsel %vm442, %v2572, %v2576
      %v2578 = vshrl.u32 %v2496, 16
      %v2580 = vrot.slane %v2578, 4
      %v2581 = vor.u32 %v2580, %v2576
      %v2582 = vrot.slane %v2581, 4
      %v2584 = vshll.u32 %v2497, 16
      %v2586 = vrot.slane %v2584, 5
      %v2587 = vsel %vm442, %v2582, %v2586
      %v2589 = vshrl.u32 %v2498, 16
      %v2591 = vrot.slane %v2589, 4
      %v2592 = vshll.u32 %v2498, 16
      %v2594 = vrot.slane %v2592, 5
      %v2595 = vor.u32 %v2591, %v2594
      %v2596 = vrot.slane %v2595, 4
      %v2598 = vshll.u32 %v2499, 16
      %v2600 = vrot.slane %v2598, 5
      %v2601 = vsel %vm442, %v2596, %v2600
      %v2602 = vshrl.u32 %v2499, 16
      %v2604 = vrot.slane %v2602, 4
      %v2605 = vor.u32 %v2604, %v2600
      %v2606 = vrot.slane %v2605, 4
      %v2608 = vshll.u32 %v2500, 16
      %v2610 = vrot.slane %v2608, 5
      %v2611 = vsel %vm442, %v2606, %v2610
      %v2613 = vshrl.u32 %v2501, 16
      %v2615 = vrot.slane %v2613, 4
      %v2616 = vshll.u32 %v2501, 16
      %v2618 = vrot.slane %v2616, 5
      %v2619 = vor.u32 %v2615, %v2618
      %v2620 = vrot.slane %v2619, 4
      %v2622 = vshll.u32 %v2502, 16
      %v2624 = vrot.slane %v2622, 5
      %v2625 = vsel %vm442, %v2620, %v2624
      %v2626 = vshrl.u32 %v2502, 16
      %v2628 = vrot.slane %v2626, 4
      %v2629 = vor.u32 %v2628, %v2624
      %v2630 = vrot.slane %v2629, 4
      %v2632 = vshll.u32 %v2503, 16
      %v2634 = vrot.slane %v2632, 5
      %v2635 = vsel %vm442, %v2630, %v2634
      %v2637 = vshrl.u32 %v2504, 16
      %v2639 = vrot.slane %v2637, 4
      %v2640 = vshll.u32 %v2504, 16
      %v2642 = vrot.slane %v2640, 5
      %v2643 = vor.u32 %v2639, %v2642
      %v2644 = vrot.slane %v2643, 4
      %v2646 = vshll.u32 %v2505, 16
      %v2648 = vrot.slane %v2646, 5
      %v2649 = vsel %vm442, %v2644, %v2648
      %v2650 = vshrl.u32 %v2505, 16
      %v2652 = vrot.slane %v2650, 4
      %v2653 = vor.u32 %v2652, %v2648
      %v2654 = vrot.slane %v2653, 4
      %v2656 = vshll.u32 %v2506, 16
      %v2658 = vrot.slane %v2656, 5
      %v2659 = vsel %vm442, %v2654, %v2658
      %v2661 = vshrl.u32 %v2507, 16
      %v2663 = vrot.slane %v2661, 4
      %v2664 = vshll.u32 %v2507, 16
      %v2666 = vrot.slane %v2664, 5
      %v2667 = vor.u32 %v2663, %v2666
      %v2668 = vrot.slane %v2667, 4
      %v2670 = vshll.u32 %v2508, 16
      %v2672 = vrot.slane %v2670, 5
      %v2673 = vsel %vm442, %v2668, %v2672
      %v2674 = vshrl.u32 %v2508, 16
      %v2676 = vrot.slane %v2674, 4
      %v2677 = vor.u32 %v2676, %v2672
      %v2678 = vrot.slane %v2677, 4
      %v2680 = vshll.u32 %v2509, 16
      %v2682 = vrot.slane %v2680, 5
      %v2683 = vsel %vm442, %v2678, %v2682
      %v2685 = vshrl.u32 %v2510, 16
      %v2687 = vrot.slane %v2685, 4
      %v2688 = vshll.u32 %v2510, 16
      %v2690 = vrot.slane %v2688, 5
      %v2691 = vor.u32 %v2687, %v2690
      %v2692 = vrot.slane %v2691, 4
      %v2694 = vshll.u32 %v2511, 16
      %v2696 = vrot.slane %v2694, 5
      %v2697 = vsel %vm442, %v2692, %v2696
      %v2698 = vshrl.u32 %v2511, 16
      %v2700 = vrot.slane %v2698, 4
      %v2701 = vor.u32 %v2700, %v2696
      %v2702 = vrot.slane %v2701, 4
      %v2704 = vshll.u32 %v2512, 16
      %v2706 = vrot.slane %v2704, 5
      %v2707 = vsel %vm442, %v2702, %v2706
      %v2709 = vshrl.u32 %v2513, 16
      %v2711 = vrot.slane %v2709, 4
      %v2712 = vshll.u32 %v2513, 16
      %v2714 = vrot.slane %v2712, 5
      %v2715 = vor.u32 %v2711, %v2714
      %v2716 = vrot.slane %v2715, 4
      %v2718 = vshll.u32 %v2514, 16
      %v2720 = vrot.slane %v2718, 5
      %v2721 = vsel %vm442, %v2716, %v2720
      %v2722 = vshrl.u32 %v2514, 16
      %v2724 = vrot.slane %v2722, 4
      %v2725 = vor.u32 %v2724, %v2720
      %v2726 = vrot.slane %v2725, 4
      %v2728 = vshll.u32 %v2515, 16
      %v2730 = vrot.slane %v2728, 5
      %v2731 = vsel %vm442, %v2726, %v2730
      %v2733 = vshrl.u32 %v2516, 16
      %v2735 = vrot.slane %v2733, 4
      %v2736 = vshll.u32 %v2516, 16
      %v2738 = vrot.slane %v2736, 5
      %v2739 = vor.u32 %v2735, %v2738
      %v2740 = vrot.slane %v2739, 4
      %v2742 = vshll.u32 %v2517, 16
      %v2744 = vrot.slane %v2742, 5
      %v2745 = vsel %vm442, %v2740, %v2744
      %v2746 = vshrl.u32 %v2517, 16
      %v2748 = vrot.slane %v2746, 4
      %v2749 = vor.u32 %v2748, %v2744
      %v2750 = vrot.slane %v2749, 4
      %v2752 = vshll.u32 %v2518, 16
      %v2754 = vrot.slane %v2752, 5
      %v2755 = vsel %vm442, %v2750, %v2754
      %v2757 = vshrl.u32 %v2519, 16
      %v2759 = vrot.slane %v2757, 4
      %v2760 = vshll.u32 %v2519, 16
      %v2762 = vrot.slane %v2760, 5
      %v2763 = vor.u32 %v2759, %v2762
      %v2764 = vrot.slane %v2763, 4
      %v2766 = vshll.u32 %v2520, 16
      %v2768 = vrot.slane %v2766, 5
      %v2769 = vsel %vm442, %v2764, %v2768
      %v2770 = vshrl.u32 %v2520, 16
      %v2772 = vrot.slane %v2770, 4
      %v2773 = vor.u32 %v2772, %v2768
      %v2774 = vrot.slane %v2773, 4
      %v2776 = vshll.u32 %v2521, 16
      %v2778 = vrot.slane %v2776, 5
      %v2779 = vsel %vm442, %v2774, %v2778
      %v2781 = vshrl.u32 %v2522, 16
      %v2783 = vrot.slane %v2781, 4
      %v2784 = vshll.u32 %v2522, 16
      %v2786 = vrot.slane %v2784, 5
      %v2787 = vor.u32 %v2783, %v2786
      %v2788 = vrot.slane %v2787, 4
      %v2790 = vshll.u32 %v2523, 16
      %v2792 = vrot.slane %v2790, 5
      %v2793 = vsel %vm442, %v2788, %v2792
      %v2794 = vshrl.u32 %v2523, 16
      %v2796 = vrot.slane %v2794, 4
      %v2797 = vor.u32 %v2796, %v2792
      %v2798 = vrot.slane %v2797, 4
      %v2800 = vshll.u32 %v2524, 16
      %v2802 = vrot.slane %v2800, 5
      %v2803 = vsel %vm442, %v2798, %v2802
      %v2805 = vshrl.u32 %v2525, 16
      %v2807 = vrot.slane %v2805, 4
      %v2808 = vshll.u32 %v2525, 16
      %v2810 = vrot.slane %v2808, 5
      %v2811 = vor.u32 %v2807, %v2810
      %v2812 = vrot.slane %v2811, 4
      %v2814 = vshll.u32 %v2526, 16
      %v2816 = vrot.slane %v2814, 5
      %v2817 = vsel %vm442, %v2812, %v2816
      %v2818 = vshrl.u32 %v2526, 16
      %v2820 = vrot.slane %v2818, 4
      %v2821 = vor.u32 %v2820, %v2816
      %v2822 = vrot.slane %v2821, 4
      %v2824 = vshll.u32 %v2527, 16
      %v2826 = vrot.slane %v2824, 5
      %v2827 = vsel %vm442, %v2822, %v2826
      %v2829 = vshrl.u32 %v2528, 16
      %v2831 = vrot.slane %v2829, 4
      %v2832 = vshll.u32 %v2528, 16
      %v2834 = vrot.slane %v2832, 5
      %v2835 = vor.u32 %v2831, %v2834
      %v2836 = vrot.slane %v2835, 4
      %v2838 = vshll.u32 %v2529, 16
      %v2840 = vrot.slane %v2838, 5
      %v2841 = vsel %vm442, %v2836, %v2840
      %v2842 = vshrl.u32 %v2529, 16
      %v2844 = vrot.slane %v2842, 4
      %v2845 = vor.u32 %v2844, %v2840
      %v2846 = vrot.slane %v2845, 4
      %v2848 = vshll.u32 %v2530, 16
      %v2850 = vrot.slane %v2848, 5
      %v2851 = vsel %vm442, %v2846, %v2850
      %v2853 = vshrl.u32 %v2531, 16
      %v2855 = vrot.slane %v2853, 4
      %v2856 = vshll.u32 %v2531, 16
      %v2858 = vrot.slane %v2856, 5
      %v2859 = vor.u32 %v2855, %v2858
      %v2860 = vrot.slane %v2859, 4
      %v2862 = vshll.u32 %v2532, 16
      %v2864 = vrot.slane %v2862, 5
      %v2865 = vsel %vm442, %v2860, %v2864
      %v2866 = vshrl.u32 %v2532, 16
      %v2868 = vrot.slane %v2866, 4
      %v2869 = vor.u32 %v2868, %v2864
      %v2870 = vrot.slane %v2869, 4
      %v2872 = vshll.u32 %v2533, 16
      %v2874 = vrot.slane %v2872, 5
      %v2875 = vsel %vm442, %v2870, %v2874
      %v2877 = vshrl.u32 %v2534, 16
      %v2879 = vrot.slane %v2877, 4
      %v2880 = vshll.u32 %v2534, 16
      %v2882 = vrot.slane %v2880, 5
      %v2883 = vor.u32 %v2879, %v2882
      %v2884 = vrot.slane %v2883, 4
      %v2886 = vshll.u32 %v2535, 16
      %v2888 = vrot.slane %v2886, 5
      %v2889 = vsel %vm442, %v2884, %v2888
      %v2890 = vshrl.u32 %v2535, 16
      %v2892 = vrot.slane %v2890, 4
      %v2893 = vor.u32 %v2892, %v2888
      %v2894 = vrot.slane %v2893, 4
      %v2896 = vshll.u32 %v2536, 16
      %v2898 = vrot.slane %v2896, 5
      %v2899 = vsel %vm442, %v2894, %v2898
      %v2901 = vshrl.u32 %v2537, 16
      %v2903 = vrot.slane %v2901, 4
      %v2904 = vshll.u32 %v2537, 16
      %v2906 = vrot.slane %v2904, 5
      %v2907 = vor.u32 %v2903, %v2906
      %v2908 = vrot.slane %v2907, 4
      %v2910 = vshll.u32 %v2538, 16
      %v2912 = vrot.slane %v2910, 5
      %v2913 = vsel %vm442, %v2908, %v2912
      %v2914 = vshrl.u32 %v2538, 16
      %v2916 = vrot.slane %v2914, 4
      %v2917 = vor.u32 %v2916, %v2912
      %v2918 = vrot.slane %v2917, 4
      %v2920 = vshll.u32 %v2539, 16
      %v2922 = vrot.slane %v2920, 5
      %v2923 = vsel %vm442, %v2918, %v2922
      %v2924 = vunpack.c.l.b16 %v2553
      %v2925 = vunpack.c.l.b16 %v2563
      %v2926 = vunpack.c.l.b16 %v2577
      %v2927 = vunpack.c.l.b16 %v2587
      %v2928 = vunpack.c.l.b16 %v2601
      %v2929 = vunpack.c.l.b16 %v2611
      %v2930 = vunpack.c.l.b16 %v2625
      %v2931 = vunpack.c.l.b16 %v2635
      %v2932 = vunpack.c.l.b16 %v2649
      %v2933 = vunpack.c.l.b16 %v2659
      %v2934 = vunpack.c.l.b16 %v2673
      %v2935 = vunpack.c.l.b16 %v2683
      %v2936 = vunpack.c.l.b16 %v2697
      %v2937 = vunpack.c.l.b16 %v2707
      %v2938 = vunpack.c.l.b16 %v2721
      %v2939 = vunpack.c.l.b16 %v2731
      %v2940 = vunpack.c.l.b16 %v2745
      %v2941 = vunpack.c.l.b16 %v2755
      %v2942 = vunpack.c.l.b16 %v2769
      %v2943 = vunpack.c.l.b16 %v2779
      %v2944 = vunpack.c.l.b16 %v2793
      %v2945 = vunpack.c.l.b16 %v2803
      %v2946 = vunpack.c.l.b16 %v2817
      %v2947 = vunpack.c.l.b16 %v2827
      %v2948 = vunpack.c.l.b16 %v2841
      %v2949 = vunpack.c.l.b16 %v2851
      %v2950 = vunpack.c.l.b16 %v2865
      %v2951 = vunpack.c.l.b16 %v2875
      %v2952 = vunpack.c.l.b16 %v2889
      %v2953 = vunpack.c.l.b16 %v2899
      %v2954 = vunpack.c.l.b16 %v2913
      %v2955 = vunpack.c.l.b16 %v2923
      %v2956 = vpack.c.b16 %v2925, %v2924
      %v2957 = vpack.c.b16 %v2927, %v2926
      %v2958 = vpack.c.b16 %v2929, %v2928
      %v2959 = vpack.c.b16 %v2931, %v2930
      %v2960 = vpack.c.b16 %v2933, %v2932
      %v2961 = vpack.c.b16 %v2935, %v2934
      %v2962 = vpack.c.b16 %v2937, %v2936
      %v2963 = vpack.c.b16 %v2939, %v2938
      %v2964 = vpack.c.b16 %v2941, %v2940
      %v2965 = vpack.c.b16 %v2943, %v2942
      %v2966 = vpack.c.b16 %v2945, %v2944
      %v2967 = vpack.c.b16 %v2947, %v2946
      %v2968 = vpack.c.b16 %v2949, %v2948
      %v2969 = vpack.c.b16 %v2951, %v2950
      %v2970 = vpack.c.b16 %v2953, %v2952
      %v2971 = vpack.c.b16 %v2955, %v2954
      %2972 = vrot.lane.b32.xlu0 %v2956, 28
      %v2973 = vpop.permute.xlu0 %2972
      %2974 = vrot.lane.b32.xlu0 %v2957, 28
      %v2975 = vpop.permute.xlu0 %2974
      %2976 = vrot.lane.b32.xlu0 %v2958, 28
      %v2977 = vpop.permute.xlu0 %2976
      %2978 = vrot.lane.b32.xlu0 %v2959, 28
      %v2979 = vpop.permute.xlu0 %2978
      %2980 = vrot.lane.b32.xlu0 %v2960, 28
      %v2981 = vpop.permute.xlu0 %2980
      %2982 = vrot.lane.b32.xlu0 %v2961, 28
      %v2983 = vpop.permute.xlu0 %2982
      %2984 = vrot.lane.b32.xlu0 %v2962, 28
      %v2985 = vpop.permute.xlu0 %2984
      %2986 = vrot.lane.b32.xlu0 %v2963, 28
      %v2987 = vpop.permute.xlu0 %2986
      %2988 = vrot.lane.b32.xlu0 %v2964, 28
      %v2989 = vpop.permute.xlu0 %2988
      %2990 = vrot.lane.b32.xlu0 %v2965, 28
      %v2991 = vpop.permute.xlu0 %2990
      %2992 = vrot.lane.b32.xlu0 %v2966, 28
      %v2993 = vpop.permute.xlu0 %2992
      %2994 = vrot.lane.b32.xlu0 %v2967, 28
      %v2995 = vpop.permute.xlu0 %2994
      %2996 = vrot.lane.b32.xlu0 %v2968, 28
      %v2997 = vpop.permute.xlu0 %2996
      %2998 = vrot.lane.b32.xlu0 %v2969, 28
      %v2999 = vpop.permute.xlu0 %2998
      %3000 = vrot.lane.b32.xlu0 %v2970, 28
      %v3001 = vpop.permute.xlu0 %3000
      %3002 = vrot.lane.b32.xlu0 %v2971, 28
      %v3003 = vpop.permute.xlu0 %3002
      %vm3020 = vcmask 261344
      %3021 = vst.msk [vmem:[#allocation2] sm:$0xff] %vm3020, %v2973
      %3022 = vst.msk [vmem:[#allocation2 + $0x8] sm:$0xff] %vm3020, %v2975
      %3023 = vst.msk [vmem:[#allocation2 + $0x10] sm:$0xff] %vm3020, %v2977
      %3024 = vst.msk [vmem:[#allocation2 + $0x18] sm:$0xff] %vm3020, %v2979
      %3025 = vst.msk [vmem:[#allocation2 + $0x20] sm:$0xff] %vm3020, %v2981
      %3026 = vst.msk [vmem:[#allocation2 + $0x28] sm:$0xff] %vm3020, %v2983
      %3027 = vst.msk [vmem:[#allocation2 + $0x30] sm:$0xff] %vm3020, %v2985
      %3028 = vst.msk [vmem:[#allocation2 + $0x38] sm:$0xff] %vm3020, %v2987
      %3029 = vst.msk [vmem:[#allocation2 + $0x40] sm:$0xff] %vm3020, %v2989
      %3030 = vst.msk [vmem:[#allocation2 + $0x48] sm:$0xff] %vm3020, %v2991
      %3031 = vst.msk [vmem:[#allocation2 + $0x50] sm:$0xff] %vm3020, %v2993
      %3032 = vst.msk [vmem:[#allocation2 + $0x58] sm:$0xff] %vm3020, %v2995
      %3033 = vst.msk [vmem:[#allocation2 + $0x60] sm:$0xff] %vm3020, %v2997
      %3034 = vst.msk [vmem:[#allocation2 + $0x68] sm:$0xff] %vm3020, %v2999
      %3035 = vst.msk [vmem:[#allocation2 + $0x70] sm:$0xff] %vm3020, %v3001
      %3036 = vst.msk [vmem:[#allocation2 + $0x78] sm:$0xff] %vm3020, %v3003
      %v3037 = vld [vmem:[%s2314] sm:$0xe]
      %v3038 = vld [vmem:[%s2314 + $0x4] sm:$0xf]
      %v3039 = vld [vmem:[%s2314 + $0x8] sm:$0x1]
      %v3040 = vld [vmem:[%s2314 + $0xc] sm:$0xe]
      %v3041 = vld [vmem:[%s2314 + $0x10] sm:$0xf]
      %v3042 = vld [vmem:[%s2314 + $0x14] sm:$0x1]
      %v3043 = vld [vmem:[%s2314 + $0x18] sm:$0xe]
      %v3044 = vld [vmem:[%s2314 + $0x1c] sm:$0xf]
      %v3045 = vld [vmem:[%s2314 + $0x20] sm:$0x1]
      %v3046 = vld [vmem:[%s2314 + $0x24] sm:$0xe]
      %v3047 = vld [vmem:[%s2314 + $0x28] sm:$0xf]
      %v3048 = vld [vmem:[%s2314 + $0x2c] sm:$0x1]
      %v3049 = vld [vmem:[%s2314 + $0x30] sm:$0xe]
      %v3050 = vld [vmem:[%s2314 + $0x34] sm:$0xf]
      %v3051 = vld [vmem:[%s2314 + $0x38] sm:$0x1]
      %v3052 = vld [vmem:[%s2314 + $0x3c] sm:$0xe]
      %v3053 = vld [vmem:[%s2314 + $0x40] sm:$0xf]
      %v3054 = vld [vmem:[%s2314 + $0x44] sm:$0x1]
      %v3055 = vld [vmem:[%s2314 + $0x48] sm:$0xe]
      %v3056 = vld [vmem:[%s2314 + $0x4c] sm:$0xf]
      %v3057 = vld [vmem:[%s2314 + $0x50] sm:$0x1]
      %v3058 = vld [vmem:[%s2314 + $0x54] sm:$0xe]
      %v3059 = vld [vmem:[%s2314 + $0x58] sm:$0xf]
      %v3060 = vld [vmem:[%s2314 + $0x5c] sm:$0x1]
      %v3061 = vld [vmem:[%s2314 + $0x60] sm:$0xe]
      %v3062 = vld [vmem:[%s2314 + $0x64] sm:$0xf]
      %v3063 = vld [vmem:[%s2314 + $0x68] sm:$0x1]
      %v3064 = vld [vmem:[%s2314 + $0x6c] sm:$0xe]
      %v3065 = vld [vmem:[%s2314 + $0x70] sm:$0xf]
      %v3066 = vld [vmem:[%s2314 + $0x74] sm:$0x1]
      %v3067 = vld [vmem:[%s2314 + $0x78] sm:$0xe]
      %v3068 = vld [vmem:[%s2314 + $0x7c] sm:$0xf]
      %v3069 = vld [vmem:[%s2314 + $0x80] sm:$0x1]
      %v3070 = vld [vmem:[%s2314 + $0x84] sm:$0xe]
      %v3071 = vld [vmem:[%s2314 + $0x88] sm:$0xf]
      %v3072 = vld [vmem:[%s2314 + $0x8c] sm:$0x1]
      %v3073 = vld [vmem:[%s2314 + $0x90] sm:$0xe]
      %v3074 = vld [vmem:[%s2314 + $0x94] sm:$0xf]
      %v3075 = vld [vmem:[%s2314 + $0x98] sm:$0x1]
      %v3076 = vld [vmem:[%s2314 + $0x9c] sm:$0xe]
      %v3077 = vld [vmem:[%s2314 + $0xa0] sm:$0xf]
      %v3078 = vld [vmem:[%s2314 + $0xa4] sm:$0x1]
      %v3079 = vld [vmem:[%s2314 + $0xa8] sm:$0xe]
      %v3080 = vld [vmem:[%s2314 + $0xac] sm:$0xf]
      %v3081 = vld [vmem:[%s2314 + $0xb0] sm:$0x1]
      %v3082 = vld [vmem:[%s2314 + $0xb4] sm:$0xe]
      %v3083 = vld [vmem:[%s2314 + $0xb8] sm:$0xf]
      %v3084 = vld [vmem:[%s2314 + $0xbc] sm:$0x1]
      %v3133 = vrot.slane %v3037, 5
      %v3134 = vrot.slane %v3133, 4
      %v3135 = vrot.slane %v3038, 5
      %v3136 = vsel %vm1038, %v3134, %v3135
      %v3137 = vrot.slane %v3135, 4
      %v3138 = vrot.slane %v3039, 5
      %v3139 = vsel %vm1038, %v3137, %v3138
      %v3140 = vrot.slane %v3040, 5
      %v3141 = vrot.slane %v3140, 4
      %v3142 = vrot.slane %v3041, 5
      %v3143 = vsel %vm1038, %v3141, %v3142
      %v3144 = vrot.slane %v3142, 4
      %v3145 = vrot.slane %v3042, 5
      %v3146 = vsel %vm1038, %v3144, %v3145
      %v3147 = vrot.slane %v3043, 5
      %v3148 = vrot.slane %v3147, 4
      %v3149 = vrot.slane %v3044, 5
      %v3150 = vsel %vm1038, %v3148, %v3149
      %v3151 = vrot.slane %v3149, 4
      %v3152 = vrot.slane %v3045, 5
      %v3153 = vsel %vm1038, %v3151, %v3152
      %v3154 = vrot.slane %v3046, 5
      %v3155 = vrot.slane %v3154, 4
      %v3156 = vrot.slane %v3047, 5
      %v3157 = vsel %vm1038, %v3155, %v3156
      %v3158 = vrot.slane %v3156, 4
      %v3159 = vrot.slane %v3048, 5
      %v3160 = vsel %vm1038, %v3158, %v3159
      %v3161 = vrot.slane %v3049, 5
      %v3162 = vrot.slane %v3161, 4
      %v3163 = vrot.slane %v3050, 5
      %v3164 = vsel %vm1038, %v3162, %v3163
      %v3165 = vrot.slane %v3163, 4
      %v3166 = vrot.slane %v3051, 5
      %v3167 = vsel %vm1038, %v3165, %v3166
      %v3168 = vrot.slane %v3052, 5
      %v3169 = vrot.slane %v3168, 4
      %v3170 = vrot.slane %v3053, 5
      %v3171 = vsel %vm1038, %v3169, %v3170
      %v3172 = vrot.slane %v3170, 4
      %v3173 = vrot.slane %v3054, 5
      %v3174 = vsel %vm1038, %v3172, %v3173
      %v3175 = vrot.slane %v3055, 5
      %v3176 = vrot.slane %v3175, 4
      %v3177 = vrot.slane %v3056, 5
      %v3178 = vsel %vm1038, %v3176, %v3177
      %v3179 = vrot.slane %v3177, 4
      %v3180 = vrot.slane %v3057, 5
      %v3181 = vsel %vm1038, %v3179, %v3180
      %v3182 = vrot.slane %v3058, 5
      %v3183 = vrot.slane %v3182, 4
      %v3184 = vrot.slane %v3059, 5
      %v3185 = vsel %vm1038, %v3183, %v3184
      %v3186 = vrot.slane %v3184, 4
      %v3187 = vrot.slane %v3060, 5
      %v3188 = vsel %vm1038, %v3186, %v3187
      %v3189 = vrot.slane %v3061, 5
      %v3190 = vrot.slane %v3189, 4
      %v3191 = vrot.slane %v3062, 5
      %v3192 = vsel %vm1038, %v3190, %v3191
      %v3193 = vrot.slane %v3191, 4
      %v3194 = vrot.slane %v3063, 5
      %v3195 = vsel %vm1038, %v3193, %v3194
      %v3196 = vrot.slane %v3064, 5
      %v3197 = vrot.slane %v3196, 4
      %v3198 = vrot.slane %v3065, 5
      %v3199 = vsel %vm1038, %v3197, %v3198
      %v3200 = vrot.slane %v3198, 4
      %v3201 = vrot.slane %v3066, 5
      %v3202 = vsel %vm1038, %v3200, %v3201
      %v3203 = vrot.slane %v3067, 5
      %v3204 = vrot.slane %v3203, 4
      %v3205 = vrot.slane %v3068, 5
      %v3206 = vsel %vm1038, %v3204, %v3205
      %v3207 = vrot.slane %v3205, 4
      %v3208 = vrot.slane %v3069, 5
      %v3209 = vsel %vm1038, %v3207, %v3208
      %v3210 = vrot.slane %v3070, 5
      %v3211 = vrot.slane %v3210, 4
      %v3212 = vrot.slane %v3071, 5
      %v3213 = vsel %vm1038, %v3211, %v3212
      %v3214 = vrot.slane %v3212, 4
      %v3215 = vrot.slane %v3072, 5
      %v3216 = vsel %vm1038, %v3214, %v3215
      %v3217 = vrot.slane %v3073, 5
      %v3218 = vrot.slane %v3217, 4
      %v3219 = vrot.slane %v3074, 5
      %v3220 = vsel %vm1038, %v3218, %v3219
      %v3221 = vrot.slane %v3219, 4
      %v3222 = vrot.slane %v3075, 5
      %v3223 = vsel %vm1038, %v3221, %v3222
      %v3224 = vrot.slane %v3076, 5
      %v3225 = vrot.slane %v3224, 4
      %v3226 = vrot.slane %v3077, 5
      %v3227 = vsel %vm1038, %v3225, %v3226
      %v3228 = vrot.slane %v3226, 4
      %v3229 = vrot.slane %v3078, 5
      %v3230 = vsel %vm1038, %v3228, %v3229
      %v3231 = vrot.slane %v3079, 5
      %v3232 = vrot.slane %v3231, 4
      %v3233 = vrot.slane %v3080, 5
      %v3234 = vsel %vm1038, %v3232, %v3233
      %v3235 = vrot.slane %v3233, 4
      %v3236 = vrot.slane %v3081, 5
      %v3237 = vsel %vm1038, %v3235, %v3236
      %v3238 = vrot.slane %v3082, 5
      %v3239 = vrot.slane %v3238, 4
      %v3240 = vrot.slane %v3083, 5
      %v3241 = vsel %vm1038, %v3239, %v3240
      %v3242 = vrot.slane %v3240, 4
      %v3243 = vrot.slane %v3084, 5
      %v3244 = vsel %vm1038, %v3242, %v3243
      %v3245 = vunpack.c.l.b16 %v3136
      %v3246 = vunpack.c.l.b16 %v3139
      %v3247 = vunpack.c.l.b16 %v3143
      %v3248 = vunpack.c.l.b16 %v3146
      %v3249 = vunpack.c.l.b16 %v3150
      %v3250 = vunpack.c.l.b16 %v3153
      %v3251 = vunpack.c.l.b16 %v3157
      %v3252 = vunpack.c.l.b16 %v3160
      %v3253 = vunpack.c.l.b16 %v3164
      %v3254 = vunpack.c.l.b16 %v3167
      %v3255 = vunpack.c.l.b16 %v3171
      %v3256 = vunpack.c.l.b16 %v3174
      %v3257 = vunpack.c.l.b16 %v3178
      %v3258 = vunpack.c.l.b16 %v3181
      %v3259 = vunpack.c.l.b16 %v3185
      %v3260 = vunpack.c.l.b16 %v3188
      %v3261 = vunpack.c.l.b16 %v3192
      %v3262 = vunpack.c.l.b16 %v3195
      %v3263 = vunpack.c.l.b16 %v3199
      %v3264 = vunpack.c.l.b16 %v3202
      %v3265 = vunpack.c.l.b16 %v3206
      %v3266 = vunpack.c.l.b16 %v3209
      %v3267 = vunpack.c.l.b16 %v3213
      %v3268 = vunpack.c.l.b16 %v3216
      %v3269 = vunpack.c.l.b16 %v3220
      %v3270 = vunpack.c.l.b16 %v3223
      %v3271 = vunpack.c.l.b16 %v3227
      %v3272 = vunpack.c.l.b16 %v3230
      %v3273 = vunpack.c.l.b16 %v3234
      %v3274 = vunpack.c.l.b16 %v3237
      %v3275 = vunpack.c.l.b16 %v3241
      %v3276 = vunpack.c.l.b16 %v3244
      %v3277 = vpack.c.b16 %v3246, %v3245
      %v3278 = vpack.c.b16 %v3248, %v3247
      %v3279 = vpack.c.b16 %v3250, %v3249
      %v3280 = vpack.c.b16 %v3252, %v3251
      %v3281 = vpack.c.b16 %v3254, %v3253
      %v3282 = vpack.c.b16 %v3256, %v3255
      %v3283 = vpack.c.b16 %v3258, %v3257
      %v3284 = vpack.c.b16 %v3260, %v3259
      %v3285 = vpack.c.b16 %v3262, %v3261
      %v3286 = vpack.c.b16 %v3264, %v3263
      %v3287 = vpack.c.b16 %v3266, %v3265
      %v3288 = vpack.c.b16 %v3268, %v3267
      %v3289 = vpack.c.b16 %v3270, %v3269
      %v3290 = vpack.c.b16 %v3272, %v3271
      %v3291 = vpack.c.b16 %v3274, %v3273
      %v3292 = vpack.c.b16 %v3276, %v3275
      %3293 = vrot.lane.b32.xlu0 %v3277, 32
      %v3294 = vpop.permute.xlu0 %3293
      %3295 = vrot.lane.b32.xlu0 %v3278, 32
      %v3296 = vpop.permute.xlu0 %3295
      %3297 = vrot.lane.b32.xlu0 %v3279, 32
      %v3298 = vpop.permute.xlu0 %3297
      %3299 = vrot.lane.b32.xlu0 %v3280, 32
      %v3300 = vpop.permute.xlu0 %3299
      %3301 = vrot.lane.b32.xlu0 %v3281, 32
      %v3302 = vpop.permute.xlu0 %3301
      %3303 = vrot.lane.b32.xlu0 %v3282, 32
      %v3304 = vpop.permute.xlu0 %3303
      %3305 = vrot.lane.b32.xlu0 %v3283, 32
      %v3306 = vpop.permute.xlu0 %3305
      %3307 = vrot.lane.b32.xlu0 %v3284, 32
      %v3308 = vpop.permute.xlu0 %3307
      %3309 = vrot.lane.b32.xlu0 %v3285, 32
      %v3310 = vpop.permute.xlu0 %3309
      %3311 = vrot.lane.b32.xlu0 %v3286, 32
      %v3312 = vpop.permute.xlu0 %3311
      %3313 = vrot.lane.b32.xlu0 %v3287, 32
      %v3314 = vpop.permute.xlu0 %3313
      %3315 = vrot.lane.b32.xlu0 %v3288, 32
      %v3316 = vpop.permute.xlu0 %3315
      %3317 = vrot.lane.b32.xlu0 %v3289, 32
      %v3318 = vpop.permute.xlu0 %3317
      %3319 = vrot.lane.b32.xlu0 %v3290, 32
      %v3320 = vpop.permute.xlu0 %3319
      %3321 = vrot.lane.b32.xlu0 %v3291, 32
      %v3322 = vpop.permute.xlu0 %3321
      %3323 = vrot.lane.b32.xlu0 %v3292, 32
      %v3324 = vpop.permute.xlu0 %3323
      %vm3341 = vcmask 294144
      %3342 = vst.msk [vmem:[#allocation2] sm:$0xff] %vm3341, %v3294
      %3343 = vst.msk [vmem:[#allocation2 + $0x8] sm:$0xff] %vm3341, %v3296
      %3344 = vst.msk [vmem:[#allocation2 + $0x10] sm:$0xff] %vm3341, %v3298
      %3345 = vst.msk [vmem:[#allocation2 + $0x18] sm:$0xff] %vm3341, %v3300
      %3346 = vst.msk [vmem:[#allocation2 + $0x20] sm:$0xff] %vm3341, %v3302
      %3347 = vst.msk [vmem:[#allocation2 + $0x28] sm:$0xff] %vm3341, %v3304
      %3348 = vst.msk [vmem:[#allocation2 + $0x30] sm:$0xff] %vm3341, %v3306
      %3349 = vst.msk [vmem:[#allocation2 + $0x38] sm:$0xff] %vm3341, %v3308
      %3350 = vst.msk [vmem:[#allocation2 + $0x40] sm:$0xff] %vm3341, %v3310
      %3351 = vst.msk [vmem:[#allocation2 + $0x48] sm:$0xff] %vm3341, %v3312
      %3352 = vst.msk [vmem:[#allocation2 + $0x50] sm:$0xff] %vm3341, %v3314
      %3353 = vst.msk [vmem:[#allocation2 + $0x58] sm:$0xff] %vm3341, %v3316
      %3354 = vst.msk [vmem:[#allocation2 + $0x60] sm:$0xff] %vm3341, %v3318
      %3355 = vst.msk [vmem:[#allocation2 + $0x68] sm:$0xff] %vm3341, %v3320
      %3356 = vst.msk [vmem:[#allocation2 + $0x70] sm:$0xff] %vm3341, %v3322
      %3357 = vst.msk [vmem:[#allocation2 + $0x78] sm:$0xff] %vm3341, %v3324
      %v3358 = vld [vmem:[#allocation2] sm:$0xff]
      %v3359 = vld [vmem:[#allocation2 + $0x8] sm:$0xff]
      %v3360 = vld [vmem:[#allocation2 + $0x10] sm:$0xff]
      %v3361 = vld [vmem:[#allocation2 + $0x18] sm:$0xff]
      %v3362 = vld [vmem:[#allocation2 + $0x20] sm:$0xff]
      %v3363 = vld [vmem:[#allocation2 + $0x28] sm:$0xff]
      %v3364 = vld [vmem:[#allocation2 + $0x30] sm:$0xff]
      %v3365 = vld [vmem:[#allocation2 + $0x38] sm:$0xff]
      %v3366 = vld [vmem:[#allocation2 + $0x40] sm:$0xff]
      %v3367 = vld [vmem:[#allocation2 + $0x48] sm:$0xff]
      %v3368 = vld [vmem:[#allocation2 + $0x50] sm:$0xff]
      %v3369 = vld [vmem:[#allocation2 + $0x58] sm:$0xff]
      %v3370 = vld [vmem:[#allocation2 + $0x60] sm:$0xff]
      %v3371 = vld [vmem:[#allocation2 + $0x68] sm:$0xff]
      %v3372 = vld [vmem:[#allocation2 + $0x70] sm:$0xff]
      %v3373 = vld [vmem:[#allocation2 + $0x78] sm:$0xff]
      %v3374 = vld [vmem:[%s224] sm:$0xf]
      %v3375 = vld [vmem:[%s224 + $0x4] sm:$0xf]
      %v3376 = vld [vmem:[%s224 + $0x8] sm:$0xf]
      %v3377 = vld [vmem:[%s224 + $0xc] sm:$0xf]
      %v3378 = vld [vmem:[%s224 + $0x10] sm:$0x3]
      %v3379 = vld [vmem:[%s227] sm:$0x1]
      %v3381 = vlaneseq
      %v3382 = vshrl.u32 %v3381, 7
      %v3383 = vsub.s32 0, %v3382
      %v3384 = vrot.slane %v3379, %v3383
      %v3391 = vunpack.c.l.b16 %v3374
      %v3392 = vunpack.c.l.b16 %v3375
      %v3393 = vunpack.c.l.b16 %v3376
      %v3394 = vunpack.c.l.b16 %v3377
      %v3395 = vunpack.c.l.b16 %v3378
      %v3396 = vpack.c.b16 %v3392, %v3391
      %v3397 = vpack.c.b16 %v3394, %v3393
      %v3398 = vpack.c.b16 %v3395, %v3395
      %vm3401 = vcmask 293888
      %v3403 = vsel %vm3401, %v3358, 0
      %v3406 = vsel %vm3401, %v3359, 0
      %v3409 = vsel %vm3401, %v3360, 0
      %v3412 = vsel %vm3401, %v3361, 0
      %v3415 = vsel %vm3401, %v3362, 0
      %v3418 = vsel %vm3401, %v3363, 0
      %v3421 = vsel %vm3401, %v3364, 0
      %v3424 = vsel %vm3401, %v3365, 0
      %v3427 = vsel %vm3401, %v3366, 0
      %v3430 = vsel %vm3401, %v3367, 0
      %v3433 = vsel %vm3401, %v3368, 0
      %v3436 = vsel %vm3401, %v3369, 0
      %v3439 = vsel %vm3401, %v3370, 0
      %v3442 = vsel %vm3401, %v3371, 0
      %v3445 = vsel %vm3401, %v3372, 0
      %v3448 = vsel %vm3401, %v3373, 0
      %vm3450 = vcmask 1041408
      %v3452 = vsel %vm3450, %v3398, 0
      %3454 = vmatprep.subr.bf16.mxu0 0
      %3455 = vmatpush1.bf16.msra.mxu0 %v3396
      %3456 = vmatprep.subr.bf16.mxu0 0
      %3457 = vmatpush1.bf16.msra.mxu0 %v3397
      %3458 = vmatprep.subr.bf16.mxu0 0
      %3459 = vmatpush1.bf16.msra.mxu0 %v3452
      %3460 = vmatprep.subr.bf16.mxu0 0
      %3461 = vmatpush1.bf16.msra.mxu0 0
      %3462 = vmatprep.subr.bf16.mxu0 0
      %3463 = vmatpush1.bf16.msra.mxu0 0
      %3464 = vmatprep.subr.bf16.mxu0 0
      %3465 = vmatpush1.bf16.msra.mxu0 0
      %3466 = vmatprep.subr.bf16.mxu0 0
      %3467 = vmatpush1.bf16.msra.mxu0 0
      %3468 = vmatprep.subr.bf16.mxu0 0
      %3469 = vmatpush1.bf16.msra.mxu0 0
      %3470 = vmatprep.subr.bf16.mxu0 0
      %3471 = vmatpush1.bf16.msra.mxu0 0
      %3472 = vmatprep.subr.bf16.mxu0 0
      %3473 = vmatpush1.bf16.msra.mxu0 0
      %3474 = vmatprep.subr.bf16.mxu0 0
      %3475 = vmatpush1.bf16.msra.mxu0 0
      %3476 = vmatprep.subr.bf16.mxu0 0
      %3477 = vmatpush1.bf16.msra.mxu0 0
      %3478 = vmatprep.subr.bf16.mxu0 0
      %3479 = vmatpush1.bf16.msra.mxu0 0
      %3480 = vmatprep.subr.bf16.mxu0 0
      %3481 = vmatpush1.bf16.msra.mxu0 0
      %3482 = vmatprep.subr.bf16.mxu0 0
      %3483 = vmatpush1.bf16.msra.mxu0 0
      %3484 = vmatprep.subr.bf16.mxu0 0
      %3485 = vmatpush1.bf16.msra.mxu0 0
      %3486 = vmatprep.mubr.bf16.mxu0 0
      %3487 = vmatmul.mubr.bf16.gmra.mrb[0].mxu0 %v3403
      %v3488 = vpop.f32.mrb[0].mxu0
      %v3489 = vadd.f32 %v3384, %v3488
      %v3490 = vpop.f32.mrb[0].mxu0
      %v3491 = vpop.f32.mrb[0].mxu0
      %v3492 = vadd.f32 %v3384, %v3491
      %v3493 = vpop.f32.mrb[0].mxu0
      %3494 = vmatprep.mubr.bf16.mxu0 0
      %3495 = vmatmul.mubr.bf16.gmra.mrb[0].mxu0 %v3406
      %v3496 = vpop.f32.mrb[0].mxu0
      %v3497 = vadd.f32 %v3384, %v3496
      %v3498 = vpop.f32.mrb[0].mxu0
      %v3499 = vpop.f32.mrb[0].mxu0
      %v3500 = vadd.f32 %v3384, %v3499
      %v3501 = vpop.f32.mrb[0].mxu0
      %3502 = vmatprep.mubr.bf16.mxu0 0
      %3503 = vmatmul.mubr.bf16.gmra.mrb[0].mxu0 %v3409
      %v3504 = vpop.f32.mrb[0].mxu0
      %v3505 = vadd.f32 %v3384, %v3504
      %v3506 = vpop.f32.mrb[0].mxu0
      %v3507 = vpop.f32.mrb[0].mxu0
      %v3508 = vadd.f32 %v3384, %v3507
      %v3509 = vpop.f32.mrb[0].mxu0
      %3510 = vmatprep.mubr.bf16.mxu0 0
      %3511 = vmatmul.mubr.bf16.gmra.mrb[0].mxu0 %v3412
      %v3512 = vpop.f32.mrb[0].mxu0
      %v3513 = vadd.f32 %v3384, %v3512
      %v3514 = vpop.f32.mrb[0].mxu0
      %v3515 = vpop.f32.mrb[0].mxu0
      %v3516 = vadd.f32 %v3384, %v3515
      %v3517 = vpop.f32.mrb[0].mxu0
      %3518 = vmatprep.mubr.bf16.mxu0 0
      %3519 = vmatmul.mubr.bf16.gmra.mrb[0].mxu0 %v3415
      %v3520 = vpop.f32.mrb[0].mxu0
      %v3521 = vadd.f32 %v3384, %v3520
      %v3522 = vpop.f32.mrb[0].mxu0
      %v3523 = vpop.f32.mrb[0].mxu0
      %v3524 = vadd.f32 %v3384, %v3523
      %v3525 = vpop.f32.mrb[0].mxu0
      %3526 = vmatprep.mubr.bf16.mxu0 0
      %3527 = vmatmul.mubr.bf16.gmra.mrb[0].mxu0 %v3418
      %v3528 = vpop.f32.mrb[0].mxu0
      %v3529 = vadd.f32 %v3384, %v3528
      %v3530 = vpop.f32.mrb[0].mxu0
      %v3531 = vpop.f32.mrb[0].mxu0
      %v3532 = vadd.f32 %v3384, %v3531
      %v3533 = vpop.f32.mrb[0].mxu0
      %3534 = vmatprep.mubr.bf16.mxu0 0
      %3535 = vmatmul.mubr.bf16.gmra.mrb[0].mxu0 %v3421
      %v3536 = vpop.f32.mrb[0].mxu0
      %v3537 = vadd.f32 %v3384, %v3536
      %v3538 = vpop.f32.mrb[0].mxu0
      %v3539 = vpop.f32.mrb[0].mxu0
      %v3540 = vadd.f32 %v3384, %v3539
      %v3541 = vpop.f32.mrb[0].mxu0
      %3542 = vmatprep.mubr.bf16.mxu0 0
      %3543 = vmatmul.mubr.bf16.gmra.mrb[0].mxu0 %v3424
      %v3544 = vpop.f32.mrb[0].mxu0
      %v3545 = vadd.f32 %v3384, %v3544
      %v3546 = vpop.f32.mrb[0].mxu0
      %v3547 = vpop.f32.mrb[0].mxu0
      %v3548 = vadd.f32 %v3384, %v3547
      %v3549 = vpop.f32.mrb[0].mxu0
      %3550 = vmatprep.mubr.bf16.mxu0 0
      %3551 = vmatmul.mubr.bf16.gmra.mrb[0].mxu0 %v3427
      %v3552 = vpop.f32.mrb[0].mxu0
      %v3553 = vadd.f32 %v3384, %v3552
      %v3554 = vpop.f32.mrb[0].mxu0
      %v3555 = vpop.f32.mrb[0].mxu0
      %v3556 = vadd.f32 %v3384, %v3555
      %v3557 = vpop.f32.mrb[0].mxu0
      %3558 = vmatprep.mubr.bf16.mxu0 0
      %3559 = vmatmul.mubr.bf16.gmra.mrb[0].mxu0 %v3430
      %v3560 = vpop.f32.mrb[0].mxu0
      %v3561 = vadd.f32 %v3384, %v3560
      %v3562 = vpop.f32.mrb[0].mxu0
      %v3563 = vpop.f32.mrb[0].mxu0
      %v3564 = vadd.f32 %v3384, %v3563
      %v3565 = vpop.f32.mrb[0].mxu0
      %3566 = vmatprep.mubr.bf16.mxu0 0
      %3567 = vmatmul.mubr.bf16.gmra.mrb[0].mxu0 %v3433
      %v3568 = vpop.f32.mrb[0].mxu0
      %v3569 = vadd.f32 %v3384, %v3568
      %v3570 = vpop.f32.mrb[0].mxu0
      %v3571 = vpop.f32.mrb[0].mxu0
      %v3572 = vadd.f32 %v3384, %v3571
      %v3573 = vpop.f32.mrb[0].mxu0
      %3574 = vmatprep.mubr.bf16.mxu0 0
      %3575 = vmatmul.mubr.bf16.gmra.mrb[0].mxu0 %v3436
      %v3576 = vpop.f32.mrb[0].mxu0
      %v3577 = vadd.f32 %v3384, %v3576
      %v3578 = vpop.f32.mrb[0].mxu0
      %v3579 = vpop.f32.mrb[0].mxu0
      %v3580 = vadd.f32 %v3384, %v3579
      %v3581 = vpop.f32.mrb[0].mxu0
      %3582 = vmatprep.mubr.bf16.mxu0 0
      %3583 = vmatmul.mubr.bf16.gmra.mrb[0].mxu0 %v3439
      %v3584 = vpop.f32.mrb[0].mxu0
      %v3585 = vadd.f32 %v3384, %v3584
      %v3586 = vpop.f32.mrb[0].mxu0
      %v3587 = vpop.f32.mrb[0].mxu0
      %v3588 = vadd.f32 %v3384, %v3587
      %v3589 = vpop.f32.mrb[0].mxu0
      %3590 = vmatprep.mubr.bf16.mxu0 0
      %3591 = vmatmul.mubr.bf16.gmra.mrb[0].mxu0 %v3442
      %v3592 = vpop.f32.mrb[0].mxu0
      %v3593 = vadd.f32 %v3384, %v3592
      %v3594 = vpop.f32.mrb[0].mxu0
      %v3595 = vpop.f32.mrb[0].mxu0
      %v3596 = vadd.f32 %v3384, %v3595
      %v3597 = vpop.f32.mrb[0].mxu0
      %3598 = vmatprep.mubr.bf16.mxu0 0
      %3599 = vmatmul.mubr.bf16.gmra.mrb[0].mxu0 %v3445
      %v3600 = vpop.f32.mrb[0].mxu0
      %v3601 = vadd.f32 %v3384, %v3600
      %v3602 = vpop.f32.mrb[0].mxu0
      %v3603 = vpop.f32.mrb[0].mxu0
      %v3604 = vadd.f32 %v3384, %v3603
      %v3605 = vpop.f32.mrb[0].mxu0
      %3606 = vmatprep.mubr.bf16.mxu0 0
      %3607 = vmatmul.mubr.bf16.gmra.mrb[0].mxu0 %v3448
      %v3608 = vpop.f32.mrb[0].mxu0
      %v3609 = vadd.f32 %v3384, %v3608
      %v3610 = vpop.f32.mrb[0].mxu0
      %v3611 = vpop.f32.mrb[0].mxu0
      %v3612 = vadd.f32 %v3384, %v3611
      %v3613 = vpop.f32.mrb[0].mxu0
      %3614 = vdwg.mxu0
      %v3615 = vmax.f32 %v3489, 0.0
      %v3616 = vmax.f32 %v3492, 0.0
      %v3617 = vmax.f32 %v3497, 0.0
      %v3618 = vmax.f32 %v3500, 0.0
      %v3619 = vmax.f32 %v3505, 0.0
      %v3620 = vmax.f32 %v3508, 0.0
      %v3621 = vmax.f32 %v3513, 0.0
      %v3622 = vmax.f32 %v3516, 0.0
      %v3623 = vmax.f32 %v3521, 0.0
      %v3624 = vmax.f32 %v3524, 0.0
      %v3625 = vmax.f32 %v3529, 0.0
      %v3626 = vmax.f32 %v3532, 0.0
      %v3627 = vmax.f32 %v3537, 0.0
      %v3628 = vmax.f32 %v3540, 0.0
      %v3629 = vmax.f32 %v3545, 0.0
      %v3630 = vmax.f32 %v3548, 0.0
      %v3631 = vmax.f32 %v3553, 0.0
      %v3632 = vmax.f32 %v3556, 0.0
      %v3633 = vmax.f32 %v3561, 0.0
      %v3634 = vmax.f32 %v3564, 0.0
      %v3635 = vmax.f32 %v3569, 0.0
      %v3636 = vmax.f32 %v3572, 0.0
      %v3637 = vmax.f32 %v3577, 0.0
      %v3638 = vmax.f32 %v3580, 0.0
      %v3639 = vmax.f32 %v3585, 0.0
      %v3640 = vmax.f32 %v3588, 0.0
      %v3641 = vmax.f32 %v3593, 0.0
      %v3642 = vmax.f32 %v3596, 0.0
      %v3643 = vmax.f32 %v3601, 0.0
      %v3644 = vmax.f32 %v3604, 0.0
      %v3645 = vmax.f32 %v3609, 0.0
      %v3646 = vmax.f32 %v3612, 0.0
      %v3647 = vpack.c.bf16 %v3616, %v3615
      %v3648 = vpack.c.bf16 %v3618, %v3617
      %v3649 = vpack.c.bf16 %v3620, %v3619
      %v3650 = vpack.c.bf16 %v3622, %v3621
      %v3651 = vpack.c.bf16 %v3624, %v3623
      %v3652 = vpack.c.bf16 %v3626, %v3625
      %v3653 = vpack.c.bf16 %v3628, %v3627
      %v3654 = vpack.c.bf16 %v3630, %v3629
      %v3655 = vpack.c.bf16 %v3632, %v3631
      %v3656 = vpack.c.bf16 %v3634, %v3633
      %v3657 = vpack.c.bf16 %v3636, %v3635
      %v3658 = vpack.c.bf16 %v3638, %v3637
      %v3659 = vpack.c.bf16 %v3640, %v3639
      %v3660 = vpack.c.bf16 %v3642, %v3641
      %v3661 = vpack.c.bf16 %v3644, %v3643
      %v3662 = vpack.c.bf16 %v3646, %v3645
      %v3679 = vunpack.c.l.b16 %v3647
      %v3680 = vunpack.c.h.b16 %v3647
      %v3681 = vunpack.c.l.b16 %v3648
      %v3682 = vunpack.c.h.b16 %v3648
      %v3683 = vunpack.c.l.b16 %v3649
      %v3684 = vunpack.c.h.b16 %v3649
      %v3685 = vunpack.c.l.b16 %v3650
      %v3686 = vunpack.c.h.b16 %v3650
      %v3687 = vunpack.c.l.b16 %v3651
      %v3688 = vunpack.c.h.b16 %v3651
      %v3689 = vunpack.c.l.b16 %v3652
      %v3690 = vunpack.c.h.b16 %v3652
      %v3691 = vunpack.c.l.b16 %v3653
      %v3692 = vunpack.c.h.b16 %v3653
      %v3693 = vunpack.c.l.b16 %v3654
      %v3694 = vunpack.c.h.b16 %v3654
      %v3695 = vunpack.c.l.b16 %v3655
      %v3696 = vunpack.c.h.b16 %v3655
      %v3697 = vunpack.c.l.b16 %v3656
      %v3698 = vunpack.c.h.b16 %v3656
      %v3699 = vunpack.c.l.b16 %v3657
      %v3700 = vunpack.c.h.b16 %v3657
      %v3701 = vunpack.c.l.b16 %v3658
      %v3702 = vunpack.c.h.b16 %v3658
      %v3703 = vunpack.c.l.b16 %v3659
      %v3704 = vunpack.c.h.b16 %v3659
      %v3705 = vunpack.c.l.b16 %v3660
      %v3706 = vunpack.c.h.b16 %v3660
      %v3707 = vunpack.c.l.b16 %v3661
      %v3708 = vunpack.c.h.b16 %v3661
      %v3709 = vunpack.c.l.b16 %v3662
      %v3710 = vunpack.c.h.b16 %v3662
      %v3711 = vpack.c.b16 %v3679, %v3679
      %v3712 = vpack.c.b16 %v3680, %v3680
      %v3713 = vpack.c.b16 %v3681, %v3681
      %v3714 = vpack.c.b16 %v3682, %v3682
      %v3715 = vpack.c.b16 %v3683, %v3683
      %v3716 = vpack.c.b16 %v3684, %v3684
      %v3717 = vpack.c.b16 %v3685, %v3685
      %v3718 = vpack.c.b16 %v3686, %v3686
      %v3719 = vpack.c.b16 %v3687, %v3687
      %v3720 = vpack.c.b16 %v3688, %v3688
      %v3721 = vpack.c.b16 %v3689, %v3689
      %v3722 = vpack.c.b16 %v3690, %v3690
      %v3723 = vpack.c.b16 %v3691, %v3691
      %v3724 = vpack.c.b16 %v3692, %v3692
      %v3725 = vpack.c.b16 %v3693, %v3693
      %v3726 = vpack.c.b16 %v3694, %v3694
      %v3727 = vpack.c.b16 %v3695, %v3695
      %v3728 = vpack.c.b16 %v3696, %v3696
      %v3729 = vpack.c.b16 %v3697, %v3697
      %v3730 = vpack.c.b16 %v3698, %v3698
      %v3731 = vpack.c.b16 %v3699, %v3699
      %v3732 = vpack.c.b16 %v3700, %v3700
      %v3733 = vpack.c.b16 %v3701, %v3701
      %v3734 = vpack.c.b16 %v3702, %v3702
      %v3735 = vpack.c.b16 %v3703, %v3703
      %v3736 = vpack.c.b16 %v3704, %v3704
      %v3737 = vpack.c.b16 %v3705, %v3705
      %v3738 = vpack.c.b16 %v3706, %v3706
      %v3739 = vpack.c.b16 %v3707, %v3707
      %v3740 = vpack.c.b16 %v3708, %v3708
      %v3741 = vpack.c.b16 %v3709, %v3709
      %v3742 = vpack.c.b16 %v3710, %v3710
      %vm3775 = vcmask 60416
      %3776 = vst.msk [vmem:[%s240] sm:$0xf] %vm3775, %v3711
      %3777 = vst.msk [vmem:[%s240 + $0x4] sm:$0xf] %vm3775, %v3712
      %3778 = vst.msk [vmem:[%s240 + $0x8] sm:$0xf] %vm3775, %v3713
      %3779 = vst.msk [vmem:[%s240 + $0xc] sm:$0xf] %vm3775, %v3714
      %3780 = vst.msk [vmem:[%s240 + $0x10] sm:$0xf] %vm3775, %v3715
      %3781 = vst.msk [vmem:[%s240 + $0x14] sm:$0xf] %vm3775, %v3716
      %3782 = vst.msk [vmem:[%s240 + $0x18] sm:$0xf] %vm3775, %v3717
      %3783 = vst.msk [vmem:[%s240 + $0x1c] sm:$0xf] %vm3775, %v3718
      %3784 = vst.msk [vmem:[%s240 + $0x20] sm:$0xf] %vm3775, %v3719
      %3785 = vst.msk [vmem:[%s240 + $0x24] sm:$0xf] %vm3775, %v3720
      %3786 = vst.msk [vmem:[%s240 + $0x28] sm:$0xf] %vm3775, %v3721
      %3787 = vst.msk [vmem:[%s240 + $0x2c] sm:$0xf] %vm3775, %v3722
      %3788 = vst.msk [vmem:[%s240 + $0x30] sm:$0xf] %vm3775, %v3723
      %3789 = vst.msk [vmem:[%s240 + $0x34] sm:$0xf] %vm3775, %v3724
      %3790 = vst.msk [vmem:[%s240 + $0x38] sm:$0xf] %vm3775, %v3725
      %3791 = vst.msk [vmem:[%s240 + $0x3c] sm:$0xf] %vm3775, %v3726
      %3792 = vst.msk [vmem:[%s240 + $0x40] sm:$0xf] %vm3775, %v3727
      %3793 = vst.msk [vmem:[%s240 + $0x44] sm:$0xf] %vm3775, %v3728
      %3794 = vst.msk [vmem:[%s240 + $0x48] sm:$0xf] %vm3775, %v3729
      %3795 = vst.msk [vmem:[%s240 + $0x4c] sm:$0xf] %vm3775, %v3730
      %3796 = vst.msk [vmem:[%s240 + $0x50] sm:$0xf] %vm3775, %v3731
      %3797 = vst.msk [vmem:[%s240 + $0x54] sm:$0xf] %vm3775, %v3732
      %3798 = vst.msk [vmem:[%s240 + $0x58] sm:$0xf] %vm3775, %v3733
      %3799 = vst.msk [vmem:[%s240 + $0x5c] sm:$0xf] %vm3775, %v3734
      %3800 = vst.msk [vmem:[%s240 + $0x60] sm:$0xf] %vm3775, %v3735
      %3801 = vst.msk [vmem:[%s240 + $0x64] sm:$0xf] %vm3775, %v3736
      %3802 = vst.msk [vmem:[%s240 + $0x68] sm:$0xf] %vm3775, %v3737
      %3803 = vst.msk [vmem:[%s240 + $0x6c] sm:$0xf] %vm3775, %v3738
      %3804 = vst.msk [vmem:[%s240 + $0x70] sm:$0xf] %vm3775, %v3739
      %3805 = vst.msk [vmem:[%s240 + $0x74] sm:$0xf] %vm3775, %v3740
      %3806 = vst.msk [vmem:[%s240 + $0x78] sm:$0xf] %vm3775, %v3741
      %3807 = vst.msk [vmem:[%s240 + $0x7c] sm:$0xf] %vm3775, %v3742
      %s3808 = smul.u32 16, %s21
      %p3809 = scmp.lt.s32.totalorder %s19, 1
      %s3810 = scalar_select %p3809, %s19, 1
      %p3811 = scmp.lt.s32.totalorder %s3808, 15
      %s3812 = scalar_select %p3811, %s3808, 15
      %p3813 = scmp.lt.s32.totalorder %s20, 0
      %s3814 = scalar_select %p3813, %s20, 0
      %s3815 = smul.addr %s3812, 2
      %s3816 = sadd.s32 %s3814, %s3815
      %s3817 = smul.addr %s3810, 32
      %s3818 = sadd.s32 %s3816, %s3817
      %s3819 = smul.addr %s3818, 4
      %s3820 = scalar_lea.vmem %s3, %s3819
      // Predicated region
      $region33: #{tpu_custom_call.1} parent=31 // pred_check
        %p3821 = pneg %p133
      $region34: #{tpu_custom_call.1} parent=31 // pred_check_branch
        %3823 = sbr.rel (%p3821) target = $region36
      $region35: #{tpu_custom_call.1} parent=31 // pred_region
        %s3824 = smul.u32 16, %s21
      $region36: #{tpu_custom_call.1} parent=31 // pred_fallthru
        _
    $region32: #{tpu_custom_call.1} parent=5 // pred_fallthru
      _
    %p3825 = scmp.le.s32.totalorder 2, %s9
    // Predicated region
    $region37: #{tpu_custom_call.1} parent=5 // pred_check
      %p3826 = pneg %p3825
    $region38: #{tpu_custom_call.1} parent=5 // pred_check_branch
      %3828 = sbr.rel (%p3826) target = $region40
    $region39: #{tpu_custom_call.1} parent=5 // pred_region
      %s3829 = ssub.s32 %s9, 2
      // Predicated region
      $region41: #{tpu_custom_call.1} parent=39 // pred_check
        %p3830 = pneg %p139
      $region42: #{tpu_custom_call.1} parent=39 // pred_check_branch
        %3832 = sbr.rel (%p3830) target = $region44
      $region43: #{tpu_custom_call.1} parent=39 // pred_region
        %s3833 = smul.u32 16, %s24
        %p3834 = scmp.lt.s32.totalorder %s22, 1
        %s3835 = scalar_select %p3834, %s22, 1
        %p3836 = scmp.lt.s32.totalorder %s3833, 15
        %s3837 = scalar_select %p3836, %s3833, 15
        %p3838 = scmp.lt.s32.totalorder %s23, 0
        %s3839 = scalar_select %p3838, %s23, 0
        %s3840 = smul.addr %s3837, 2
        %s3841 = sadd.s32 %s3839, %s3840
        %s3842 = smul.addr %s3835, 32
        %s3843 = sadd.s32 %s3841, %s3842
        %s3844 = smul.addr %s3843, 4
        %s3845 = scalar_lea.vmem %s3, %s3844
      $region44: #{tpu_custom_call.1} parent=39 // pred_fallthru
        _
    $region40: #{tpu_custom_call.1} parent=5 // pred_fallthru
      _
  $region6: #{tpu_custom_call.1} parent=0 // loop_footer
    %s13 = sadd.s32 1, %s9
  $region7: #{tpu_custom_call.1} parent=0 // loop_footer_branch
    %8 = sbr.rel target = $region3
  $region8: #{tpu_custom_call.1} parent=0 // loop_exit
    _

</llo_original>
